<compile_context>
chip_gen: v5e
topology: v5e:2x2
jax: 0.10.0
libtpu: 0.0.40
codegen_flags: <defaults>
</compile_context>

<pallas_src>
import jax
import jax.numpy as jnp
from jax.experimental import pallas as pl
from jax.experimental.pallas import tpu as pltpu

_EPS = 1e-5

# For kernel offset k in {0,1,2} along H (or W), the tap at output index p is
# input row 2p-1+k.  In the parity/halo scratch (index P = p+1, parity s) this
# is: k=0 -> (parity 1, slice [0:ho)), k=1 -> (parity 0, [1:ho+1)),
# k=2 -> (parity 1, [1:ho+1)).  The halo plane at P==0 / Q==0 holds the zeros
# of conv2's padding=1 (post-BN1 zeros, as required).
_TAP = {0: (1, 0), 1: (0, 1), 2: (1, 1)}


def _bn_train_affine(y2d, gamma_row, beta_row):
    """Training-mode BatchNorm on an (M, C) matrix, single-pass statistics.

    var = E[y^2] - mean^2 (biased), then one fused multiply-add pass:
    y*a + b with a = rsqrt(var+eps)*gamma, b = beta - mean*a.
    """
    m = y2d.shape[0]
    inv_m = 1.0 / m
    s = jnp.sum(y2d, axis=0, keepdims=True)
    ss = jnp.sum(y2d * y2d, axis=0, keepdims=True)
    mean = s * inv_m
    var = ss * inv_m - mean * mean
    a = jax.lax.rsqrt(var + _EPS) * gamma_row
    b = beta_row - mean * a
    return y2d * a + b


def bottleneck_kernel(x_ref, w1_ref, w2_ref, w3_ref, wd_ref,
                      bn1_ref, bn2_ref, bn3_ref, bnd_ref, o_ref, pad_ref):
    # x_ref: (n, 2, ho, 2, wo, cin) parity-decomposed input,
    #        x_ref[n, s, p, r, q, c] == x[n, 2p+s, 2q+r, c].
    n, _, ho, _, wo, cin = x_ref.shape
    cout = w1_ref.shape[1]
    m_full = n * 2 * ho * 2 * wo           # n*h*w pixels for conv1
    m_out = n * ho * wo                    # output pixels (stride 2)

    # ---- conv1: 1x1, stride 1 (pure channel matmul) + BN1 ----
    x_flat = x_ref[...].reshape(m_full, cin)
    y1 = jnp.dot(x_flat, w1_ref[...], preferred_element_type=jnp.float32)
    y1 = _bn_train_affine(y1, bn1_ref[0:1, :], bn1_ref[1:2, :])

    # ---- pre-zeroed parity/halo scratch; write BN1 output interior once ----
    # pad_ref[n, s, P, r, Q, c] == bn1(conv1(x)) at spatial (2(P-1)+s, 2(Q-1)+r)
    # for P,Q >= 1, and 0 at P==0 or Q==0 (conv2's padding, post-BN1).
    pad_ref[...] = jnp.zeros(pad_ref.shape, pad_ref.dtype)
    pad_ref[:, :, 1:, :, 1:, :] = y1.reshape(n, 2, ho, 2, wo, cout)

    # ---- conv2: 3x3, stride 2, pad 1 as ONE im2col matmul ----
    # Each of the 9 taps is a static contiguous slice of the scratch (no
    # strided loads, no concatenated padding, no reshape-chain subsampling).
    taps = []
    for kh in range(3):
        sh, p0 = _TAP[kh]
        for kw in range(3):
            sw, q0 = _TAP[kw]
            t = pad_ref[:, sh:sh + 1, p0:p0 + ho, sw:sw + 1, q0:q0 + wo, :]
            taps.append(t.reshape(m_out, cout))
    patch = jnp.concatenate(taps, axis=-1)               # (m_out, 9*cout)
    acc = jnp.dot(patch, w2_ref[...],                    # w2: (9*cout, cout)
                  preferred_element_type=jnp.float32)

    # ---- BN2 folded into conv3 ----
    # Only BN2's per-channel scale matters: its shift (-mean2*scale + beta2)
    # produces a constant per conv3-output-channel offset, which BN3's own
    # mean subtraction removes exactly.  So scale the (4C, C) weight instead
    # of doing an elementwise pass over the (m_out, C) activation.
    s2 = jnp.sum(acc, axis=0, keepdims=True)
    ss2 = jnp.sum(acc * acc, axis=0, keepdims=True)
    mean2 = s2 * (1.0 / m_out)
    var2 = ss2 * (1.0 / m_out) - mean2 * mean2
    a2 = jax.lax.rsqrt(var2 + _EPS) * bn2_ref[0:1, :]    # (1, cout)

    # w3_ref is stored transposed, (4*cout, cout): scale its columns (= conv3
    # input channels) by a2 with a cheap row-broadcast, then contract the last
    # dims (A @ B^T form, handled natively by the MXU).
    w3_eff = w3_ref[...] * a2
    y3 = jax.lax.dot_general(acc, w3_eff, (((1,), (1,)), ((), ())),
                             preferred_element_type=jnp.float32)

    # ---- BN3 + ReLU ----
    y3 = _bn_train_affine(y3, bn3_ref[0:1, :], bn3_ref[1:2, :])
    y3 = jnp.maximum(y3, 0.0)

    # ---- downsample shortcut: 1x1 conv stride 2 + BN ----
    # Even-row/even-col pixels are the (s=0, r=0) parity block: a static slice.
    x00 = x_ref[:, 0:1, :, 0:1, :, :].reshape(m_out, cin)
    yd = jnp.dot(x00, wd_ref[...], preferred_element_type=jnp.float32)
    yd = _bn_train_affine(yd, bnd_ref[0:1, :], bnd_ref[1:2, :])

    # ---- residual add; lane-dense (m_out, 4*cout) store ----
    o_ref[...] = y3 + yd


def init_params(key, in_features=64, out_features=64):
    """Deterministic parameters matching the PyTorch module's __init__ shapes."""
    k1, k2, k3, k4 = jax.random.split(key, 4)
    # PyTorch Conv2d weight layout: (O, I, kh, kw), bias=False.
    w1_pt = jax.random.normal(k1, (out_features, in_features, 1, 1), jnp.float32) * (2.0 / in_features) ** 0.5
    w2_pt = jax.random.normal(k2, (out_features, out_features, 3, 3), jnp.float32) * (2.0 / (9 * out_features)) ** 0.5
    w3_pt = jax.random.normal(k3, (4 * out_features, out_features, 1, 1), jnp.float32) * (2.0 / out_features) ** 0.5
    wd_pt = jax.random.normal(k4, (4 * out_features, in_features, 1, 1), jnp.float32) * (2.0 / in_features) ** 0.5

    def bn(c):  # PyTorch BatchNorm2d default init: gamma=1, beta=0 -> pack as (2, C)
        return jnp.stack([jnp.ones((c,), jnp.float32), jnp.zeros((c,), jnp.float32)])

    kernel_params = dict(
        w1=w1_pt[:, :, 0, 0].T,                                        # (Cin, Cout)
        # im2col packing: (kh, kw, Cin2) row-major -> (9*Cout, Cout)
        w2=jnp.transpose(w2_pt, (2, 3, 1, 0)).reshape(9 * out_features, out_features),
        w3=w3_pt[:, :, 0, 0],                                          # (4*Cout, Cout), rhs-transposed matmul
        wd=wd_pt[:, :, 0, 0].T,                                        # (Cin, 4*Cout)
        bn1=bn(out_features), bn2=bn(out_features),
        bn3=bn(4 * out_features), bnd=bn(4 * out_features))
    pt_params = dict(w1=w1_pt, w2=w2_pt, w3=w3_pt, wd=wd_pt)
    return kernel_params, pt_params


@jax.jit
def bottleneck_forward(x_nchw, p):
    n, cin, h, w = x_nchw.shape
    if h % 2 != 0 or w % 2 != 0:
        # TODO(synk): odd H/W needs the exact PyTorch output-size arithmetic.
        raise ValueError("bottleneck_forward requires even spatial dimensions")
    cout = p['w1'].shape[1]
    c4 = p['wd'].shape[1]
    ho, wo = h // 2, w // 2

    # Layout plumbing (wrapper-side, XLA): NCHW -> NHWC -> parity-decomposed
    # (n, 2, ho, 2, wo, cin) with x_dec[n, s, p, r, q, c] = x[n, 2p+s, 2q+r, c].
    x = jnp.transpose(x_nchw, (0, 2, 3, 1)).astype(jnp.float32)
    x_dec = x.reshape(n, ho, 2, wo, 2, cin).transpose(0, 2, 1, 4, 3, 5)

    vmem = pl.BlockSpec(memory_space=pltpu.MemorySpace.VMEM)
    out2d = pl.pallas_call(
        bottleneck_kernel,
        out_shape=jax.ShapeDtypeStruct((n * ho * wo, c4), jnp.float32),
        in_specs=[vmem] * 9,
        out_specs=vmem,
        scratch_shapes=[
            # parity/halo scratch for conv2's padded, BN1-normalized input
            pltpu.VMEM((n, 2, ho + 1, 2, wo + 1, cout), jnp.float32),
        ],
        compiler_params=pltpu.CompilerParams(vmem_limit_bytes=64 * 1024 * 1024),
    )(x_dec, p['w1'], p['w2'], p['w3'], p['wd'],
      p['bn1'], p['bn2'], p['bn3'], p['bnd'])

    # Lane-dense 2-D kernel output -> NCHW (glue only).
    return jnp.transpose(out2d.reshape(n, ho, wo, c4), (0, 3, 1, 2))


# ---------- pure-JAX reference (NCHW, mirrors the PyTorch forward) ----------
def _ref_bn_nchw(y):
    mean = y.mean(axis=(0, 2, 3), keepdims=True)
    var = ((y - mean) ** 2).mean(axis=(0, 2, 3), keepdims=True)
    return (y - mean) * jax.lax.rsqrt(var + _EPS)   # gamma=1, beta=0


def reference_forward(x, pt):
    dn = ('NCHW', 'OIHW', 'NCHW')
    conv = lambda a, wgt, s, pad: jax.lax.conv_general_dilated(
        a, wgt, (s, s), pad, dimension_numbers=dn)
    y = _ref_bn_nchw(conv(x, pt['w1'], 1, 'VALID'))
    y = _ref_bn_nchw(conv(y, pt['w2'], 2, [(1, 1), (1, 1)]))
    y = jnp.maximum(_ref_bn_nchw(conv(y, pt['w3'], 1, 'VALID')), 0.0)
    x0 = _ref_bn_nchw(conv(x, pt['wd'], 2, 'VALID'))
    return y + x0


if __name__ == "__main__":
    key = jax.random.PRNGKey(0)
    kx, kp = jax.random.split(key)
    # Module defaults: Bottleneck(64, 64, dn_sample=True, dnSample_stride=2)
    # -> 4*Cout = 256 output channels, i.e. a lane-dense (multiple of 128) store.
    in_features, out_features = 64, 64
    x = jax.random.normal(kx, (2, in_features, 16, 16), jnp.float32)
    kparams, ptparams = init_params(kp, in_features, out_features)

    out = jax.block_until_ready(bottleneck_forward(x, kparams))
    ref = jax.block_until_ready(reference_forward(x, ptparams))

    assert out.shape == (2, 4 * out_features, 8, 8), out.shape
    err = float(jnp.max(jnp.abs(out - ref)))
    assert err < 3e-2, err
    print("KERNEL_OK")
</pallas_src>

<mosaic_0001>
module attributes {stable_mosaic.version = 11 : i64} {
  func.func @bottleneck_kernel(%arg0: memref<2x2x8x2x8x64xf32, #tpu.memory_space<vmem>>, %arg1: memref<64x64xf32, #tpu.memory_space<vmem>>, %arg2: memref<576x64xf32, #tpu.memory_space<vmem>>, %arg3: memref<256x64xf32, #tpu.memory_space<vmem>>, %arg4: memref<64x256xf32, #tpu.memory_space<vmem>>, %arg5: memref<2x64xf32, #tpu.memory_space<vmem>>, %arg6: memref<2x64xf32, #tpu.memory_space<vmem>>, %arg7: memref<2x256xf32, #tpu.memory_space<vmem>>, %arg8: memref<2x256xf32, #tpu.memory_space<vmem>>, %arg9: memref<128x256xf32, #tpu.memory_space<vmem>>, %arg10: memref<2x2x9x2x9x64xf32, #tpu.memory_space<vmem>>) attributes {dimension_semantics = [], scalar_prefetch = 0 : i64, scratch_operands = 1 : i64, tpu.core_type = #tpu.core_type<tc>} {
    %c0 = arith.constant 0 : index
    %c0_0 = arith.constant 0 : index
    %c0_1 = arith.constant 0 : index
    %c0_2 = arith.constant 0 : index
    %c0_3 = arith.constant 0 : index
    %c0_4 = arith.constant 0 : index
    %0 = vector.load %arg0[%c0, %c0_0, %c0_1, %c0_2, %c0_3, %c0_4] : memref<2x2x8x2x8x64xf32, #tpu.memory_space<vmem>>, vector<2x2x8x2x8x64xf32>
    %1 = vector.shape_cast %0 : vector<2x2x8x2x8x64xf32> to vector<512x64xf32>
    %c0_5 = arith.constant 0 : index
    %c0_6 = arith.constant 0 : index
    %2 = vector.load %arg1[%c0_5, %c0_6] : memref<64x64xf32, #tpu.memory_space<vmem>>, vector<64x64xf32>
    %cst = arith.constant dense<0.000000e+00> : vector<512x64xf32>
    %3 = tpu.matmul %1, %2, %cst {dimension_numbers = #tpu.dot_dimension_numbers<[1], [0], [0], [1], [0, 0, 1, 1], [], []>} : vector<512x64xf32>, vector<64x64xf32>, vector<512x64xf32> -> vector<512x64xf32>
    %c0_7 = arith.constant 0 : index
    %c0_8 = arith.constant 0 : index
    %4 = vector.load %arg5[%c0_7, %c0_8] : memref<2x64xf32, #tpu.memory_space<vmem>>, vector<1x64xf32>
    %c1 = arith.constant 1 : index
    %c0_9 = arith.constant 0 : index
    %5 = vector.load %arg5[%c1, %c0_9] : memref<2x64xf32, #tpu.memory_space<vmem>>, vector<1x64xf32>
    %cst_10 = arith.constant dense<0.000000e+00> : vector<64xf32>
    %6 = vector.multi_reduction <add>, %3, %cst_10 [0] : vector<512x64xf32> to vector<64xf32>
    %7 = vector.shape_cast %6 : vector<64xf32> to vector<1x64xf32>
    %8 = arith.mulf %3, %3 : vector<512x64xf32>
    %cst_11 = arith.constant dense<0.000000e+00> : vector<64xf32>
    %9 = vector.multi_reduction <add>, %8, %cst_11 [0] : vector<512x64xf32> to vector<64xf32>
    %10 = vector.shape_cast %9 : vector<64xf32> to vector<1x64xf32>
    %cst_12 = arith.constant 0.001953125 : f32
    %11 = vector.broadcast %cst_12 : f32 to vector<1x64xf32>
    %12 = arith.mulf %7, %11 : vector<1x64xf32>
    %cst_13 = arith.constant 0.001953125 : f32
    %13 = vector.broadcast %cst_13 : f32 to vector<1x64xf32>
    %14 = arith.mulf %10, %13 : vector<1x64xf32>
    %15 = arith.mulf %12, %12 : vector<1x64xf32>
    %16 = arith.subf %14, %15 : vector<1x64xf32>
    %cst_14 = arith.constant 9.99999974E-6 : f32
    %17 = vector.broadcast %cst_14 : f32 to vector<1x64xf32>
    %18 = arith.addf %16, %17 : vector<1x64xf32>
    %19 = math.rsqrt %18 : vector<1x64xf32>
    %20 = arith.mulf %19, %4 : vector<1x64xf32>
    %21 = arith.mulf %12, %20 : vector<1x64xf32>
    %22 = arith.subf %5, %21 : vector<1x64xf32>
    %23 = vector.broadcast %20 : vector<1x64xf32> to vector<512x64xf32>
    %24 = arith.mulf %3, %23 : vector<512x64xf32>
    %25 = vector.broadcast %22 : vector<1x64xf32> to vector<512x64xf32>
    %26 = arith.addf %24, %25 : vector<512x64xf32>
    %cst_15 = arith.constant 0.000000e+00 : f32
    %27 = vector.broadcast %cst_15 : f32 to vector<2x2x9x2x9x64xf32>
    %c0_16 = arith.constant 0 : index
    %c0_17 = arith.constant 0 : index
    %c0_18 = arith.constant 0 : index
    %c0_19 = arith.constant 0 : index
    %c0_20 = arith.constant 0 : index
    %c0_21 = arith.constant 0 : index
    %28 = vector.load %arg10[%c0_16, %c0_17, %c0_18, %c0_19, %c0_20, %c0_21] : memref<2x2x9x2x9x64xf32, #tpu.memory_space<vmem>>, vector<2x2x9x2x9x64xf32>
    tpu.vector_store %arg10[%c0_16, %c0_17, %c0_18, %c0_19, %c0_20, %c0_21], %27 {strides = array<i32>} : memref<2x2x9x2x9x64xf32, #tpu.memory_space<vmem>>, vector<2x2x9x2x9x64xf32>,
    %29 = vector.shape_cast %26 : vector<512x64xf32> to vector<2x2x8x2x8x64xf32>
    %c0_22 = arith.constant 0 : index
    %c0_23 = arith.constant 0 : index
    %c1_24 = arith.constant 1 : index
    %c0_25 = arith.constant 0 : index
    %c1_26 = arith.constant 1 : index
    %c0_27 = arith.constant 0 : index
    %30 = vector.load %arg10[%c0_22, %c0_23, %c1_24, %c0_25, %c1_26, %c0_27] : memref<2x2x9x2x9x64xf32, #tpu.memory_space<vmem>>, vector<2x2x8x2x8x64xf32>
    tpu.vector_store %arg10[%c0_22, %c0_23, %c1_24, %c0_25, %c1_26, %c0_27], %29 {strides = array<i32>} : memref<2x2x9x2x9x64xf32, #tpu.memory_space<vmem>>, vector<2x2x8x2x8x64xf32>,
    %c0_28 = arith.constant 0 : index
    %c1_29 = arith.constant 1 : index
    %c0_30 = arith.constant 0 : index
    %c1_31 = arith.constant 1 : index
    %c0_32 = arith.constant 0 : index
    %c0_33 = arith.constant 0 : index
    %31 = vector.load %arg10[%c0_28, %c1_29, %c0_30, %c1_31, %c0_32, %c0_33] : memref<2x2x9x2x9x64xf32, #tpu.memory_space<vmem>>, vector<2x1x8x1x8x64xf32>
    %32 = vector.shape_cast %31 : vector<2x1x8x1x8x64xf32> to vector<128x64xf32>
    %c0_34 = arith.constant 0 : index
    %c1_35 = arith.constant 1 : index
    %c0_36 = arith.constant 0 : index
    %c0_37 = arith.constant 0 : index
    %c1_38 = arith.constant 1 : index
    %c0_39 = arith.constant 0 : index
    %33 = vector.load %arg10[%c0_34, %c1_35, %c0_36, %c0_37, %c1_38, %c0_39] : memref<2x2x9x2x9x64xf32, #tpu.memory_space<vmem>>, vector<2x1x8x1x8x64xf32>
    %34 = vector.shape_cast %33 : vector<2x1x8x1x8x64xf32> to vector<128x64xf32>
    %c0_40 = arith.constant 0 : index
    %c1_41 = arith.constant 1 : index
    %c0_42 = arith.constant 0 : index
    %c1_43 = arith.constant 1 : index
    %c1_44 = arith.constant 1 : index
    %c0_45 = arith.constant 0 : index
    %35 = vector.load %arg10[%c0_40, %c1_41, %c0_42, %c1_43, %c1_44, %c0_45] : memref<2x2x9x2x9x64xf32, #tpu.memory_space<vmem>>, vector<2x1x8x1x8x64xf32>
    %36 = vector.shape_cast %35 : vector<2x1x8x1x8x64xf32> to vector<128x64xf32>
    %c0_46 = arith.constant 0 : index
    %c0_47 = arith.constant 0 : index
    %c1_48 = arith.constant 1 : index
    %c1_49 = arith.constant 1 : index
    %c0_50 = arith.constant 0 : index
    %c0_51 = arith.constant 0 : index
    %37 = vector.load %arg10[%c0_46, %c0_47, %c1_48, %c1_49, %c0_50, %c0_51] : memref<2x2x9x2x9x64xf32, #tpu.memory_space<vmem>>, vector<2x1x8x1x8x64xf32>
    %38 = vector.shape_cast %37 : vector<2x1x8x1x8x64xf32> to vector<128x64xf32>
    %c0_52 = arith.constant 0 : index
    %c0_53 = arith.constant 0 : index
    %c1_54 = arith.constant 1 : index
    %c0_55 = arith.constant 0 : index
    %c1_56 = arith.constant 1 : index
    %c0_57 = arith.constant 0 : index
    %39 = vector.load %arg10[%c0_52, %c0_53, %c1_54, %c0_55, %c1_56, %c0_57] : memref<2x2x9x2x9x64xf32, #tpu.memory_space<vmem>>, vector<2x1x8x1x8x64xf32>
    %40 = vector.shape_cast %39 : vector<2x1x8x1x8x64xf32> to vector<128x64xf32>
    %c0_58 = arith.constant 0 : index
    %c0_59 = arith.constant 0 : index
    %c1_60 = arith.constant 1 : index
    %c1_61 = arith.constant 1 : index
    %c1_62 = arith.constant 1 : index
    %c0_63 = arith.constant 0 : index
    %41 = vector.load %arg10[%c0_58, %c0_59, %c1_60, %c1_61, %c1_62, %c0_63] : memref<2x2x9x2x9x64xf32, #tpu.memory_space<vmem>>, vector<2x1x8x1x8x64xf32>
    %42 = vector.shape_cast %41 : vector<2x1x8x1x8x64xf32> to vector<128x64xf32>
    %c0_64 = arith.constant 0 : index
    %c1_65 = arith.constant 1 : index
    %c1_66 = arith.constant 1 : index
    %c1_67 = arith.constant 1 : index
    %c0_68 = arith.constant 0 : index
    %c0_69 = arith.constant 0 : index
    %43 = vector.load %arg10[%c0_64, %c1_65, %c1_66, %c1_67, %c0_68, %c0_69] : memref<2x2x9x2x9x64xf32, #tpu.memory_space<vmem>>, vector<2x1x8x1x8x64xf32>
    %44 = vector.shape_cast %43 : vector<2x1x8x1x8x64xf32> to vector<128x64xf32>
    %c0_70 = arith.constant 0 : index
    %c1_71 = arith.constant 1 : index
    %c1_72 = arith.constant 1 : index
    %c0_73 = arith.constant 0 : index
    %c1_74 = arith.constant 1 : index
    %c0_75 = arith.constant 0 : index
    %45 = vector.load %arg10[%c0_70, %c1_71, %c1_72, %c0_73, %c1_74, %c0_75] : memref<2x2x9x2x9x64xf32, #tpu.memory_space<vmem>>, vector<2x1x8x1x8x64xf32>
    %46 = vector.shape_cast %45 : vector<2x1x8x1x8x64xf32> to vector<128x64xf32>
    %c0_76 = arith.constant 0 : index
    %c1_77 = arith.constant 1 : index
    %c1_78 = arith.constant 1 : index
    %c1_79 = arith.constant 1 : index
    %c1_80 = arith.constant 1 : index
    %c0_81 = arith.constant 0 : index
    %47 = vector.load %arg10[%c0_76, %c1_77, %c1_78, %c1_79, %c1_80, %c0_81] : memref<2x2x9x2x9x64xf32, #tpu.memory_space<vmem>>, vector<2x1x8x1x8x64xf32>
    %48 = vector.shape_cast %47 : vector<2x1x8x1x8x64xf32> to vector<128x64xf32>
    %49 = tpu.concatenate %32, %34, %36, %38, %40, %42, %44, %46, %48 in 1 : vector<128x64xf32>, vector<128x64xf32>, vector<128x64xf32>, vector<128x64xf32>, vector<128x64xf32>, vector<128x64xf32>, vector<128x64xf32>, vector<128x64xf32>, vector<128x64xf32> -> vector<128x576xf32>
    %c0_82 = arith.constant 0 : index
    %c0_83 = arith.constant 0 : index
    %50 = vector.load %arg2[%c0_82, %c0_83] : memref<576x64xf32, #tpu.memory_space<vmem>>, vector<576x64xf32>
    %cst_84 = arith.constant dense<0.000000e+00> : vector<128x64xf32>
    %51 = tpu.matmul %49, %50, %cst_84 {dimension_numbers = #tpu.dot_dimension_numbers<[1], [0], [0], [1], [0, 0, 1, 1], [], []>} : vector<128x576xf32>, vector<576x64xf32>, vector<128x64xf32> -> vector<128x64xf32>
    %cst_85 = arith.constant dense<0.000000e+00> : vector<64xf32>
    %52 = vector.multi_reduction <add>, %51, %cst_85 [0] : vector<128x64xf32> to vector<64xf32>
    %53 = vector.shape_cast %52 : vector<64xf32> to vector<1x64xf32>
    %54 = arith.mulf %51, %51 : vector<128x64xf32>
    %cst_86 = arith.constant dense<0.000000e+00> : vector<64xf32>
    %55 = vector.multi_reduction <add>, %54, %cst_86 [0] : vector<128x64xf32> to vector<64xf32>
    %56 = vector.shape_cast %55 : vector<64xf32> to vector<1x64xf32>
    %cst_87 = arith.constant 7.812500e-03 : f32
    %57 = vector.broadcast %cst_87 : f32 to vector<1x64xf32>
    %58 = arith.mulf %53, %57 : vector<1x64xf32>
    %cst_88 = arith.constant 7.812500e-03 : f32
    %59 = vector.broadcast %cst_88 : f32 to vector<1x64xf32>
    %60 = arith.mulf %56, %59 : vector<1x64xf32>
    %61 = arith.mulf %58, %58 : vector<1x64xf32>
    %62 = arith.subf %60, %61 : vector<1x64xf32>
    %cst_89 = arith.constant 9.99999974E-6 : f32
    %63 = vector.broadcast %cst_89 : f32 to vector<1x64xf32>
    %64 = arith.addf %62, %63 : vector<1x64xf32>
    %65 = math.rsqrt %64 : vector<1x64xf32>
    %c0_90 = arith.constant 0 : index
    %c0_91 = arith.constant 0 : index
    %66 = vector.load %arg6[%c0_90, %c0_91] : memref<2x64xf32, #tpu.memory_space<vmem>>, vector<1x64xf32>
    %67 = arith.mulf %65, %66 : vector<1x64xf32>
    %c0_92 = arith.constant 0 : index
    %c0_93 = arith.constant 0 : index
    %68 = vector.load %arg3[%c0_92, %c0_93] : memref<256x64xf32, #tpu.memory_space<vmem>>, vector<256x64xf32>
    %69 = vector.broadcast %67 : vector<1x64xf32> to vector<256x64xf32>
    %70 = arith.mulf %68, %69 : vector<256x64xf32>
    %cst_94 = arith.constant dense<0.000000e+00> : vector<128x256xf32>
    %71 = tpu.matmul %51, %70, %cst_94 {dimension_numbers = #tpu.dot_dimension_numbers<[1], [1], [0], [0], [0, 0, 1, 0], [], []>} : vector<128x64xf32>, vector<256x64xf32>, vector<128x256xf32> -> vector<128x256xf32>
    %c0_95 = arith.constant 0 : index
    %c0_96 = arith.constant 0 : index
    %72 = vector.load %arg7[%c0_95, %c0_96] : memref<2x256xf32, #tpu.memory_space<vmem>>, vector<1x256xf32>
    %c1_97 = arith.constant 1 : index
    %c0_98 = arith.constant 0 : index
    %73 = vector.load %arg7[%c1_97, %c0_98] : memref<2x256xf32, #tpu.memory_space<vmem>>, vector<1x256xf32>
    %cst_99 = arith.constant dense<0.000000e+00> : vector<256xf32>
    %74 = vector.multi_reduction <add>, %71, %cst_99 [0] : vector<128x256xf32> to vector<256xf32>
    %75 = vector.shape_cast %74 : vector<256xf32> to vector<1x256xf32>
    %76 = arith.mulf %71, %71 : vector<128x256xf32>
    %cst_100 = arith.constant dense<0.000000e+00> : vector<256xf32>
    %77 = vector.multi_reduction <add>, %76, %cst_100 [0] : vector<128x256xf32> to vector<256xf32>
    %78 = vector.shape_cast %77 : vector<256xf32> to vector<1x256xf32>
    %cst_101 = arith.constant 7.812500e-03 : f32
    %79 = vector.broadcast %cst_101 : f32 to vector<1x256xf32>
    %80 = arith.mulf %75, %79 : vector<1x256xf32>
    %cst_102 = arith.constant 7.812500e-03 : f32
    %81 = vector.broadcast %cst_102 : f32 to vector<1x256xf32>
    %82 = arith.mulf %78, %81 : vector<1x256xf32>
    %83 = arith.mulf %80, %80 : vector<1x256xf32>
    %84 = arith.subf %82, %83 : vector<1x256xf32>
    %cst_103 = arith.constant 9.99999974E-6 : f32
    %85 = vector.broadcast %cst_103 : f32 to vector<1x256xf32>
    %86 = arith.addf %84, %85 : vector<1x256xf32>
    %87 = math.rsqrt %86 : vector<1x256xf32>
    %88 = arith.mulf %87, %72 : vector<1x256xf32>
    %89 = arith.mulf %80, %88 : vector<1x256xf32>
    %90 = arith.subf %73, %89 : vector<1x256xf32>
    %91 = vector.broadcast %88 : vector<1x256xf32> to vector<128x256xf32>
    %92 = arith.mulf %71, %91 : vector<128x256xf32>
    %93 = vector.broadcast %90 : vector<1x256xf32> to vector<128x256xf32>
    %94 = arith.addf %92, %93 : vector<128x256xf32>
    %cst_104 = arith.constant 0.000000e+00 : f32
    %95 = vector.broadcast %cst_104 : f32 to vector<128x256xf32>
    %96 = arith.maximumf %94, %95 : vector<128x256xf32>
    %c0_105 = arith.constant 0 : index
    %c0_106 = arith.constant 0 : index
    %c0_107 = arith.constant 0 : index
    %c0_108 = arith.constant 0 : index
    %c0_109 = arith.constant 0 : index
    %c0_110 = arith.constant 0 : index
    %97 = vector.load %arg0[%c0_105, %c0_106, %c0_107, %c0_108, %c0_109, %c0_110] : memref<2x2x8x2x8x64xf32, #tpu.memory_space<vmem>>, vector<2x1x8x1x8x64xf32>
    %98 = vector.shape_cast %97 : vector<2x1x8x1x8x64xf32> to vector<128x64xf32>
    %c0_111 = arith.constant 0 : index
    %c0_112 = arith.constant 0 : index
    %99 = vector.load %arg4[%c0_111, %c0_112] : memref<64x256xf32, #tpu.memory_space<vmem>>, vector<64x256xf32>
    %cst_113 = arith.constant dense<0.000000e+00> : vector<128x256xf32>
    %100 = tpu.matmul %98, %99, %cst_113 {dimension_numbers = #tpu.dot_dimension_numbers<[1], [0], [0], [1], [0, 0, 1, 1], [], []>} : vector<128x64xf32>, vector<64x256xf32>, vector<128x256xf32> -> vector<128x256xf32>
    %c0_114 = arith.constant 0 : index
    %c0_115 = arith.constant 0 : index
    %101 = vector.load %arg8[%c0_114, %c0_115] : memref<2x256xf32, #tpu.memory_space<vmem>>, vector<1x256xf32>
    %c1_116 = arith.constant 1 : index
    %c0_117 = arith.constant 0 : index
    %102 = vector.load %arg8[%c1_116, %c0_117] : memref<2x256xf32, #tpu.memory_space<vmem>>, vector<1x256xf32>
    %cst_118 = arith.constant dense<0.000000e+00> : vector<256xf32>
    %103 = vector.multi_reduction <add>, %100, %cst_118 [0] : vector<128x256xf32> to vector<256xf32>
    %104 = vector.shape_cast %103 : vector<256xf32> to vector<1x256xf32>
    %105 = arith.mulf %100, %100 : vector<128x256xf32>
    %cst_119 = arith.constant dense<0.000000e+00> : vector<256xf32>
    %106 = vector.multi_reduction <add>, %105, %cst_119 [0] : vector<128x256xf32> to vector<256xf32>
    %107 = vector.shape_cast %106 : vector<256xf32> to vector<1x256xf32>
    %cst_120 = arith.constant 7.812500e-03 : f32
    %108 = vector.broadcast %cst_120 : f32 to vector<1x256xf32>
    %109 = arith.mulf %104, %108 : vector<1x256xf32>
    %cst_121 = arith.constant 7.812500e-03 : f32
    %110 = vector.broadcast %cst_121 : f32 to vector<1x256xf32>
    %111 = arith.mulf %107, %110 : vector<1x256xf32>
    %112 = arith.mulf %109, %109 : vector<1x256xf32>
    %113 = arith.subf %111, %112 : vector<1x256xf32>
    %cst_122 = arith.constant 9.99999974E-6 : f32
    %114 = vector.broadcast %cst_122 : f32 to vector<1x256xf32>
    %115 = arith.addf %113, %114 : vector<1x256xf32>
    %116 = math.rsqrt %115 : vector<1x256xf32>
    %117 = arith.mulf %116, %101 : vector<1x256xf32>
    %118 = arith.mulf %109, %117 : vector<1x256xf32>
    %119 = arith.subf %102, %118 : vector<1x256xf32>
    %120 = vector.broadcast %117 : vector<1x256xf32> to vector<128x256xf32>
    %121 = arith.mulf %100, %120 : vector<128x256xf32>
    %122 = vector.broadcast %119 : vector<1x256xf32> to vector<128x256xf32>
    %123 = arith.addf %121, %122 : vector<128x256xf32>
    %124 = arith.addf %96, %123 : vector<128x256xf32>
    %c0_123 = arith.constant 0 : index
    %c0_124 = arith.constant 0 : index
    %125 = vector.load %arg9[%c0_123, %c0_124] : memref<128x256xf32, #tpu.memory_space<vmem>>, vector<128x256xf32>
    tpu.vector_store %arg9[%c0_123, %c0_124], %124 {strides = array<i32>} : memref<128x256xf32, #tpu.memory_space<vmem>>, vector<128x256xf32>,
    return
  }
}

</mosaic_0001>

<llo_original>
// kernel: bottleneck_forward.1
$region0: #{bottleneck_forward.1}
  #allocation0 [shape = 'u32[]', space=smem, size = 0x4, offset = 0x4, fixed_abs, tag = 'smem constant byte address 0x4 - core index']
  #allocation1 [shape = 'u32[72,128]{1,0:T(1,128)}', space=vmem, size = 0x9000, scoped, tag = 'internal scratch']
  #allocation2 [shape = 'f32[2,2,9,2,9,64]{5,4,3,2,1,0:T(8,128)}', space=vmem, size = 0x90000, scoped, tag = 'scratch operand']
  %s0 = inlined_call_operand.vmem [shape: f32[2,2,8,2,8,64], index: 0, kind: input, shape index: {}]
  %s1 = inlined_call_operand.vmem [shape: f32[64,64], index: 1, kind: input, shape index: {}]
  %s2 = inlined_call_operand.vmem [shape: f32[576,64], index: 2, kind: input, shape index: {}]
  %s3 = inlined_call_operand.vmem [shape: f32[256,64], index: 3, kind: input, shape index: {}]
  %s4 = inlined_call_operand.vmem [shape: f32[64,256], index: 4, kind: input, shape index: {}]
  %s5 = inlined_call_operand.vmem [shape: f32[2,64], index: 5, kind: input, shape index: {}]
  %s6 = inlined_call_operand.vmem [shape: f32[2,64], index: 6, kind: input, shape index: {}]
  %s7 = inlined_call_operand.vmem [shape: f32[2,256], index: 7, kind: input, shape index: {}]
  %s8 = inlined_call_operand.vmem [shape: f32[2,256], index: 8, kind: input, shape index: {}]
  %s9 = inlined_call_operand.hbm [shape: f32[128,256], index: 9, kind: output, shape index: {}]
  %s10 = sld [smem:[#allocation0]]
  $region46: #{bottleneck_forward.1} parent=0
    _
  %s12 = ssub.s32 1, %s10
  %s13 = scalar_select 0, %s12, %s10
  $region1: #{bottleneck_forward.1} parent=0
    #allocation3 [shape = 'u8[131072]{0}', space=vmem, size = 0x20000, scoped, tag = 'output window, operand 0, single buffered']
    #allocation4 [shape = 's32[1]{0}', space=sflag, size = 0x4, scoped, tag = 'scoped memory for bottleneck_forward.1']
    %14 = vsyncpa [#allocation4], 0
    // Predicated region
    $region2: #{bottleneck_forward.1} parent=1 // pred_check
      _
    $region3: #{bottleneck_forward.1} parent=1 // pred_check_branch
      %16 = sbr.rel (0) target = $region5
    $region4: #{bottleneck_forward.1} parent=1 // pred_region
      _
    $region5: #{bottleneck_forward.1} parent=1 // pred_fallthru
      _
    // Predicated region
    $region6: #{bottleneck_forward.1} parent=1 // pred_check
      _
    $region7: #{bottleneck_forward.1} parent=1 // pred_check_branch
      %18 = sbr.rel (0) target = $region9
    $region8: #{bottleneck_forward.1} parent=1 // pred_region
      _
    $region9: #{bottleneck_forward.1} parent=1 // pred_fallthru
      _
    // Predicated region
    $region10: #{bottleneck_forward.1} parent=1 // pred_check
      _
    $region11: #{bottleneck_forward.1} parent=1 // pred_check_branch
      %20 = sbr.rel (0) target = $region13
    $region12: #{bottleneck_forward.1} parent=1 // pred_region
      _
    $region13: #{bottleneck_forward.1} parent=1 // pred_fallthru
      _
    // Predicated region
    $region14: #{bottleneck_forward.1} parent=1 // pred_check
      _
    $region15: #{bottleneck_forward.1} parent=1 // pred_check_branch
      %22 = sbr.rel (0) target = $region17
    $region16: #{bottleneck_forward.1} parent=1 // pred_region
      _
    $region17: #{bottleneck_forward.1} parent=1 // pred_fallthru
      _
    // Predicated region
    $region18: #{bottleneck_forward.1} parent=1 // pred_check
      _
    $region19: #{bottleneck_forward.1} parent=1 // pred_check_branch
      %24 = sbr.rel (0) target = $region21
    $region20: #{bottleneck_forward.1} parent=1 // pred_region
      _
    $region21: #{bottleneck_forward.1} parent=1 // pred_fallthru
      _
    // Predicated region
    $region22: #{bottleneck_forward.1} parent=1 // pred_check
      _
    $region23: #{bottleneck_forward.1} parent=1 // pred_check_branch
      %26 = sbr.rel (0) target = $region25
    $region24: #{bottleneck_forward.1} parent=1 // pred_region
      _
    $region25: #{bottleneck_forward.1} parent=1 // pred_fallthru
      _
    // Predicated region
    $region26: #{bottleneck_forward.1} parent=1 // pred_check
      _
    $region27: #{bottleneck_forward.1} parent=1 // pred_check_branch
      %28 = sbr.rel (0) target = $region29
    $region28: #{bottleneck_forward.1} parent=1 // pred_region
      _
    $region29: #{bottleneck_forward.1} parent=1 // pred_fallthru
      _
    // Predicated region
    $region30: #{bottleneck_forward.1} parent=1 // pred_check
      _
    $region31: #{bottleneck_forward.1} parent=1 // pred_check_branch
      %30 = sbr.rel (0) target = $region33
    $region32: #{bottleneck_forward.1} parent=1 // pred_region
      _
    $region33: #{bottleneck_forward.1} parent=1 // pred_fallthru
      _
    // Predicated region
    $region34: #{bottleneck_forward.1} parent=1 // pred_check
      _
    $region35: #{bottleneck_forward.1} parent=1 // pred_check_branch
      %32 = sbr.rel (0) target = $region37
    $region36: #{bottleneck_forward.1} parent=1 // pred_region
      _
    $region37: #{bottleneck_forward.1} parent=1 // pred_fallthru
      _
    %v33 = vld [vmem:[%s0] sm:$0xff]
    %v34 = vld [vmem:[%s0 + $0x8] sm:$0xff]
    %v35 = vld [vmem:[%s0 + $0x10] sm:$0xff]
    %v36 = vld [vmem:[%s0 + $0x18] sm:$0xff]
    %v37 = vld [vmem:[%s0 + $0x20] sm:$0xff]
    %v38 = vld [vmem:[%s0 + $0x28] sm:$0xff]
    %v39 = vld [vmem:[%s0 + $0x30] sm:$0xff]
    %v40 = vld [vmem:[%s0 + $0x38] sm:$0xff]
    %v41 = vld [vmem:[%s0 + $0x40] sm:$0xff]
    %v42 = vld [vmem:[%s0 + $0x48] sm:$0xff]
    %v43 = vld [vmem:[%s0 + $0x50] sm:$0xff]
    %v44 = vld [vmem:[%s0 + $0x58] sm:$0xff]
    %v45 = vld [vmem:[%s0 + $0x60] sm:$0xff]
    %v46 = vld [vmem:[%s0 + $0x68] sm:$0xff]
    %v47 = vld [vmem:[%s0 + $0x70] sm:$0xff]
    %v48 = vld [vmem:[%s0 + $0x78] sm:$0xff]
    %v49 = vld [vmem:[%s0 + $0x80] sm:$0xff]
    %v50 = vld [vmem:[%s0 + $0x88] sm:$0xff]
    %v51 = vld [vmem:[%s0 + $0x90] sm:$0xff]
    %v52 = vld [vmem:[%s0 + $0x98] sm:$0xff]
    %v53 = vld [vmem:[%s0 + $0xa0] sm:$0xff]
    %v54 = vld [vmem:[%s0 + $0xa8] sm:$0xff]
    %v55 = vld [vmem:[%s0 + $0xb0] sm:$0xff]
    %v56 = vld [vmem:[%s0 + $0xb8] sm:$0xff]
    %v57 = vld [vmem:[%s0 + $0xc0] sm:$0xff]
    %v58 = vld [vmem:[%s0 + $0xc8] sm:$0xff]
    %v59 = vld [vmem:[%s0 + $0xd0] sm:$0xff]
    %v60 = vld [vmem:[%s0 + $0xd8] sm:$0xff]
    %v61 = vld [vmem:[%s0 + $0xe0] sm:$0xff]
    %v62 = vld [vmem:[%s0 + $0xe8] sm:$0xff]
    %v63 = vld [vmem:[%s0 + $0xf0] sm:$0xff]
    %v64 = vld [vmem:[%s0 + $0xf8] sm:$0xff]
    %v65 = vld [vmem:[%s0 + $0x100] sm:$0xff]
    %v66 = vld [vmem:[%s0 + $0x108] sm:$0xff]
    %v67 = vld [vmem:[%s0 + $0x110] sm:$0xff]
    %v68 = vld [vmem:[%s0 + $0x118] sm:$0xff]
    %v69 = vld [vmem:[%s0 + $0x120] sm:$0xff]
    %v70 = vld [vmem:[%s0 + $0x128] sm:$0xff]
    %v71 = vld [vmem:[%s0 + $0x130] sm:$0xff]
    %v72 = vld [vmem:[%s0 + $0x138] sm:$0xff]
    %v73 = vld [vmem:[%s0 + $0x140] sm:$0xff]
    %v74 = vld [vmem:[%s0 + $0x148] sm:$0xff]
    %v75 = vld [vmem:[%s0 + $0x150] sm:$0xff]
    %v76 = vld [vmem:[%s0 + $0x158] sm:$0xff]
    %v77 = vld [vmem:[%s0 + $0x160] sm:$0xff]
    %v78 = vld [vmem:[%s0 + $0x168] sm:$0xff]
    %v79 = vld [vmem:[%s0 + $0x170] sm:$0xff]
    %v80 = vld [vmem:[%s0 + $0x178] sm:$0xff]
    %v81 = vld [vmem:[%s0 + $0x180] sm:$0xff]
    %v82 = vld [vmem:[%s0 + $0x188] sm:$0xff]
    %v83 = vld [vmem:[%s0 + $0x190] sm:$0xff]
    %v84 = vld [vmem:[%s0 + $0x198] sm:$0xff]
    %v85 = vld [vmem:[%s0 + $0x1a0] sm:$0xff]
    %v86 = vld [vmem:[%s0 + $0x1a8] sm:$0xff]
    %v87 = vld [vmem:[%s0 + $0x1b0] sm:$0xff]
    %v88 = vld [vmem:[%s0 + $0x1b8] sm:$0xff]
    %v89 = vld [vmem:[%s0 + $0x1c0] sm:$0xff]
    %v90 = vld [vmem:[%s0 + $0x1c8] sm:$0xff]
    %v91 = vld [vmem:[%s0 + $0x1d0] sm:$0xff]
    %v92 = vld [vmem:[%s0 + $0x1d8] sm:$0xff]
    %v93 = vld [vmem:[%s0 + $0x1e0] sm:$0xff]
    %v94 = vld [vmem:[%s0 + $0x1e8] sm:$0xff]
    %v95 = vld [vmem:[%s0 + $0x1f0] sm:$0xff]
    %v96 = vld [vmem:[%s0 + $0x1f8] sm:$0xff]
    %v97 = vld [vmem:[%s1] sm:$0xff]
    %v98 = vld [vmem:[%s1 + $0x8] sm:$0xff]
    %v99 = vld [vmem:[%s1 + $0x10] sm:$0xff]
    %v100 = vld [vmem:[%s1 + $0x18] sm:$0xff]
    %v101 = vld [vmem:[%s1 + $0x20] sm:$0xff]
    %v102 = vld [vmem:[%s1 + $0x28] sm:$0xff]
    %v103 = vld [vmem:[%s1 + $0x30] sm:$0xff]
    %v104 = vld [vmem:[%s1 + $0x38] sm:$0xff]
    %vm105 = vcmask 523264
    %v107 = vsel %vm105, %v33, 0
    %v110 = vsel %vm105, %v34, 0
    %v113 = vsel %vm105, %v35, 0
    %v116 = vsel %vm105, %v36, 0
    %v119 = vsel %vm105, %v37, 0
    %v122 = vsel %vm105, %v38, 0
    %v125 = vsel %vm105, %v39, 0
    %v128 = vsel %vm105, %v40, 0
    %v131 = vsel %vm105, %v41, 0
    %v134 = vsel %vm105, %v42, 0
    %v137 = vsel %vm105, %v43, 0
    %v140 = vsel %vm105, %v44, 0
    %v143 = vsel %vm105, %v45, 0
    %v146 = vsel %vm105, %v46, 0
    %v149 = vsel %vm105, %v47, 0
    %v152 = vsel %vm105, %v48, 0
    %v155 = vsel %vm105, %v49, 0
    %v158 = vsel %vm105, %v50, 0
    %v161 = vsel %vm105, %v51, 0
    %v164 = vsel %vm105, %v52, 0
    %v167 = vsel %vm105, %v53, 0
    %v170 = vsel %vm105, %v54, 0
    %v173 = vsel %vm105, %v55, 0
    %v176 = vsel %vm105, %v56, 0
    %v179 = vsel %vm105, %v57, 0
    %v182 = vsel %vm105, %v58, 0
    %v185 = vsel %vm105, %v59, 0
    %v188 = vsel %vm105, %v60, 0
    %v191 = vsel %vm105, %v61, 0
    %v194 = vsel %vm105, %v62, 0
    %v197 = vsel %vm105, %v63, 0
    %v200 = vsel %vm105, %v64, 0
    %v203 = vsel %vm105, %v65, 0
    %v206 = vsel %vm105, %v66, 0
    %v209 = vsel %vm105, %v67, 0
    %v212 = vsel %vm105, %v68, 0
    %v215 = vsel %vm105, %v69, 0
    %v218 = vsel %vm105, %v70, 0
    %v221 = vsel %vm105, %v71, 0
    %v224 = vsel %vm105, %v72, 0
    %v227 = vsel %vm105, %v73, 0
    %v230 = vsel %vm105, %v74, 0
    %v233 = vsel %vm105, %v75, 0
    %v236 = vsel %vm105, %v76, 0
    %v239 = vsel %vm105, %v77, 0
    %v242 = vsel %vm105, %v78, 0
    %v245 = vsel %vm105, %v79, 0
    %v248 = vsel %vm105, %v80, 0
    %v251 = vsel %vm105, %v81, 0
    %v254 = vsel %vm105, %v82, 0
    %v257 = vsel %vm105, %v83, 0
    %v260 = vsel %vm105, %v84, 0
    %v263 = vsel %vm105, %v85, 0
    %v266 = vsel %vm105, %v86, 0
    %v269 = vsel %vm105, %v87, 0
    %v272 = vsel %vm105, %v88, 0
    %v275 = vsel %vm105, %v89, 0
    %v278 = vsel %vm105, %v90, 0
    %v281 = vsel %vm105, %v91, 0
    %v284 = vsel %vm105, %v92, 0
    %v287 = vsel %vm105, %v93, 0
    %v290 = vsel %vm105, %v94, 0
    %v293 = vsel %vm105, %v95, 0
    %v296 = vsel %vm105, %v96, 0
    %298 = vmatpush.msra.mxu0 0.0
    %299 = vmatpush.msra.mxu0 0.0
    %300 = vmatpush.msra.mxu0 0.0
    %301 = vmatpush.msra.mxu0 0.0
    %302 = vmatpush.msra.mxu0 0.0
    %303 = vmatpush.msra.mxu0 0.0
    %304 = vmatpush.msra.mxu0 0.0
    %305 = vmatpush.msra.mxu0 0.0
    %306 = vmatpush.msra.mxu0 %v104
    %307 = vmatpush.msra.mxu0 %v103
    %308 = vmatpush.msra.mxu0 %v102
    %309 = vmatpush.msra.mxu0 %v101
    %310 = vmatpush.msra.mxu0 %v100
    %311 = vmatpush.msra.mxu0 %v99
    %312 = vmatpush.msra.mxu0 %v98
    %313 = vmatpush.msra.mxu0 %v97
    %314 = vmatmul.f32.gmra.mxu0 %v107
    %v315 = vpop.f32.mrf.mxu0
    %v316 = vadd.f32 0.0, %v315
    %317 = vmatmul.f32.gmra.mxu0 %v110
    %v318 = vpop.f32.mrf.mxu0
    %v319 = vadd.f32 0.0, %v318
    %320 = vmatmul.f32.gmra.mxu0 %v113
    %v321 = vpop.f32.mrf.mxu0
    %v322 = vadd.f32 0.0, %v321
    %323 = vmatmul.f32.gmra.mxu0 %v116
    %v324 = vpop.f32.mrf.mxu0
    %v325 = vadd.f32 0.0, %v324
    %326 = vmatmul.f32.gmra.mxu0 %v119
    %v327 = vpop.f32.mrf.mxu0
    %v328 = vadd.f32 0.0, %v327
    %329 = vmatmul.f32.gmra.mxu0 %v122
    %v330 = vpop.f32.mrf.mxu0
    %v331 = vadd.f32 0.0, %v330
    %332 = vmatmul.f32.gmra.mxu0 %v125
    %v333 = vpop.f32.mrf.mxu0
    %v334 = vadd.f32 0.0, %v333
    %335 = vmatmul.f32.gmra.mxu0 %v128
    %v336 = vpop.f32.mrf.mxu0
    %v337 = vadd.f32 0.0, %v336
    %338 = vmatmul.f32.gmra.mxu0 %v131
    %v339 = vpop.f32.mrf.mxu0
    %v340 = vadd.f32 0.0, %v339
    %341 = vmatmul.f32.gmra.mxu0 %v134
    %v342 = vpop.f32.mrf.mxu0
    %v343 = vadd.f32 0.0, %v342
    %344 = vmatmul.f32.gmra.mxu0 %v137
    %v345 = vpop.f32.mrf.mxu0
    %v346 = vadd.f32 0.0, %v345
    %347 = vmatmul.f32.gmra.mxu0 %v140
    %v348 = vpop.f32.mrf.mxu0
    %v349 = vadd.f32 0.0, %v348
    %350 = vmatmul.f32.gmra.mxu0 %v143
    %v351 = vpop.f32.mrf.mxu0
    %v352 = vadd.f32 0.0, %v351
    %353 = vmatmul.f32.gmra.mxu0 %v146
    %v354 = vpop.f32.mrf.mxu0
    %v355 = vadd.f32 0.0, %v354
    %356 = vmatmul.f32.gmra.mxu0 %v149
    %v357 = vpop.f32.mrf.mxu0
    %v358 = vadd.f32 0.0, %v357
    %359 = vmatmul.f32.gmra.mxu0 %v152
    %v360 = vpop.f32.mrf.mxu0
    %v361 = vadd.f32 0.0, %v360
    %362 = vmatmul.f32.gmra.mxu0 %v155
    %v363 = vpop.f32.mrf.mxu0
    %v364 = vadd.f32 0.0, %v363
    %365 = vmatmul.f32.gmra.mxu0 %v158
    %v366 = vpop.f32.mrf.mxu0
    %v367 = vadd.f32 0.0, %v366
    %368 = vmatmul.f32.gmra.mxu0 %v161
    %v369 = vpop.f32.mrf.mxu0
    %v370 = vadd.f32 0.0, %v369
    %371 = vmatmul.f32.gmra.mxu0 %v164
    %v372 = vpop.f32.mrf.mxu0
    %v373 = vadd.f32 0.0, %v372
    %374 = vmatmul.f32.gmra.mxu0 %v167
    %v375 = vpop.f32.mrf.mxu0
    %v376 = vadd.f32 0.0, %v375
    %377 = vmatmul.f32.gmra.mxu0 %v170
    %v378 = vpop.f32.mrf.mxu0
    %v379 = vadd.f32 0.0, %v378
    %380 = vmatmul.f32.gmra.mxu0 %v173
    %v381 = vpop.f32.mrf.mxu0
    %v382 = vadd.f32 0.0, %v381
    %383 = vmatmul.f32.gmra.mxu0 %v176
    %v384 = vpop.f32.mrf.mxu0
    %v385 = vadd.f32 0.0, %v384
    %386 = vmatmul.f32.gmra.mxu0 %v179
    %v387 = vpop.f32.mrf.mxu0
    %v388 = vadd.f32 0.0, %v387
    %389 = vmatmul.f32.gmra.mxu0 %v182
    %v390 = vpop.f32.mrf.mxu0
    %v391 = vadd.f32 0.0, %v390
    %392 = vmatmul.f32.gmra.mxu0 %v185
    %v393 = vpop.f32.mrf.mxu0
    %v394 = vadd.f32 0.0, %v393
    %395 = vmatmul.f32.gmra.mxu0 %v188
    %v396 = vpop.f32.mrf.mxu0
    %v397 = vadd.f32 0.0, %v396
    %398 = vmatmul.f32.gmra.mxu0 %v191
    %v399 = vpop.f32.mrf.mxu0
    %v400 = vadd.f32 0.0, %v399
    %401 = vmatmul.f32.gmra.mxu0 %v194
    %v402 = vpop.f32.mrf.mxu0
    %v403 = vadd.f32 0.0, %v402
    %404 = vmatmul.f32.gmra.mxu0 %v197
    %v405 = vpop.f32.mrf.mxu0
    %v406 = vadd.f32 0.0, %v405
    %407 = vmatmul.f32.gmra.mxu0 %v200
    %v408 = vpop.f32.mrf.mxu0
    %v409 = vadd.f32 0.0, %v408
    %410 = vmatmul.f32.gmra.mxu0 %v203
    %v411 = vpop.f32.mrf.mxu0
    %v412 = vadd.f32 0.0, %v411
    %413 = vmatmul.f32.gmra.mxu0 %v206
    %v414 = vpop.f32.mrf.mxu0
    %v415 = vadd.f32 0.0, %v414
    %416 = vmatmul.f32.gmra.mxu0 %v209
    %v417 = vpop.f32.mrf.mxu0
    %v418 = vadd.f32 0.0, %v417
    %419 = vmatmul.f32.gmra.mxu0 %v212
    %v420 = vpop.f32.mrf.mxu0
    %v421 = vadd.f32 0.0, %v420
    %422 = vmatmul.f32.gmra.mxu0 %v215
    %v423 = vpop.f32.mrf.mxu0
    %v424 = vadd.f32 0.0, %v423
    %425 = vmatmul.f32.gmra.mxu0 %v218
    %v426 = vpop.f32.mrf.mxu0
    %v427 = vadd.f32 0.0, %v426
    %428 = vmatmul.f32.gmra.mxu0 %v221
    %v429 = vpop.f32.mrf.mxu0
    %v430 = vadd.f32 0.0, %v429
    %431 = vmatmul.f32.gmra.mxu0 %v224
    %v432 = vpop.f32.mrf.mxu0
    %v433 = vadd.f32 0.0, %v432
    %434 = vmatmul.f32.gmra.mxu0 %v227
    %v435 = vpop.f32.mrf.mxu0
    %v436 = vadd.f32 0.0, %v435
    %437 = vmatmul.f32.gmra.mxu0 %v230
    %v438 = vpop.f32.mrf.mxu0
    %v439 = vadd.f32 0.0, %v438
    %440 = vmatmul.f32.gmra.mxu0 %v233
    %v441 = vpop.f32.mrf.mxu0
    %v442 = vadd.f32 0.0, %v441
    %443 = vmatmul.f32.gmra.mxu0 %v236
    %v444 = vpop.f32.mrf.mxu0
    %v445 = vadd.f32 0.0, %v444
    %446 = vmatmul.f32.gmra.mxu0 %v239
    %v447 = vpop.f32.mrf.mxu0
    %v448 = vadd.f32 0.0, %v447
    %449 = vmatmul.f32.gmra.mxu0 %v242
    %v450 = vpop.f32.mrf.mxu0
    %v451 = vadd.f32 0.0, %v450
    %452 = vmatmul.f32.gmra.mxu0 %v245
    %v453 = vpop.f32.mrf.mxu0
    %v454 = vadd.f32 0.0, %v453
    %455 = vmatmul.f32.gmra.mxu0 %v248
    %v456 = vpop.f32.mrf.mxu0
    %v457 = vadd.f32 0.0, %v456
    %458 = vmatmul.f32.gmra.mxu0 %v251
    %v459 = vpop.f32.mrf.mxu0
    %v460 = vadd.f32 0.0, %v459
    %461 = vmatmul.f32.gmra.mxu0 %v254
    %v462 = vpop.f32.mrf.mxu0
    %v463 = vadd.f32 0.0, %v462
    %464 = vmatmul.f32.gmra.mxu0 %v257
    %v465 = vpop.f32.mrf.mxu0
    %v466 = vadd.f32 0.0, %v465
    %467 = vmatmul.f32.gmra.mxu0 %v260
    %v468 = vpop.f32.mrf.mxu0
    %v469 = vadd.f32 0.0, %v468
    %470 = vmatmul.f32.gmra.mxu0 %v263
    %v471 = vpop.f32.mrf.mxu0
    %v472 = vadd.f32 0.0, %v471
    %473 = vmatmul.f32.gmra.mxu0 %v266
    %v474 = vpop.f32.mrf.mxu0
    %v475 = vadd.f32 0.0, %v474
    %476 = vmatmul.f32.gmra.mxu0 %v269
    %v477 = vpop.f32.mrf.mxu0
    %v478 = vadd.f32 0.0, %v477
    %479 = vmatmul.f32.gmra.mxu0 %v272
    %v480 = vpop.f32.mrf.mxu0
    %v481 = vadd.f32 0.0, %v480
    %482 = vmatmul.f32.gmra.mxu0 %v275
    %v483 = vpop.f32.mrf.mxu0
    %v484 = vadd.f32 0.0, %v483
    %485 = vmatmul.f32.gmra.mxu0 %v278
    %v486 = vpop.f32.mrf.mxu0
    %v487 = vadd.f32 0.0, %v486
    %488 = vmatmul.f32.gmra.mxu0 %v281
    %v489 = vpop.f32.mrf.mxu0
    %v490 = vadd.f32 0.0, %v489
    %491 = vmatmul.f32.gmra.mxu0 %v284
    %v492 = vpop.f32.mrf.mxu0
    %v493 = vadd.f32 0.0, %v492
    %494 = vmatmul.f32.gmra.mxu0 %v287
    %v495 = vpop.f32.mrf.mxu0
    %v496 = vadd.f32 0.0, %v495
    %497 = vmatmul.f32.gmra.mxu0 %v290
    %v498 = vpop.f32.mrf.mxu0
    %v499 = vadd.f32 0.0, %v498
    %500 = vmatmul.f32.gmra.mxu0 %v293
    %v501 = vpop.f32.mrf.mxu0
    %v502 = vadd.f32 0.0, %v501
    %503 = vmatmul.f32.gmra.mxu0 %v296
    %v504 = vpop.f32.mrf.mxu0
    %v505 = vadd.f32 0.0, %v504
    %506 = vdwg.mxu0
    %v507 = vld [vmem:[%s5] sm:$0x1]
    %v508 = vld [vmem:[%s5 + $0x1] sm:$0x1]
    %v509 = vsel %vm105, %v316, 0.0
    %v510 = vsel %vm105, %v319, 0.0
    %v511 = vadd.f32 %v509, %v510
    %v512 = vsel %vm105, %v322, 0.0
    %v513 = vadd.f32 %v511, %v512
    %v514 = vsel %vm105, %v325, 0.0
    %v515 = vadd.f32 %v513, %v514
    %v516 = vsel %vm105, %v328, 0.0
    %v517 = vadd.f32 %v515, %v516
    %v518 = vsel %vm105, %v331, 0.0
    %v519 = vadd.f32 %v517, %v518
    %v520 = vsel %vm105, %v334, 0.0
    %v521 = vadd.f32 %v519, %v520
    %v522 = vsel %vm105, %v337, 0.0
    %v523 = vadd.f32 %v521, %v522
    %v524 = vsel %vm105, %v340, 0.0
    %v525 = vadd.f32 %v523, %v524
    %v526 = vsel %vm105, %v343, 0.0
    %v527 = vadd.f32 %v525, %v526
    %v528 = vsel %vm105, %v346, 0.0
    %v529 = vadd.f32 %v527, %v528
    %v530 = vsel %vm105, %v349, 0.0
    %v531 = vadd.f32 %v529, %v530
    %v532 = vsel %vm105, %v352, 0.0
    %v533 = vadd.f32 %v531, %v532
    %v534 = vsel %vm105, %v355, 0.0
    %v535 = vadd.f32 %v533, %v534
    %v536 = vsel %vm105, %v358, 0.0
    %v537 = vadd.f32 %v535, %v536
    %v538 = vsel %vm105, %v361, 0.0
    %v539 = vadd.f32 %v537, %v538
    %v540 = vsel %vm105, %v364, 0.0
    %v541 = vadd.f32 %v539, %v540
    %v542 = vsel %vm105, %v367, 0.0
    %v543 = vadd.f32 %v541, %v542
    %v544 = vsel %vm105, %v370, 0.0
    %v545 = vadd.f32 %v543, %v544
    %v546 = vsel %vm105, %v373, 0.0
    %v547 = vadd.f32 %v545, %v546
    %v548 = vsel %vm105, %v376, 0.0
    %v549 = vadd.f32 %v547, %v548
    %v550 = vsel %vm105, %v379, 0.0
    %v551 = vadd.f32 %v549, %v550
    %v552 = vsel %vm105, %v382, 0.0
    %v553 = vadd.f32 %v551, %v552
    %v554 = vsel %vm105, %v385, 0.0
    %v555 = vadd.f32 %v553, %v554
    %v556 = vsel %vm105, %v388, 0.0
    %v557 = vadd.f32 %v555, %v556
    %v558 = vsel %vm105, %v391, 0.0
    %v559 = vadd.f32 %v557, %v558
    %v560 = vsel %vm105, %v394, 0.0
    %v561 = vadd.f32 %v559, %v560
    %v562 = vsel %vm105, %v397, 0.0
    %v563 = vadd.f32 %v561, %v562
    %v564 = vsel %vm105, %v400, 0.0
    %v565 = vadd.f32 %v563, %v564
    %v566 = vsel %vm105, %v403, 0.0
    %v567 = vadd.f32 %v565, %v566
    %v568 = vsel %vm105, %v406, 0.0
    %v569 = vadd.f32 %v567, %v568
    %v570 = vsel %vm105, %v409, 0.0
    %v571 = vadd.f32 %v569, %v570
    %v572 = vsel %vm105, %v412, 0.0
    %v573 = vadd.f32 %v571, %v572
    %v574 = vsel %vm105, %v415, 0.0
    %v575 = vadd.f32 %v573, %v574
    %v576 = vsel %vm105, %v418, 0.0
    %v577 = vadd.f32 %v575, %v576
    %v578 = vsel %vm105, %v421, 0.0
    %v579 = vadd.f32 %v577, %v578
    %v580 = vsel %vm105, %v424, 0.0
    %v581 = vadd.f32 %v579, %v580
    %v582 = vsel %vm105, %v427, 0.0
    %v583 = vadd.f32 %v581, %v582
    %v584 = vsel %vm105, %v430, 0.0
    %v585 = vadd.f32 %v583, %v584
    %v586 = vsel %vm105, %v433, 0.0
    %v587 = vadd.f32 %v585, %v586
    %v588 = vsel %vm105, %v436, 0.0
    %v589 = vadd.f32 %v587, %v588
    %v590 = vsel %vm105, %v439, 0.0
    %v591 = vadd.f32 %v589, %v590
    %v592 = vsel %vm105, %v442, 0.0
    %v593 = vadd.f32 %v591, %v592
    %v594 = vsel %vm105, %v445, 0.0
    %v595 = vadd.f32 %v593, %v594
    %v596 = vsel %vm105, %v448, 0.0
    %v597 = vadd.f32 %v595, %v596
    %v598 = vsel %vm105, %v451, 0.0
    %v599 = vadd.f32 %v597, %v598
    %v600 = vsel %vm105, %v454, 0.0
    %v601 = vadd.f32 %v599, %v600
    %v602 = vsel %vm105, %v457, 0.0
    %v603 = vadd.f32 %v601, %v602
    %v604 = vsel %vm105, %v460, 0.0
    %v605 = vadd.f32 %v603, %v604
    %v606 = vsel %vm105, %v463, 0.0
    %v607 = vadd.f32 %v605, %v606
    %v608 = vsel %vm105, %v466, 0.0
    %v609 = vadd.f32 %v607, %v608
    %v610 = vsel %vm105, %v469, 0.0
    %v611 = vadd.f32 %v609, %v610
    %v612 = vsel %vm105, %v472, 0.0
    %v613 = vadd.f32 %v611, %v612
    %v614 = vsel %vm105, %v475, 0.0
    %v615 = vadd.f32 %v613, %v614
    %v616 = vsel %vm105, %v478, 0.0
    %v617 = vadd.f32 %v615, %v616
    %v618 = vsel %vm105, %v481, 0.0
    %v619 = vadd.f32 %v617, %v618
    %v620 = vsel %vm105, %v484, 0.0
    %v621 = vadd.f32 %v619, %v620
    %v622 = vsel %vm105, %v487, 0.0
    %v623 = vadd.f32 %v621, %v622
    %v624 = vsel %vm105, %v490, 0.0
    %v625 = vadd.f32 %v623, %v624
    %v626 = vsel %vm105, %v493, 0.0
    %v627 = vadd.f32 %v625, %v626
    %v628 = vsel %vm105, %v496, 0.0
    %v629 = vadd.f32 %v627, %v628
    %v630 = vsel %vm105, %v499, 0.0
    %v631 = vadd.f32 %v629, %v630
    %v632 = vsel %vm105, %v502, 0.0
    %v633 = vadd.f32 %v631, %v632
    %v634 = vsel %vm105, %v505, 0.0
    %v635 = vadd.f32 %v633, %v634
    %v636 = vrot.slane %v635, 4
    %v637 = vadd.f32 %v635, %v636
    %v638 = vrot.slane %v637, 2
    %v639 = vadd.f32 %v637, %v638
    %v640 = vrot.slane %v639, 1
    %v641 = vadd.f32 %v639, %v640
    %v642 = vmul.f32 %v316, %v316
    %v643 = vmul.f32 %v319, %v319
    %v644 = vmul.f32 %v322, %v322
    %v645 = vmul.f32 %v325, %v325
    %v646 = vmul.f32 %v328, %v328
    %v647 = vmul.f32 %v331, %v331
    %v648 = vmul.f32 %v334, %v334
    %v649 = vmul.f32 %v337, %v337
    %v650 = vmul.f32 %v340, %v340
    %v651 = vmul.f32 %v343, %v343
    %v652 = vmul.f32 %v346, %v346
    %v653 = vmul.f32 %v349, %v349
    %v654 = vmul.f32 %v352, %v352
    %v655 = vmul.f32 %v355, %v355
    %v656 = vmul.f32 %v358, %v358
    %v657 = vmul.f32 %v361, %v361
    %v658 = vmul.f32 %v364, %v364
    %v659 = vmul.f32 %v367, %v367
    %v660 = vmul.f32 %v370, %v370
    %v661 = vmul.f32 %v373, %v373
    %v662 = vmul.f32 %v376, %v376
    %v663 = vmul.f32 %v379, %v379
    %v664 = vmul.f32 %v382, %v382
    %v665 = vmul.f32 %v385, %v385
    %v666 = vmul.f32 %v388, %v388
    %v667 = vmul.f32 %v391, %v391
    %v668 = vmul.f32 %v394, %v394
    %v669 = vmul.f32 %v397, %v397
    %v670 = vmul.f32 %v400, %v400
    %v671 = vmul.f32 %v403, %v403
    %v672 = vmul.f32 %v406, %v406
    %v673 = vmul.f32 %v409, %v409
    %v674 = vmul.f32 %v412, %v412
    %v675 = vmul.f32 %v415, %v415
    %v676 = vmul.f32 %v418, %v418
    %v677 = vmul.f32 %v421, %v421
    %v678 = vmul.f32 %v424, %v424
    %v679 = vmul.f32 %v427, %v427
    %v680 = vmul.f32 %v430, %v430
    %v681 = vmul.f32 %v433, %v433
    %v682 = vmul.f32 %v436, %v436
    %v683 = vmul.f32 %v439, %v439
    %v684 = vmul.f32 %v442, %v442
    %v685 = vmul.f32 %v445, %v445
    %v686 = vmul.f32 %v448, %v448
    %v687 = vmul.f32 %v451, %v451
    %v688 = vmul.f32 %v454, %v454
    %v689 = vmul.f32 %v457, %v457
    %v690 = vmul.f32 %v460, %v460
    %v691 = vmul.f32 %v463, %v463
    %v692 = vmul.f32 %v466, %v466
    %v693 = vmul.f32 %v469, %v469
    %v694 = vmul.f32 %v472, %v472
    %v695 = vmul.f32 %v475, %v475
    %v696 = vmul.f32 %v478, %v478
    %v697 = vmul.f32 %v481, %v481
    %v698 = vmul.f32 %v484, %v484
    %v699 = vmul.f32 %v487, %v487
    %v700 = vmul.f32 %v490, %v490
    %v701 = vmul.f32 %v493, %v493
    %v702 = vmul.f32 %v496, %v496
    %v703 = vmul.f32 %v499, %v499
    %v704 = vmul.f32 %v502, %v502
    %v705 = vmul.f32 %v505, %v505
    %v706 = vsel %vm105, %v642, 0.0
    %v707 = vsel %vm105, %v643, 0.0
    %v708 = vadd.f32 %v706, %v707
    %v709 = vsel %vm105, %v644, 0.0
    %v710 = vadd.f32 %v708, %v709
    %v711 = vsel %vm105, %v645, 0.0
    %v712 = vadd.f32 %v710, %v711
    %v713 = vsel %vm105, %v646, 0.0
    %v714 = vadd.f32 %v712, %v713
    %v715 = vsel %vm105, %v647, 0.0
    %v716 = vadd.f32 %v714, %v715
    %v717 = vsel %vm105, %v648, 0.0
    %v718 = vadd.f32 %v716, %v717
    %v719 = vsel %vm105, %v649, 0.0
    %v720 = vadd.f32 %v718, %v719
    %v721 = vsel %vm105, %v650, 0.0
    %v722 = vadd.f32 %v720, %v721
    %v723 = vsel %vm105, %v651, 0.0
    %v724 = vadd.f32 %v722, %v723
    %v725 = vsel %vm105, %v652, 0.0
    %v726 = vadd.f32 %v724, %v725
    %v727 = vsel %vm105, %v653, 0.0
    %v728 = vadd.f32 %v726, %v727
    %v729 = vsel %vm105, %v654, 0.0
    %v730 = vadd.f32 %v728, %v729
    %v731 = vsel %vm105, %v655, 0.0
    %v732 = vadd.f32 %v730, %v731
    %v733 = vsel %vm105, %v656, 0.0
    %v734 = vadd.f32 %v732, %v733
    %v735 = vsel %vm105, %v657, 0.0
    %v736 = vadd.f32 %v734, %v735
    %v737 = vsel %vm105, %v658, 0.0
    %v738 = vadd.f32 %v736, %v737
    %v739 = vsel %vm105, %v659, 0.0
    %v740 = vadd.f32 %v738, %v739
    %v741 = vsel %vm105, %v660, 0.0
    %v742 = vadd.f32 %v740, %v741
    %v743 = vsel %vm105, %v661, 0.0
    %v744 = vadd.f32 %v742, %v743
    %v745 = vsel %vm105, %v662, 0.0
    %v746 = vadd.f32 %v744, %v745
    %v747 = vsel %vm105, %v663, 0.0
    %v748 = vadd.f32 %v746, %v747
    %v749 = vsel %vm105, %v664, 0.0
    %v750 = vadd.f32 %v748, %v749
    %v751 = vsel %vm105, %v665, 0.0
    %v752 = vadd.f32 %v750, %v751
    %v753 = vsel %vm105, %v666, 0.0
    %v754 = vadd.f32 %v752, %v753
    %v755 = vsel %vm105, %v667, 0.0
    %v756 = vadd.f32 %v754, %v755
    %v757 = vsel %vm105, %v668, 0.0
    %v758 = vadd.f32 %v756, %v757
    %v759 = vsel %vm105, %v669, 0.0
    %v760 = vadd.f32 %v758, %v759
    %v761 = vsel %vm105, %v670, 0.0
    %v762 = vadd.f32 %v760, %v761
    %v763 = vsel %vm105, %v671, 0.0
    %v764 = vadd.f32 %v762, %v763
    %v765 = vsel %vm105, %v672, 0.0
    %v766 = vadd.f32 %v764, %v765
    %v767 = vsel %vm105, %v673, 0.0
    %v768 = vadd.f32 %v766, %v767
    %v769 = vsel %vm105, %v674, 0.0
    %v770 = vadd.f32 %v768, %v769
    %v771 = vsel %vm105, %v675, 0.0
    %v772 = vadd.f32 %v770, %v771
    %v773 = vsel %vm105, %v676, 0.0
    %v774 = vadd.f32 %v772, %v773
    %v775 = vsel %vm105, %v677, 0.0
    %v776 = vadd.f32 %v774, %v775
    %v777 = vsel %vm105, %v678, 0.0
    %v778 = vadd.f32 %v776, %v777
    %v779 = vsel %vm105, %v679, 0.0
    %v780 = vadd.f32 %v778, %v779
    %v781 = vsel %vm105, %v680, 0.0
    %v782 = vadd.f32 %v780, %v781
    %v783 = vsel %vm105, %v681, 0.0
    %v784 = vadd.f32 %v782, %v783
    %v785 = vsel %vm105, %v682, 0.0
    %v786 = vadd.f32 %v784, %v785
    %v787 = vsel %vm105, %v683, 0.0
    %v788 = vadd.f32 %v786, %v787
    %v789 = vsel %vm105, %v684, 0.0
    %v790 = vadd.f32 %v788, %v789
    %v791 = vsel %vm105, %v685, 0.0
    %v792 = vadd.f32 %v790, %v791
    %v793 = vsel %vm105, %v686, 0.0
    %v794 = vadd.f32 %v792, %v793
    %v795 = vsel %vm105, %v687, 0.0
    %v796 = vadd.f32 %v794, %v795
    %v797 = vsel %vm105, %v688, 0.0
    %v798 = vadd.f32 %v796, %v797
    %v799 = vsel %vm105, %v689, 0.0
    %v800 = vadd.f32 %v798, %v799
    %v801 = vsel %vm105, %v690, 0.0
    %v802 = vadd.f32 %v800, %v801
    %v803 = vsel %vm105, %v691, 0.0
    %v804 = vadd.f32 %v802, %v803
    %v805 = vsel %vm105, %v692, 0.0
    %v806 = vadd.f32 %v804, %v805
    %v807 = vsel %vm105, %v693, 0.0
    %v808 = vadd.f32 %v806, %v807
    %v809 = vsel %vm105, %v694, 0.0
    %v810 = vadd.f32 %v808, %v809
    %v811 = vsel %vm105, %v695, 0.0
    %v812 = vadd.f32 %v810, %v811
    %v813 = vsel %vm105, %v696, 0.0
    %v814 = vadd.f32 %v812, %v813
    %v815 = vsel %vm105, %v697, 0.0
    %v816 = vadd.f32 %v814, %v815
    %v817 = vsel %vm105, %v698, 0.0
    %v818 = vadd.f32 %v816, %v817
    %v819 = vsel %vm105, %v699, 0.0
    %v820 = vadd.f32 %v818, %v819
    %v821 = vsel %vm105, %v700, 0.0
    %v822 = vadd.f32 %v820, %v821
    %v823 = vsel %vm105, %v701, 0.0
    %v824 = vadd.f32 %v822, %v823
    %v825 = vsel %vm105, %v702, 0.0
    %v826 = vadd.f32 %v824, %v825
    %v827 = vsel %vm105, %v703, 0.0
    %v828 = vadd.f32 %v826, %v827
    %v829 = vsel %vm105, %v704, 0.0
    %v830 = vadd.f32 %v828, %v829
    %v831 = vsel %vm105, %v705, 0.0
    %v832 = vadd.f32 %v830, %v831
    %v833 = vrot.slane %v832, 4
    %v834 = vadd.f32 %v832, %v833
    %v835 = vrot.slane %v834, 2
    %v836 = vadd.f32 %v834, %v835
    %v837 = vrot.slane %v836, 1
    %v838 = vadd.f32 %v836, %v837
    %v839 = vmul.f32 %v641, 0.001953125
    %v840 = vmul.f32 %v838, 0.001953125
    %v841 = vmul.f32 %v839, %v839
    %v842 = vsub.f32 %v840, %v841
    %v843 = vadd.f32 %v842, 1e-05
    %v844 = vrsqrt.pop %v843
    %v845 = vmul.f32 %v844, %v843
    %v846 = vmul.f32 %v845, %v844
    %v847 = vmul.f32 0.5, %v846
    %v848 = vsub.f32 1.5, %v847
    %v849 = vmul.f32 %v844, %v848
    %vm850 = vweird.f32 %v843
    %vm851 = vweird.f32 %v844
    %vm852 = vmor %vm850, %vm851
    %v853 = vsel %vm852, %v844, %v849
    %v854 = vmul.f32 %v853, %v507
    %v855 = vmul.f32 %v839, %v854
    %v856 = vsub.f32 %v508, %v855
    %v857 = vperm.slane %v854, 0
    %v858 = vmul.f32 %v316, %v857
    %v859 = vmul.f32 %v319, %v857
    %v860 = vmul.f32 %v322, %v857
    %v861 = vmul.f32 %v325, %v857
    %v862 = vmul.f32 %v328, %v857
    %v863 = vmul.f32 %v331, %v857
    %v864 = vmul.f32 %v334, %v857
    %v865 = vmul.f32 %v337, %v857
    %v866 = vmul.f32 %v340, %v857
    %v867 = vmul.f32 %v343, %v857
    %v868 = vmul.f32 %v346, %v857
    %v869 = vmul.f32 %v349, %v857
    %v870 = vmul.f32 %v352, %v857
    %v871 = vmul.f32 %v355, %v857
    %v872 = vmul.f32 %v358, %v857
    %v873 = vmul.f32 %v361, %v857
    %v874 = vmul.f32 %v364, %v857
    %v875 = vmul.f32 %v367, %v857
    %v876 = vmul.f32 %v370, %v857
    %v877 = vmul.f32 %v373, %v857
    %v878 = vmul.f32 %v376, %v857
    %v879 = vmul.f32 %v379, %v857
    %v880 = vmul.f32 %v382, %v857
    %v881 = vmul.f32 %v385, %v857
    %v882 = vmul.f32 %v388, %v857
    %v883 = vmul.f32 %v391, %v857
    %v884 = vmul.f32 %v394, %v857
    %v885 = vmul.f32 %v397, %v857
    %v886 = vmul.f32 %v400, %v857
    %v887 = vmul.f32 %v403, %v857
    %v888 = vmul.f32 %v406, %v857
    %v889 = vmul.f32 %v409, %v857
    %v890 = vmul.f32 %v412, %v857
    %v891 = vmul.f32 %v415, %v857
    %v892 = vmul.f32 %v418, %v857
    %v893 = vmul.f32 %v421, %v857
    %v894 = vmul.f32 %v424, %v857
    %v895 = vmul.f32 %v427, %v857
    %v896 = vmul.f32 %v430, %v857
    %v897 = vmul.f32 %v433, %v857
    %v898 = vmul.f32 %v436, %v857
    %v899 = vmul.f32 %v439, %v857
    %v900 = vmul.f32 %v442, %v857
    %v901 = vmul.f32 %v445, %v857
    %v902 = vmul.f32 %v448, %v857
    %v903 = vmul.f32 %v451, %v857
    %v904 = vmul.f32 %v454, %v857
    %v905 = vmul.f32 %v457, %v857
    %v906 = vmul.f32 %v460, %v857
    %v907 = vmul.f32 %v463, %v857
    %v908 = vmul.f32 %v466, %v857
    %v909 = vmul.f32 %v469, %v857
    %v910 = vmul.f32 %v472, %v857
    %v911 = vmul.f32 %v475, %v857
    %v912 = vmul.f32 %v478, %v857
    %v913 = vmul.f32 %v481, %v857
    %v914 = vmul.f32 %v484, %v857
    %v915 = vmul.f32 %v487, %v857
    %v916 = vmul.f32 %v490, %v857
    %v917 = vmul.f32 %v493, %v857
    %v918 = vmul.f32 %v496, %v857
    %v919 = vmul.f32 %v499, %v857
    %v920 = vmul.f32 %v502, %v857
    %v921 = vmul.f32 %v505, %v857
    %v922 = vperm.slane %v856, 0
    %v923 = vadd.f32 %v858, %v922
    %v924 = vadd.f32 %v859, %v922
    %v925 = vadd.f32 %v860, %v922
    %v926 = vadd.f32 %v861, %v922
    %v927 = vadd.f32 %v862, %v922
    %v928 = vadd.f32 %v863, %v922
    %v929 = vadd.f32 %v864, %v922
    %v930 = vadd.f32 %v865, %v922
    %v931 = vadd.f32 %v866, %v922
    %v932 = vadd.f32 %v867, %v922
    %v933 = vadd.f32 %v868, %v922
    %v934 = vadd.f32 %v869, %v922
    %v935 = vadd.f32 %v870, %v922
    %v936 = vadd.f32 %v871, %v922
    %v937 = vadd.f32 %v872, %v922
    %v938 = vadd.f32 %v873, %v922
    %v939 = vadd.f32 %v874, %v922
    %v940 = vadd.f32 %v875, %v922
    %v941 = vadd.f32 %v876, %v922
    %v942 = vadd.f32 %v877, %v922
    %v943 = vadd.f32 %v878, %v922
    %v944 = vadd.f32 %v879, %v922
    %v945 = vadd.f32 %v880, %v922
    %v946 = vadd.f32 %v881, %v922
    %v947 = vadd.f32 %v882, %v922
    %v948 = vadd.f32 %v883, %v922
    %v949 = vadd.f32 %v884, %v922
    %v950 = vadd.f32 %v885, %v922
    %v951 = vadd.f32 %v886, %v922
    %v952 = vadd.f32 %v887, %v922
    %v953 = vadd.f32 %v888, %v922
    %v954 = vadd.f32 %v889, %v922
    %v955 = vadd.f32 %v890, %v922
    %v956 = vadd.f32 %v891, %v922
    %v957 = vadd.f32 %v892, %v922
    %v958 = vadd.f32 %v893, %v922
    %v959 = vadd.f32 %v894, %v922
    %v960 = vadd.f32 %v895, %v922
    %v961 = vadd.f32 %v896, %v922
    %v962 = vadd.f32 %v897, %v922
    %v963 = vadd.f32 %v898, %v922
    %v964 = vadd.f32 %v899, %v922
    %v965 = vadd.f32 %v900, %v922
    %v966 = vadd.f32 %v901, %v922
    %v967 = vadd.f32 %v902, %v922
    %v968 = vadd.f32 %v903, %v922
    %v969 = vadd.f32 %v904, %v922
    %v970 = vadd.f32 %v905, %v922
    %v971 = vadd.f32 %v906, %v922
    %v972 = vadd.f32 %v907, %v922
    %v973 = vadd.f32 %v908, %v922
    %v974 = vadd.f32 %v909, %v922
    %v975 = vadd.f32 %v910, %v922
    %v976 = vadd.f32 %v911, %v922
    %v977 = vadd.f32 %v912, %v922
    %v978 = vadd.f32 %v913, %v922
    %v979 = vadd.f32 %v914, %v922
    %v980 = vadd.f32 %v915, %v922
    %v981 = vadd.f32 %v916, %v922
    %v982 = vadd.f32 %v917, %v922
    %v983 = vadd.f32 %v918, %v922
    %v984 = vadd.f32 %v919, %v922
    %v985 = vadd.f32 %v920, %v922
    %v986 = vadd.f32 %v921, %v922
    %987 = vst.msk [vmem:[#allocation2] sm:$0xff] %vm105, 0.0
    %vm988 = vcmask 516096
    %989 = vst.msk [vmem:[#allocation2 + $0x8] sm:$0x1] %vm988, 0.0
    %990 = vst.msk [vmem:[#allocation2 + $0x10] sm:$0xff] %vm105, 0.0
    %991 = vst.msk [vmem:[#allocation2 + $0x18] sm:$0x1] %vm988, 0.0
    %992 = vst.msk [vmem:[#allocation2 + $0x20] sm:$0xff] %vm105, 0.0
    %993 = vst.msk [vmem:[#allocation2 + $0x28] sm:$0x1] %vm988, 0.0
    %994 = vst.msk [vmem:[#allocation2 + $0x30] sm:$0xff] %vm105, 0.0
    %995 = vst.msk [vmem:[#allocation2 + $0x38] sm:$0x1] %vm988, 0.0
    %996 = vst.msk [vmem:[#allocation2 + $0x40] sm:$0xff] %vm105, 0.0
    %997 = vst.msk [vmem:[#allocation2 + $0x48] sm:$0x1] %vm988, 0.0
    %998 = vst.msk [vmem:[#allocation2 + $0x50] sm:$0xff] %vm105, 0.0
    %999 = vst.msk [vmem:[#allocation2 + $0x58] sm:$0x1] %vm988, 0.0
    %1000 = vst.msk [vmem:[#allocation2 + $0x60] sm:$0xff] %vm105, 0.0
    %1001 = vst.msk [vmem:[#allocation2 + $0x68] sm:$0x1] %vm988, 0.0
    %1002 = vst.msk [vmem:[#allocation2 + $0x70] sm:$0xff] %vm105, 0.0
    %1003 = vst.msk [vmem:[#allocation2 + $0x78] sm:$0x1] %vm988, 0.0
    %1004 = vst.msk [vmem:[#allocation2 + $0x80] sm:$0xff] %vm105, 0.0
    %1005 = vst.msk [vmem:[#allocation2 + $0x88] sm:$0x1] %vm988, 0.0
    %1006 = vst.msk [vmem:[#allocation2 + $0x90] sm:$0xff] %vm105, 0.0
    %1007 = vst.msk [vmem:[#allocation2 + $0x98] sm:$0x1] %vm988, 0.0
    %1008 = vst.msk [vmem:[#allocation2 + $0xa0] sm:$0xff] %vm105, 0.0
    %1009 = vst.msk [vmem:[#allocation2 + $0xa8] sm:$0x1] %vm988, 0.0
    %1010 = vst.msk [vmem:[#allocation2 + $0xb0] sm:$0xff] %vm105, 0.0
    %1011 = vst.msk [vmem:[#allocation2 + $0xb8] sm:$0x1] %vm988, 0.0
    %1012 = vst.msk [vmem:[#allocation2 + $0xc0] sm:$0xff] %vm105, 0.0
    %1013 = vst.msk [vmem:[#allocation2 + $0xc8] sm:$0x1] %vm988, 0.0
    %1014 = vst.msk [vmem:[#allocation2 + $0xd0] sm:$0xff] %vm105, 0.0
    %1015 = vst.msk [vmem:[#allocation2 + $0xd8] sm:$0x1] %vm988, 0.0
    %1016 = vst.msk [vmem:[#allocation2 + $0xe0] sm:$0xff] %vm105, 0.0
    %1017 = vst.msk [vmem:[#allocation2 + $0xe8] sm:$0x1] %vm988, 0.0
    %1018 = vst.msk [vmem:[#allocation2 + $0xf0] sm:$0xff] %vm105, 0.0
    %1019 = vst.msk [vmem:[#allocation2 + $0xf8] sm:$0x1] %vm988, 0.0
    %1020 = vst.msk [vmem:[#allocation2 + $0x100] sm:$0xff] %vm105, 0.0
    %1021 = vst.msk [vmem:[#allocation2 + $0x108] sm:$0x1] %vm988, 0.0
    %1022 = vst.msk [vmem:[#allocation2 + $0x110] sm:$0xff] %vm105, 0.0
    %1023 = vst.msk [vmem:[#allocation2 + $0x118] sm:$0x1] %vm988, 0.0
    %1024 = vst.msk [vmem:[#allocation2 + $0x120] sm:$0xff] %vm105, 0.0
    %1025 = vst.msk [vmem:[#allocation2 + $0x128] sm:$0x1] %vm988, 0.0
    %1026 = vst.msk [vmem:[#allocation2 + $0x130] sm:$0xff] %vm105, 0.0
    %1027 = vst.msk [vmem:[#allocation2 + $0x138] sm:$0x1] %vm988, 0.0
    %1028 = vst.msk [vmem:[#allocation2 + $0x140] sm:$0xff] %vm105, 0.0
    %1029 = vst.msk [vmem:[#allocation2 + $0x148] sm:$0x1] %vm988, 0.0
    %1030 = vst.msk [vmem:[#allocation2 + $0x150] sm:$0xff] %vm105, 0.0
    %1031 = vst.msk [vmem:[#allocation2 + $0x158] sm:$0x1] %vm988, 0.0
    %1032 = vst.msk [vmem:[#allocation2 + $0x160] sm:$0xff] %vm105, 0.0
    %1033 = vst.msk [vmem:[#allocation2 + $0x168] sm:$0x1] %vm988, 0.0
    %1034 = vst.msk [vmem:[#allocation2 + $0x170] sm:$0xff] %vm105, 0.0
    %1035 = vst.msk [vmem:[#allocation2 + $0x178] sm:$0x1] %vm988, 0.0
    %1036 = vst.msk [vmem:[#allocation2 + $0x180] sm:$0xff] %vm105, 0.0
    %1037 = vst.msk [vmem:[#allocation2 + $0x188] sm:$0x1] %vm988, 0.0
    %1038 = vst.msk [vmem:[#allocation2 + $0x190] sm:$0xff] %vm105, 0.0
    %1039 = vst.msk [vmem:[#allocation2 + $0x198] sm:$0x1] %vm988, 0.0
    %1040 = vst.msk [vmem:[#allocation2 + $0x1a0] sm:$0xff] %vm105, 0.0
    %1041 = vst.msk [vmem:[#allocation2 + $0x1a8] sm:$0x1] %vm988, 0.0
    %1042 = vst.msk [vmem:[#allocation2 + $0x1b0] sm:$0xff] %vm105, 0.0
    %1043 = vst.msk [vmem:[#allocation2 + $0x1b8] sm:$0x1] %vm988, 0.0
    %1044 = vst.msk [vmem:[#allocation2 + $0x1c0] sm:$0xff] %vm105, 0.0
    %1045 = vst.msk [vmem:[#allocation2 + $0x1c8] sm:$0x1] %vm988, 0.0
    %1046 = vst.msk [vmem:[#allocation2 + $0x1d0] sm:$0xff] %vm105, 0.0
    %1047 = vst.msk [vmem:[#allocation2 + $0x1d8] sm:$0x1] %vm988, 0.0
    %1048 = vst.msk [vmem:[#allocation2 + $0x1e0] sm:$0xff] %vm105, 0.0
    %1049 = vst.msk [vmem:[#allocation2 + $0x1e8] sm:$0x1] %vm988, 0.0
    %1050 = vst.msk [vmem:[#allocation2 + $0x1f0] sm:$0xff] %vm105, 0.0
    %1051 = vst.msk [vmem:[#allocation2 + $0x1f8] sm:$0x1] %vm988, 0.0
    %1052 = vst.msk [vmem:[#allocation2 + $0x200] sm:$0xff] %vm105, 0.0
    %1053 = vst.msk [vmem:[#allocation2 + $0x208] sm:$0x1] %vm988, 0.0
    %1054 = vst.msk [vmem:[#allocation2 + $0x210] sm:$0xff] %vm105, 0.0
    %1055 = vst.msk [vmem:[#allocation2 + $0x218] sm:$0x1] %vm988, 0.0
    %1056 = vst.msk [vmem:[#allocation2 + $0x220] sm:$0xff] %vm105, 0.0
    %1057 = vst.msk [vmem:[#allocation2 + $0x228] sm:$0x1] %vm988, 0.0
    %1058 = vst.msk [vmem:[#allocation2 + $0x230] sm:$0xff] %vm105, 0.0
    %1059 = vst.msk [vmem:[#allocation2 + $0x238] sm:$0x1] %vm988, 0.0
    %1060 = vst.msk [vmem:[#allocation2 + $0x240] sm:$0xff] %vm105, 0.0
    %1061 = vst.msk [vmem:[#allocation2 + $0x248] sm:$0x1] %vm988, 0.0
    %1062 = vst.msk [vmem:[#allocation2 + $0x250] sm:$0xff] %vm105, 0.0
    %1063 = vst.msk [vmem:[#allocation2 + $0x258] sm:$0x1] %vm988, 0.0
    %1064 = vst.msk [vmem:[#allocation2 + $0x260] sm:$0xff] %vm105, 0.0
    %1065 = vst.msk [vmem:[#allocation2 + $0x268] sm:$0x1] %vm988, 0.0
    %1066 = vst.msk [vmem:[#allocation2 + $0x270] sm:$0xff] %vm105, 0.0
    %1067 = vst.msk [vmem:[#allocation2 + $0x278] sm:$0x1] %vm988, 0.0
    %1068 = vst.msk [vmem:[#allocation2 + $0x280] sm:$0xff] %vm105, 0.0
    %1069 = vst.msk [vmem:[#allocation2 + $0x288] sm:$0x1] %vm988, 0.0
    %1070 = vst.msk [vmem:[#allocation2 + $0x290] sm:$0xff] %vm105, 0.0
    %1071 = vst.msk [vmem:[#allocation2 + $0x298] sm:$0x1] %vm988, 0.0
    %1072 = vst.msk [vmem:[#allocation2 + $0x2a0] sm:$0xff] %vm105, 0.0
    %1073 = vst.msk [vmem:[#allocation2 + $0x2a8] sm:$0x1] %vm988, 0.0
    %1074 = vst.msk [vmem:[#allocation2 + $0x2b0] sm:$0xff] %vm105, 0.0
    %1075 = vst.msk [vmem:[#allocation2 + $0x2b8] sm:$0x1] %vm988, 0.0
    %1076 = vst.msk [vmem:[#allocation2 + $0x2c0] sm:$0xff] %vm105, 0.0
    %1077 = vst.msk [vmem:[#allocation2 + $0x2c8] sm:$0x1] %vm988, 0.0
    %1078 = vst.msk [vmem:[#allocation2 + $0x2d0] sm:$0xff] %vm105, 0.0
    %1079 = vst.msk [vmem:[#allocation2 + $0x2d8] sm:$0x1] %vm988, 0.0
    %1080 = vst.msk [vmem:[#allocation2 + $0x2e0] sm:$0xff] %vm105, 0.0
    %1081 = vst.msk [vmem:[#allocation2 + $0x2e8] sm:$0x1] %vm988, 0.0
    %1082 = vst.msk [vmem:[#allocation2 + $0x2f0] sm:$0xff] %vm105, 0.0
    %1083 = vst.msk [vmem:[#allocation2 + $0x2f8] sm:$0x1] %vm988, 0.0
    %1084 = vst.msk [vmem:[#allocation2 + $0x300] sm:$0xff] %vm105, 0.0
    %1085 = vst.msk [vmem:[#allocation2 + $0x308] sm:$0x1] %vm988, 0.0
    %1086 = vst.msk [vmem:[#allocation2 + $0x310] sm:$0xff] %vm105, 0.0
    %1087 = vst.msk [vmem:[#allocation2 + $0x318] sm:$0x1] %vm988, 0.0
    %1088 = vst.msk [vmem:[#allocation2 + $0x320] sm:$0xff] %vm105, 0.0
    %1089 = vst.msk [vmem:[#allocation2 + $0x328] sm:$0x1] %vm988, 0.0
    %1090 = vst.msk [vmem:[#allocation2 + $0x330] sm:$0xff] %vm105, 0.0
    %1091 = vst.msk [vmem:[#allocation2 + $0x338] sm:$0x1] %vm988, 0.0
    %1092 = vst.msk [vmem:[#allocation2 + $0x340] sm:$0xff] %vm105, 0.0
    %1093 = vst.msk [vmem:[#allocation2 + $0x348] sm:$0x1] %vm988, 0.0
    %1094 = vst.msk [vmem:[#allocation2 + $0x350] sm:$0xff] %vm105, 0.0
    %1095 = vst.msk [vmem:[#allocation2 + $0x358] sm:$0x1] %vm988, 0.0
    %1096 = vst.msk [vmem:[#allocation2 + $0x360] sm:$0xff] %vm105, 0.0
    %1097 = vst.msk [vmem:[#allocation2 + $0x368] sm:$0x1] %vm988, 0.0
    %1098 = vst.msk [vmem:[#allocation2 + $0x370] sm:$0xff] %vm105, 0.0
    %1099 = vst.msk [vmem:[#allocation2 + $0x378] sm:$0x1] %vm988, 0.0
    %1100 = vst.msk [vmem:[#allocation2 + $0x380] sm:$0xff] %vm105, 0.0
    %1101 = vst.msk [vmem:[#allocation2 + $0x388] sm:$0x1] %vm988, 0.0
    %1102 = vst.msk [vmem:[#allocation2 + $0x390] sm:$0xff] %vm105, 0.0
    %1103 = vst.msk [vmem:[#allocation2 + $0x398] sm:$0x1] %vm988, 0.0
    %1104 = vst.msk [vmem:[#allocation2 + $0x3a0] sm:$0xff] %vm105, 0.0
    %1105 = vst.msk [vmem:[#allocation2 + $0x3a8] sm:$0x1] %vm988, 0.0
    %1106 = vst.msk [vmem:[#allocation2 + $0x3b0] sm:$0xff] %vm105, 0.0
    %1107 = vst.msk [vmem:[#allocation2 + $0x3b8] sm:$0x1] %vm988, 0.0
    %1108 = vst.msk [vmem:[#allocation2 + $0x3c0] sm:$0xff] %vm105, 0.0
    %1109 = vst.msk [vmem:[#allocation2 + $0x3c8] sm:$0x1] %vm988, 0.0
    %1110 = vst.msk [vmem:[#allocation2 + $0x3d0] sm:$0xff] %vm105, 0.0
    %1111 = vst.msk [vmem:[#allocation2 + $0x3d8] sm:$0x1] %vm988, 0.0
    %1112 = vst.msk [vmem:[#allocation2 + $0x3e0] sm:$0xff] %vm105, 0.0
    %1113 = vst.msk [vmem:[#allocation2 + $0x3e8] sm:$0x1] %vm988, 0.0
    %1114 = vst.msk [vmem:[#allocation2 + $0x3f0] sm:$0xff] %vm105, 0.0
    %1115 = vst.msk [vmem:[#allocation2 + $0x3f8] sm:$0x1] %vm988, 0.0
    %1116 = vst.msk [vmem:[#allocation2 + $0x400] sm:$0xff] %vm105, 0.0
    %1117 = vst.msk [vmem:[#allocation2 + $0x408] sm:$0x1] %vm988, 0.0
    %1118 = vst.msk [vmem:[#allocation2 + $0x410] sm:$0xff] %vm105, 0.0
    %1119 = vst.msk [vmem:[#allocation2 + $0x418] sm:$0x1] %vm988, 0.0
    %1120 = vst.msk [vmem:[#allocation2 + $0x420] sm:$0xff] %vm105, 0.0
    %1121 = vst.msk [vmem:[#allocation2 + $0x428] sm:$0x1] %vm988, 0.0
    %1122 = vst.msk [vmem:[#allocation2 + $0x430] sm:$0xff] %vm105, 0.0
    %1123 = vst.msk [vmem:[#allocation2 + $0x438] sm:$0x1] %vm988, 0.0
    %1124 = vst.msk [vmem:[#allocation2 + $0x440] sm:$0xff] %vm105, 0.0
    %1125 = vst.msk [vmem:[#allocation2 + $0x448] sm:$0x1] %vm988, 0.0
    %1126 = vst.msk [vmem:[#allocation2 + $0x450] sm:$0xff] %vm105, 0.0
    %1127 = vst.msk [vmem:[#allocation2 + $0x458] sm:$0x1] %vm988, 0.0
    %1128 = vst.msk [vmem:[#allocation2 + $0x460] sm:$0xff] %vm105, 0.0
    %1129 = vst.msk [vmem:[#allocation2 + $0x468] sm:$0x1] %vm988, 0.0
    %1130 = vst.msk [vmem:[#allocation2 + $0x470] sm:$0xff] %vm105, 0.0
    %1131 = vst.msk [vmem:[#allocation2 + $0x478] sm:$0x1] %vm988, 0.0
    %s1132 = scalar_lea.vmem [#allocation2], 32
    %1133 = vst.msk [vmem:[%s1132 + $0x1] sm:$0xff] %vm105, %v923
    %1134 = vst.msk [vmem:[%s1132 + $0x11] sm:$0xff] %vm105, %v924
    %1135 = vst.msk [vmem:[%s1132 + $0x21] sm:$0xff] %vm105, %v925
    %1136 = vst.msk [vmem:[%s1132 + $0x31] sm:$0xff] %vm105, %v926
    %1137 = vst.msk [vmem:[%s1132 + $0x41] sm:$0xff] %vm105, %v927
    %1138 = vst.msk [vmem:[%s1132 + $0x51] sm:$0xff] %vm105, %v928
    %1139 = vst.msk [vmem:[%s1132 + $0x61] sm:$0xff] %vm105, %v929
    %1140 = vst.msk [vmem:[%s1132 + $0x71] sm:$0xff] %vm105, %v930
    %1141 = vst.msk [vmem:[%s1132 + $0x81] sm:$0xff] %vm105, %v931
    %1142 = vst.msk [vmem:[%s1132 + $0x91] sm:$0xff] %vm105, %v932
    %1143 = vst.msk [vmem:[%s1132 + $0xa1] sm:$0xff] %vm105, %v933
    %1144 = vst.msk [vmem:[%s1132 + $0xb1] sm:$0xff] %vm105, %v934
    %1145 = vst.msk [vmem:[%s1132 + $0xc1] sm:$0xff] %vm105, %v935
    %1146 = vst.msk [vmem:[%s1132 + $0xd1] sm:$0xff] %vm105, %v936
    %1147 = vst.msk [vmem:[%s1132 + $0xe1] sm:$0xff] %vm105, %v937
    %1148 = vst.msk [vmem:[%s1132 + $0xf1] sm:$0xff] %vm105, %v938
    %1149 = vst.msk [vmem:[%s1132 + $0x121] sm:$0xff] %vm105, %v939
    %1150 = vst.msk [vmem:[%s1132 + $0x131] sm:$0xff] %vm105, %v940
    %1151 = vst.msk [vmem:[%s1132 + $0x141] sm:$0xff] %vm105, %v941
    %1152 = vst.msk [vmem:[%s1132 + $0x151] sm:$0xff] %vm105, %v942
    %1153 = vst.msk [vmem:[%s1132 + $0x161] sm:$0xff] %vm105, %v943
    %1154 = vst.msk [vmem:[%s1132 + $0x171] sm:$0xff] %vm105, %v944
    %1155 = vst.msk [vmem:[%s1132 + $0x181] sm:$0xff] %vm105, %v945
    %1156 = vst.msk [vmem:[%s1132 + $0x191] sm:$0xff] %vm105, %v946
    %1157 = vst.msk [vmem:[%s1132 + $0x1a1] sm:$0xff] %vm105, %v947
    %1158 = vst.msk [vmem:[%s1132 + $0x1b1] sm:$0xff] %vm105, %v948
    %1159 = vst.msk [vmem:[%s1132 + $0x1c1] sm:$0xff] %vm105, %v949
    %1160 = vst.msk [vmem:[%s1132 + $0x1d1] sm:$0xff] %vm105, %v950
    %1161 = vst.msk [vmem:[%s1132 + $0x1e1] sm:$0xff] %vm105, %v951
    %1162 = vst.msk [vmem:[%s1132 + $0x1f1] sm:$0xff] %vm105, %v952
    %1163 = vst.msk [vmem:[%s1132 + $0x201] sm:$0xff] %vm105, %v953
    %1164 = vst.msk [vmem:[%s1132 + $0x211] sm:$0xff] %vm105, %v954
    %1165 = vst.msk [vmem:[%s1132 + $0x241] sm:$0xff] %vm105, %v955
    %1166 = vst.msk [vmem:[%s1132 + $0x251] sm:$0xff] %vm105, %v956
    %1167 = vst.msk [vmem:[%s1132 + $0x261] sm:$0xff] %vm105, %v957
    %1168 = vst.msk [vmem:[%s1132 + $0x271] sm:$0xff] %vm105, %v958
    %1169 = vst.msk [vmem:[%s1132 + $0x281] sm:$0xff] %vm105, %v959
    %1170 = vst.msk [vmem:[%s1132 + $0x291] sm:$0xff] %vm105, %v960
    %1171 = vst.msk [vmem:[%s1132 + $0x2a1] sm:$0xff] %vm105, %v961
    %1172 = vst.msk [vmem:[%s1132 + $0x2b1] sm:$0xff] %vm105, %v962
    %1173 = vst.msk [vmem:[%s1132 + $0x2c1] sm:$0xff] %vm105, %v963
    %1174 = vst.msk [vmem:[%s1132 + $0x2d1] sm:$0xff] %vm105, %v964
    %1175 = vst.msk [vmem:[%s1132 + $0x2e1] sm:$0xff] %vm105, %v965
    %1176 = vst.msk [vmem:[%s1132 + $0x2f1] sm:$0xff] %vm105, %v966
    %1177 = vst.msk [vmem:[%s1132 + $0x301] sm:$0xff] %vm105, %v967
    %1178 = vst.msk [vmem:[%s1132 + $0x311] sm:$0xff] %vm105, %v968
    %1179 = vst.msk [vmem:[%s1132 + $0x321] sm:$0xff] %vm105, %v969
    %1180 = vst.msk [vmem:[%s1132 + $0x331] sm:$0xff] %vm105, %v970
    %1181 = vst.msk [vmem:[%s1132 + $0x361] sm:$0xff] %vm105, %v971
    %1182 = vst.msk [vmem:[%s1132 + $0x371] sm:$0xff] %vm105, %v972
    %1183 = vst.msk [vmem:[%s1132 + $0x381] sm:$0xff] %vm105, %v973
    %1184 = vst.msk [vmem:[%s1132 + $0x391] sm:$0xff] %vm105, %v974
    %1185 = vst.msk [vmem:[%s1132 + $0x3a1] sm:$0xff] %vm105, %v975
    %1186 = vst.msk [vmem:[%s1132 + $0x3b1] sm:$0xff] %vm105, %v976
    %1187 = vst.msk [vmem:[%s1132 + $0x3c1] sm:$0xff] %vm105, %v977
    %1188 = vst.msk [vmem:[%s1132 + $0x3d1] sm:$0xff] %vm105, %v978
    %1189 = vst.msk [vmem:[%s1132 + $0x3e1] sm:$0xff] %vm105, %v979
    %1190 = vst.msk [vmem:[%s1132 + $0x3f1] sm:$0xff] %vm105, %v980
    %1191 = vst.msk [vmem:[%s1132 + $0x401] sm:$0xff] %vm105, %v981
    %1192 = vst.msk [vmem:[%s1132 + $0x411] sm:$0xff] %vm105, %v982
    %1193 = vst.msk [vmem:[%s1132 + $0x421] sm:$0xff] %vm105, %v983
    %1194 = vst.msk [vmem:[%s1132 + $0x431] sm:$0xff] %vm105, %v984
    %1195 = vst.msk [vmem:[%s1132 + $0x441] sm:$0xff] %vm105, %v985
    %1196 = vst.msk [vmem:[%s1132 + $0x451] sm:$0xff] %vm105, %v986
    %s1197 = scalar_lea.vmem [#allocation2], 304
    %v1198 = vld [vmem:[%s1197] sm:$0xff]
    %v1199 = vld [vmem:[%s1197 + $0x20] sm:$0xff]
    %v1200 = vld [vmem:[%s1197 + $0x40] sm:$0xff]
    %v1201 = vld [vmem:[%s1197 + $0x60] sm:$0xff]
    %v1202 = vld [vmem:[%s1197 + $0x80] sm:$0xff]
    %v1203 = vld [vmem:[%s1197 + $0xa0] sm:$0xff]
    %v1204 = vld [vmem:[%s1197 + $0xc0] sm:$0xff]
    %v1205 = vld [vmem:[%s1197 + $0xe0] sm:$0xff]
    %v1206 = vld [vmem:[%s1197 + $0x240] sm:$0xff]
    %v1207 = vld [vmem:[%s1197 + $0x260] sm:$0xff]
    %v1208 = vld [vmem:[%s1197 + $0x280] sm:$0xff]
    %v1209 = vld [vmem:[%s1197 + $0x2a0] sm:$0xff]
    %v1210 = vld [vmem:[%s1197 + $0x2c0] sm:$0xff]
    %v1211 = vld [vmem:[%s1197 + $0x2e0] sm:$0xff]
    %v1212 = vld [vmem:[%s1197 + $0x300] sm:$0xff]
    %v1213 = vld [vmem:[%s1197 + $0x320] sm:$0xff]
    %s1214 = scalar_lea.vmem [#allocation2], 288
    %v1215 = vld [vmem:[%s1214 + $0x1] sm:$0xff]
    %v1216 = vld [vmem:[%s1214 + $0x21] sm:$0xff]
    %v1217 = vld [vmem:[%s1214 + $0x41] sm:$0xff]
    %v1218 = vld [vmem:[%s1214 + $0x61] sm:$0xff]
    %v1219 = vld [vmem:[%s1214 + $0x81] sm:$0xff]
    %v1220 = vld [vmem:[%s1214 + $0xa1] sm:$0xff]
    %v1221 = vld [vmem:[%s1214 + $0xc1] sm:$0xff]
    %v1222 = vld [vmem:[%s1214 + $0xe1] sm:$0xff]
    %v1223 = vld [vmem:[%s1214 + $0x241] sm:$0xff]
    %v1224 = vld [vmem:[%s1214 + $0x261] sm:$0xff]
    %v1225 = vld [vmem:[%s1214 + $0x281] sm:$0xff]
    %v1226 = vld [vmem:[%s1214 + $0x2a1] sm:$0xff]
    %v1227 = vld [vmem:[%s1214 + $0x2c1] sm:$0xff]
    %v1228 = vld [vmem:[%s1214 + $0x2e1] sm:$0xff]
    %v1229 = vld [vmem:[%s1214 + $0x301] sm:$0xff]
    %v1230 = vld [vmem:[%s1214 + $0x321] sm:$0xff]
    %v1231 = vld [vmem:[%s1197 + $0x1] sm:$0xff]
    %v1232 = vld [vmem:[%s1197 + $0x21] sm:$0xff]
    %v1233 = vld [vmem:[%s1197 + $0x41] sm:$0xff]
    %v1234 = vld [vmem:[%s1197 + $0x61] sm:$0xff]
    %v1235 = vld [vmem:[%s1197 + $0x81] sm:$0xff]
    %v1236 = vld [vmem:[%s1197 + $0xa1] sm:$0xff]
    %v1237 = vld [vmem:[%s1197 + $0xc1] sm:$0xff]
    %v1238 = vld [vmem:[%s1197 + $0xe1] sm:$0xff]
    %v1239 = vld [vmem:[%s1197 + $0x241] sm:$0xff]
    %v1240 = vld [vmem:[%s1197 + $0x261] sm:$0xff]
    %v1241 = vld [vmem:[%s1197 + $0x281] sm:$0xff]
    %v1242 = vld [vmem:[%s1197 + $0x2a1] sm:$0xff]
    %v1243 = vld [vmem:[%s1197 + $0x2c1] sm:$0xff]
    %v1244 = vld [vmem:[%s1197 + $0x2e1] sm:$0xff]
    %v1245 = vld [vmem:[%s1197 + $0x301] sm:$0xff]
    %v1246 = vld [vmem:[%s1197 + $0x321] sm:$0xff]
    %s1247 = scalar_lea.vmem [#allocation2], 48
    %v1248 = vld [vmem:[%s1247] sm:$0xff]
    %v1249 = vld [vmem:[%s1247 + $0x20] sm:$0xff]
    %v1250 = vld [vmem:[%s1247 + $0x40] sm:$0xff]
    %v1251 = vld [vmem:[%s1247 + $0x60] sm:$0xff]
    %v1252 = vld [vmem:[%s1247 + $0x80] sm:$0xff]
    %v1253 = vld [vmem:[%s1247 + $0xa0] sm:$0xff]
    %v1254 = vld [vmem:[%s1247 + $0xc0] sm:$0xff]
    %v1255 = vld [vmem:[%s1247 + $0xe0] sm:$0xff]
    %v1256 = vld [vmem:[%s1247 + $0x240] sm:$0xff]
    %v1257 = vld [vmem:[%s1247 + $0x260] sm:$0xff]
    %v1258 = vld [vmem:[%s1247 + $0x280] sm:$0xff]
    %v1259 = vld [vmem:[%s1247 + $0x2a0] sm:$0xff]
    %v1260 = vld [vmem:[%s1247 + $0x2c0] sm:$0xff]
    %v1261 = vld [vmem:[%s1247 + $0x2e0] sm:$0xff]
    %v1262 = vld [vmem:[%s1247 + $0x300] sm:$0xff]
    %v1263 = vld [vmem:[%s1247 + $0x320] sm:$0xff]
    %v1264 = vld [vmem:[%s1132 + $0x1] sm:$0xff]
    %v1265 = vld [vmem:[%s1132 + $0x21] sm:$0xff]
    %v1266 = vld [vmem:[%s1132 + $0x41] sm:$0xff]
    %v1267 = vld [vmem:[%s1132 + $0x61] sm:$0xff]
    %v1268 = vld [vmem:[%s1132 + $0x81] sm:$0xff]
    %v1269 = vld [vmem:[%s1132 + $0xa1] sm:$0xff]
    %v1270 = vld [vmem:[%s1132 + $0xc1] sm:$0xff]
    %v1271 = vld [vmem:[%s1132 + $0xe1] sm:$0xff]
    %v1272 = vld [vmem:[%s1132 + $0x241] sm:$0xff]
    %v1273 = vld [vmem:[%s1132 + $0x261] sm:$0xff]
    %v1274 = vld [vmem:[%s1132 + $0x281] sm:$0xff]
    %v1275 = vld [vmem:[%s1132 + $0x2a1] sm:$0xff]
    %v1276 = vld [vmem:[%s1132 + $0x2c1] sm:$0xff]
    %v1277 = vld [vmem:[%s1132 + $0x2e1] sm:$0xff]
    %v1278 = vld [vmem:[%s1132 + $0x301] sm:$0xff]
    %v1279 = vld [vmem:[%s1132 + $0x321] sm:$0xff]
    %v1280 = vld [vmem:[%s1247 + $0x1] sm:$0xff]
    %v1281 = vld [vmem:[%s1247 + $0x21] sm:$0xff]
    %v1282 = vld [vmem:[%s1247 + $0x41] sm:$0xff]
    %v1283 = vld [vmem:[%s1247 + $0x61] sm:$0xff]
    %v1284 = vld [vmem:[%s1247 + $0x81] sm:$0xff]
    %v1285 = vld [vmem:[%s1247 + $0xa1] sm:$0xff]
    %v1286 = vld [vmem:[%s1247 + $0xc1] sm:$0xff]
    %v1287 = vld [vmem:[%s1247 + $0xe1] sm:$0xff]
    %v1288 = vld [vmem:[%s1247 + $0x241] sm:$0xff]
    %v1289 = vld [vmem:[%s1247 + $0x261] sm:$0xff]
    %v1290 = vld [vmem:[%s1247 + $0x281] sm:$0xff]
    %v1291 = vld [vmem:[%s1247 + $0x2a1] sm:$0xff]
    %v1292 = vld [vmem:[%s1247 + $0x2c1] sm:$0xff]
    %v1293 = vld [vmem:[%s1247 + $0x2e1] sm:$0xff]
    %v1294 = vld [vmem:[%s1247 + $0x301] sm:$0xff]
    %v1295 = vld [vmem:[%s1247 + $0x321] sm:$0xff]
    %s1296 = scalar_lea.vmem [#allocation2], 336
    %v1297 = vld [vmem:[%s1296] sm:$0xff]
    %v1298 = vld [vmem:[%s1296 + $0x20] sm:$0xff]
    %v1299 = vld [vmem:[%s1296 + $0x40] sm:$0xff]
    %v1300 = vld [vmem:[%s1296 + $0x60] sm:$0xff]
    %v1301 = vld [vmem:[%s1296 + $0x80] sm:$0xff]
    %v1302 = vld [vmem:[%s1296 + $0xa0] sm:$0xff]
    %v1303 = vld [vmem:[%s1296 + $0xc0] sm:$0xff]
    %v1304 = vld [vmem:[%s1296 + $0xe0] sm:$0xff]
    %v1305 = vld [vmem:[%s1296 + $0x240] sm:$0xff]
    %v1306 = vld [vmem:[%s1296 + $0x260] sm:$0xff]
    %v1307 = vld [vmem:[%s1296 + $0x280] sm:$0xff]
    %v1308 = vld [vmem:[%s1296 + $0x2a0] sm:$0xff]
    %v1309 = vld [vmem:[%s1296 + $0x2c0] sm:$0xff]
    %v1310 = vld [vmem:[%s1296 + $0x2e0] sm:$0xff]
    %v1311 = vld [vmem:[%s1296 + $0x300] sm:$0xff]
    %v1312 = vld [vmem:[%s1296 + $0x320] sm:$0xff]
    %s1313 = scalar_lea.vmem [#allocation2], 320
    %v1314 = vld [vmem:[%s1313 + $0x1] sm:$0xff]
    %v1315 = vld [vmem:[%s1313 + $0x21] sm:$0xff]
    %v1316 = vld [vmem:[%s1313 + $0x41] sm:$0xff]
    %v1317 = vld [vmem:[%s1313 + $0x61] sm:$0xff]
    %v1318 = vld [vmem:[%s1313 + $0x81] sm:$0xff]
    %v1319 = vld [vmem:[%s1313 + $0xa1] sm:$0xff]
    %v1320 = vld [vmem:[%s1313 + $0xc1] sm:$0xff]
    %v1321 = vld [vmem:[%s1313 + $0xe1] sm:$0xff]
    %v1322 = vld [vmem:[%s1313 + $0x241] sm:$0xff]
    %v1323 = vld [vmem:[%s1313 + $0x261] sm:$0xff]
    %v1324 = vld [vmem:[%s1313 + $0x281] sm:$0xff]
    %v1325 = vld [vmem:[%s1313 + $0x2a1] sm:$0xff]
    %v1326 = vld [vmem:[%s1313 + $0x2c1] sm:$0xff]
    %v1327 = vld [vmem:[%s1313 + $0x2e1] sm:$0xff]
    %v1328 = vld [vmem:[%s1313 + $0x301] sm:$0xff]
    %v1329 = vld [vmem:[%s1313 + $0x321] sm:$0xff]
    %v1330 = vld [vmem:[%s1296 + $0x1] sm:$0xff]
    %v1331 = vld [vmem:[%s1296 + $0x21] sm:$0xff]
    %v1332 = vld [vmem:[%s1296 + $0x41] sm:$0xff]
    %v1333 = vld [vmem:[%s1296 + $0x61] sm:$0xff]
    %v1334 = vld [vmem:[%s1296 + $0x81] sm:$0xff]
    %v1335 = vld [vmem:[%s1296 + $0xa1] sm:$0xff]
    %v1336 = vld [vmem:[%s1296 + $0xc1] sm:$0xff]
    %v1337 = vld [vmem:[%s1296 + $0xe1] sm:$0xff]
    %v1338 = vld [vmem:[%s1296 + $0x241] sm:$0xff]
    %v1339 = vld [vmem:[%s1296 + $0x261] sm:$0xff]
    %v1340 = vld [vmem:[%s1296 + $0x281] sm:$0xff]
    %v1341 = vld [vmem:[%s1296 + $0x2a1] sm:$0xff]
    %v1342 = vld [vmem:[%s1296 + $0x2c1] sm:$0xff]
    %v1343 = vld [vmem:[%s1296 + $0x2e1] sm:$0xff]
    %v1344 = vld [vmem:[%s1296 + $0x301] sm:$0xff]
    %v1345 = vld [vmem:[%s1296 + $0x321] sm:$0xff]
    %1362 = vrot.lane.b32.xlu0 %v1215, 64
    %v1363 = vpop.permute.xlu0 %1362
    %1364 = vrot.lane.b32.xlu0 %v1216, 64
    %v1365 = vpop.permute.xlu0 %1364
    %1366 = vrot.lane.b32.xlu0 %v1217, 64
    %v1367 = vpop.permute.xlu0 %1366
    %1368 = vrot.lane.b32.xlu0 %v1218, 64
    %v1369 = vpop.permute.xlu0 %1368
    %1370 = vrot.lane.b32.xlu0 %v1219, 64
    %v1371 = vpop.permute.xlu0 %1370
    %1372 = vrot.lane.b32.xlu0 %v1220, 64
    %v1373 = vpop.permute.xlu0 %1372
    %1374 = vrot.lane.b32.xlu0 %v1221, 64
    %v1375 = vpop.permute.xlu0 %1374
    %1376 = vrot.lane.b32.xlu0 %v1222, 64
    %v1377 = vpop.permute.xlu0 %1376
    %1378 = vrot.lane.b32.xlu0 %v1223, 64
    %v1379 = vpop.permute.xlu0 %1378
    %1380 = vrot.lane.b32.xlu0 %v1224, 64
    %v1381 = vpop.permute.xlu0 %1380
    %1382 = vrot.lane.b32.xlu0 %v1225, 64
    %v1383 = vpop.permute.xlu0 %1382
    %1384 = vrot.lane.b32.xlu0 %v1226, 64
    %v1385 = vpop.permute.xlu0 %1384
    %1386 = vrot.lane.b32.xlu0 %v1227, 64
    %v1387 = vpop.permute.xlu0 %1386
    %1388 = vrot.lane.b32.xlu0 %v1228, 64
    %v1389 = vpop.permute.xlu0 %1388
    %1390 = vrot.lane.b32.xlu0 %v1229, 64
    %v1391 = vpop.permute.xlu0 %1390
    %1392 = vrot.lane.b32.xlu0 %v1230, 64
    %v1393 = vpop.permute.xlu0 %1392
    %1426 = vrot.lane.b32.xlu0 %v1248, 64
    %v1427 = vpop.permute.xlu0 %1426
    %1428 = vrot.lane.b32.xlu0 %v1249, 64
    %v1429 = vpop.permute.xlu0 %1428
    %1430 = vrot.lane.b32.xlu0 %v1250, 64
    %v1431 = vpop.permute.xlu0 %1430
    %1432 = vrot.lane.b32.xlu0 %v1251, 64
    %v1433 = vpop.permute.xlu0 %1432
    %1434 = vrot.lane.b32.xlu0 %v1252, 64
    %v1435 = vpop.permute.xlu0 %1434
    %1436 = vrot.lane.b32.xlu0 %v1253, 64
    %v1437 = vpop.permute.xlu0 %1436
    %1438 = vrot.lane.b32.xlu0 %v1254, 64
    %v1439 = vpop.permute.xlu0 %1438
    %1440 = vrot.lane.b32.xlu0 %v1255, 64
    %v1441 = vpop.permute.xlu0 %1440
    %1442 = vrot.lane.b32.xlu0 %v1256, 64
    %v1443 = vpop.permute.xlu0 %1442
    %1444 = vrot.lane.b32.xlu0 %v1257, 64
    %v1445 = vpop.permute.xlu0 %1444
    %1446 = vrot.lane.b32.xlu0 %v1258, 64
    %v1447 = vpop.permute.xlu0 %1446
    %1448 = vrot.lane.b32.xlu0 %v1259, 64
    %v1449 = vpop.permute.xlu0 %1448
    %1450 = vrot.lane.b32.xlu0 %v1260, 64
    %v1451 = vpop.permute.xlu0 %1450
    %1452 = vrot.lane.b32.xlu0 %v1261, 64
    %v1453 = vpop.permute.xlu0 %1452
    %1454 = vrot.lane.b32.xlu0 %v1262, 64
    %v1455 = vpop.permute.xlu0 %1454
    %1456 = vrot.lane.b32.xlu0 %v1263, 64
    %v1457 = vpop.permute.xlu0 %1456
    %1490 = vrot.lane.b32.xlu0 %v1280, 64
    %v1491 = vpop.permute.xlu0 %1490
    %1492 = vrot.lane.b32.xlu0 %v1281, 64
    %v1493 = vpop.permute.xlu0 %1492
    %1494 = vrot.lane.b32.xlu0 %v1282, 64
    %v1495 = vpop.permute.xlu0 %1494
    %1496 = vrot.lane.b32.xlu0 %v1283, 64
    %v1497 = vpop.permute.xlu0 %1496
    %1498 = vrot.lane.b32.xlu0 %v1284, 64
    %v1499 = vpop.permute.xlu0 %1498
    %1500 = vrot.lane.b32.xlu0 %v1285, 64
    %v1501 = vpop.permute.xlu0 %1500
    %1502 = vrot.lane.b32.xlu0 %v1286, 64
    %v1503 = vpop.permute.xlu0 %1502
    %1504 = vrot.lane.b32.xlu0 %v1287, 64
    %v1505 = vpop.permute.xlu0 %1504
    %1506 = vrot.lane.b32.xlu0 %v1288, 64
    %v1507 = vpop.permute.xlu0 %1506
    %1508 = vrot.lane.b32.xlu0 %v1289, 64
    %v1509 = vpop.permute.xlu0 %1508
    %1510 = vrot.lane.b32.xlu0 %v1290, 64
    %v1511 = vpop.permute.xlu0 %1510
    %1512 = vrot.lane.b32.xlu0 %v1291, 64
    %v1513 = vpop.permute.xlu0 %1512
    %1514 = vrot.lane.b32.xlu0 %v1292, 64
    %v1515 = vpop.permute.xlu0 %1514
    %1516 = vrot.lane.b32.xlu0 %v1293, 64
    %v1517 = vpop.permute.xlu0 %1516
    %1518 = vrot.lane.b32.xlu0 %v1294, 64
    %v1519 = vpop.permute.xlu0 %1518
    %1520 = vrot.lane.b32.xlu0 %v1295, 64
    %v1521 = vpop.permute.xlu0 %1520
    %1554 = vrot.lane.b32.xlu0 %v1314, 64
    %v1555 = vpop.permute.xlu0 %1554
    %1556 = vrot.lane.b32.xlu0 %v1315, 64
    %v1557 = vpop.permute.xlu0 %1556
    %1558 = vrot.lane.b32.xlu0 %v1316, 64
    %v1559 = vpop.permute.xlu0 %1558
    %1560 = vrot.lane.b32.xlu0 %v1317, 64
    %v1561 = vpop.permute.xlu0 %1560
    %1562 = vrot.lane.b32.xlu0 %v1318, 64
    %v1563 = vpop.permute.xlu0 %1562
    %1564 = vrot.lane.b32.xlu0 %v1319, 64
    %v1565 = vpop.permute.xlu0 %1564
    %1566 = vrot.lane.b32.xlu0 %v1320, 64
    %v1567 = vpop.permute.xlu0 %1566
    %1568 = vrot.lane.b32.xlu0 %v1321, 64
    %v1569 = vpop.permute.xlu0 %1568
    %1570 = vrot.lane.b32.xlu0 %v1322, 64
    %v1571 = vpop.permute.xlu0 %1570
    %1572 = vrot.lane.b32.xlu0 %v1323, 64
    %v1573 = vpop.permute.xlu0 %1572
    %1574 = vrot.lane.b32.xlu0 %v1324, 64
    %v1575 = vpop.permute.xlu0 %1574
    %1576 = vrot.lane.b32.xlu0 %v1325, 64
    %v1577 = vpop.permute.xlu0 %1576
    %1578 = vrot.lane.b32.xlu0 %v1326, 64
    %v1579 = vpop.permute.xlu0 %1578
    %1580 = vrot.lane.b32.xlu0 %v1327, 64
    %v1581 = vpop.permute.xlu0 %1580
    %1582 = vrot.lane.b32.xlu0 %v1328, 64
    %v1583 = vpop.permute.xlu0 %1582
    %1584 = vrot.lane.b32.xlu0 %v1329, 64
    %v1585 = vpop.permute.xlu0 %1584
    %v1602 = vsel %vm105, %v1198, %v1363
    %v1603 = vsel %vm105, %v1199, %v1365
    %v1604 = vsel %vm105, %v1200, %v1367
    %v1605 = vsel %vm105, %v1201, %v1369
    %v1606 = vsel %vm105, %v1202, %v1371
    %v1607 = vsel %vm105, %v1203, %v1373
    %v1608 = vsel %vm105, %v1204, %v1375
    %v1609 = vsel %vm105, %v1205, %v1377
    %v1610 = vsel %vm105, %v1206, %v1379
    %v1611 = vsel %vm105, %v1207, %v1381
    %v1612 = vsel %vm105, %v1208, %v1383
    %v1613 = vsel %vm105, %v1209, %v1385
    %v1614 = vsel %vm105, %v1210, %v1387
    %v1615 = vsel %vm105, %v1211, %v1389
    %v1616 = vsel %vm105, %v1212, %v1391
    %v1617 = vsel %vm105, %v1213, %v1393
    %v1618 = vsel %vm105, %v1231, %v1427
    %v1619 = vsel %vm105, %v1232, %v1429
    %v1620 = vsel %vm105, %v1233, %v1431
    %v1621 = vsel %vm105, %v1234, %v1433
    %v1622 = vsel %vm105, %v1235, %v1435
    %v1623 = vsel %vm105, %v1236, %v1437
    %v1624 = vsel %vm105, %v1237, %v1439
    %v1625 = vsel %vm105, %v1238, %v1441
    %v1626 = vsel %vm105, %v1239, %v1443
    %v1627 = vsel %vm105, %v1240, %v1445
    %v1628 = vsel %vm105, %v1241, %v1447
    %v1629 = vsel %vm105, %v1242, %v1449
    %v1630 = vsel %vm105, %v1243, %v1451
    %v1631 = vsel %vm105, %v1244, %v1453
    %v1632 = vsel %vm105, %v1245, %v1455
    %v1633 = vsel %vm105, %v1246, %v1457
    %v1634 = vsel %vm105, %v1264, %v1491
    %v1635 = vsel %vm105, %v1265, %v1493
    %v1636 = vsel %vm105, %v1266, %v1495
    %v1637 = vsel %vm105, %v1267, %v1497
    %v1638 = vsel %vm105, %v1268, %v1499
    %v1639 = vsel %vm105, %v1269, %v1501
    %v1640 = vsel %vm105, %v1270, %v1503
    %v1641 = vsel %vm105, %v1271, %v1505
    %v1642 = vsel %vm105, %v1272, %v1507
    %v1643 = vsel %vm105, %v1273, %v1509
    %v1644 = vsel %vm105, %v1274, %v1511
    %v1645 = vsel %vm105, %v1275, %v1513
    %v1646 = vsel %vm105, %v1276, %v1515
    %v1647 = vsel %vm105, %v1277, %v1517
    %v1648 = vsel %vm105, %v1278, %v1519
    %v1649 = vsel %vm105, %v1279, %v1521
    %v1650 = vsel %vm105, %v1297, %v1555
    %v1651 = vsel %vm105, %v1298, %v1557
    %v1652 = vsel %vm105, %v1299, %v1559
    %v1653 = vsel %vm105, %v1300, %v1561
    %v1654 = vsel %vm105, %v1301, %v1563
    %v1655 = vsel %vm105, %v1302, %v1565
    %v1656 = vsel %vm105, %v1303, %v1567
    %v1657 = vsel %vm105, %v1304, %v1569
    %v1658 = vsel %vm105, %v1305, %v1571
    %v1659 = vsel %vm105, %v1306, %v1573
    %v1660 = vsel %vm105, %v1307, %v1575
    %v1661 = vsel %vm105, %v1308, %v1577
    %v1662 = vsel %vm105, %v1309, %v1579
    %v1663 = vsel %vm105, %v1310, %v1581
    %v1664 = vsel %vm105, %v1311, %v1583
    %v1665 = vsel %vm105, %v1312, %v1585
    %v1666 = vld [vmem:[%s2] sm:$0xff]
    %v1667 = vld [vmem:[%s2 + $0x8] sm:$0xff]
    %v1668 = vld [vmem:[%s2 + $0x10] sm:$0xff]
    %v1669 = vld [vmem:[%s2 + $0x18] sm:$0xff]
    %v1670 = vld [vmem:[%s2 + $0x20] sm:$0xff]
    %v1671 = vld [vmem:[%s2 + $0x28] sm:$0xff]
    %v1672 = vld [vmem:[%s2 + $0x30] sm:$0xff]
    %v1673 = vld [vmem:[%s2 + $0x38] sm:$0xff]
    %v1674 = vld [vmem:[%s2 + $0x40] sm:$0xff]
    %v1675 = vld [vmem:[%s2 + $0x48] sm:$0xff]
    %v1676 = vld [vmem:[%s2 + $0x50] sm:$0xff]
    %v1677 = vld [vmem:[%s2 + $0x58] sm:$0xff]
    %v1678 = vld [vmem:[%s2 + $0x60] sm:$0xff]
    %v1679 = vld [vmem:[%s2 + $0x68] sm:$0xff]
    %v1680 = vld [vmem:[%s2 + $0x70] sm:$0xff]
    %v1681 = vld [vmem:[%s2 + $0x78] sm:$0xff]
    %v1682 = vld [vmem:[%s2 + $0x80] sm:$0xff]
    %v1683 = vld [vmem:[%s2 + $0x88] sm:$0xff]
    %v1684 = vld [vmem:[%s2 + $0x90] sm:$0xff]
    %v1685 = vld [vmem:[%s2 + $0x98] sm:$0xff]
    %v1686 = vld [vmem:[%s2 + $0xa0] sm:$0xff]
    %v1687 = vld [vmem:[%s2 + $0xa8] sm:$0xff]
    %v1688 = vld [vmem:[%s2 + $0xb0] sm:$0xff]
    %v1689 = vld [vmem:[%s2 + $0xb8] sm:$0xff]
    %v1690 = vld [vmem:[%s2 + $0xc0] sm:$0xff]
    %v1691 = vld [vmem:[%s2 + $0xc8] sm:$0xff]
    %v1692 = vld [vmem:[%s2 + $0xd0] sm:$0xff]
    %v1693 = vld [vmem:[%s2 + $0xd8] sm:$0xff]
    %v1694 = vld [vmem:[%s2 + $0xe0] sm:$0xff]
    %v1695 = vld [vmem:[%s2 + $0xe8] sm:$0xff]
    %v1696 = vld [vmem:[%s2 + $0xf0] sm:$0xff]
    %v1697 = vld [vmem:[%s2 + $0xf8] sm:$0xff]
    %v1698 = vld [vmem:[%s2 + $0x100] sm:$0xff]
    %v1699 = vld [vmem:[%s2 + $0x108] sm:$0xff]
    %v1700 = vld [vmem:[%s2 + $0x110] sm:$0xff]
    %v1701 = vld [vmem:[%s2 + $0x118] sm:$0xff]
    %v1702 = vld [vmem:[%s2 + $0x120] sm:$0xff]
    %v1703 = vld [vmem:[%s2 + $0x128] sm:$0xff]
    %v1704 = vld [vmem:[%s2 + $0x130] sm:$0xff]
    %v1705 = vld [vmem:[%s2 + $0x138] sm:$0xff]
    %v1706 = vld [vmem:[%s2 + $0x140] sm:$0xff]
    %v1707 = vld [vmem:[%s2 + $0x148] sm:$0xff]
    %v1708 = vld [vmem:[%s2 + $0x150] sm:$0xff]
    %v1709 = vld [vmem:[%s2 + $0x158] sm:$0xff]
    %v1710 = vld [vmem:[%s2 + $0x160] sm:$0xff]
    %v1711 = vld [vmem:[%s2 + $0x168] sm:$0xff]
    %v1712 = vld [vmem:[%s2 + $0x170] sm:$0xff]
    %v1713 = vld [vmem:[%s2 + $0x178] sm:$0xff]
    %v1714 = vld [vmem:[%s2 + $0x180] sm:$0xff]
    %v1715 = vld [vmem:[%s2 + $0x188] sm:$0xff]
    %v1716 = vld [vmem:[%s2 + $0x190] sm:$0xff]
    %v1717 = vld [vmem:[%s2 + $0x198] sm:$0xff]
    %v1718 = vld [vmem:[%s2 + $0x1a0] sm:$0xff]
    %v1719 = vld [vmem:[%s2 + $0x1a8] sm:$0xff]
    %v1720 = vld [vmem:[%s2 + $0x1b0] sm:$0xff]
    %v1721 = vld [vmem:[%s2 + $0x1b8] sm:$0xff]
    %v1722 = vld [vmem:[%s2 + $0x1c0] sm:$0xff]
    %v1723 = vld [vmem:[%s2 + $0x1c8] sm:$0xff]
    %v1724 = vld [vmem:[%s2 + $0x1d0] sm:$0xff]
    %v1725 = vld [vmem:[%s2 + $0x1d8] sm:$0xff]
    %v1726 = vld [vmem:[%s2 + $0x1e0] sm:$0xff]
    %v1727 = vld [vmem:[%s2 + $0x1e8] sm:$0xff]
    %v1728 = vld [vmem:[%s2 + $0x1f0] sm:$0xff]
    %v1729 = vld [vmem:[%s2 + $0x1f8] sm:$0xff]
    %v1730 = vld [vmem:[%s2 + $0x200] sm:$0xff]
    %v1731 = vld [vmem:[%s2 + $0x208] sm:$0xff]
    %v1732 = vld [vmem:[%s2 + $0x210] sm:$0xff]
    %v1733 = vld [vmem:[%s2 + $0x218] sm:$0xff]
    %v1734 = vld [vmem:[%s2 + $0x220] sm:$0xff]
    %v1735 = vld [vmem:[%s2 + $0x228] sm:$0xff]
    %v1736 = vld [vmem:[%s2 + $0x230] sm:$0xff]
    %v1737 = vld [vmem:[%s2 + $0x238] sm:$0xff]
    %v1739 = vsel %vm105, %v1330, 0
    %v1742 = vsel %vm105, %v1331, 0
    %v1745 = vsel %vm105, %v1332, 0
    %v1748 = vsel %vm105, %v1333, 0
    %v1751 = vsel %vm105, %v1334, 0
    %v1754 = vsel %vm105, %v1335, 0
    %v1757 = vsel %vm105, %v1336, 0
    %v1760 = vsel %vm105, %v1337, 0
    %v1763 = vsel %vm105, %v1338, 0
    %v1766 = vsel %vm105, %v1339, 0
    %v1769 = vsel %vm105, %v1340, 0
    %v1772 = vsel %vm105, %v1341, 0
    %v1775 = vsel %vm105, %v1342, 0
    %v1778 = vsel %vm105, %v1343, 0
    %v1781 = vsel %vm105, %v1344, 0
    %v1784 = vsel %vm105, %v1345, 0
    %1786 = vmatpush.msra.mxu0 %v1681
    %1787 = vmatpush.msra.mxu0 %v1680
    %1788 = vmatpush.msra.mxu0 %v1679
    %1789 = vmatpush.msra.mxu0 %v1678
    %1790 = vmatpush.msra.mxu0 %v1677
    %1791 = vmatpush.msra.mxu0 %v1676
    %1792 = vmatpush.msra.mxu0 %v1675
    %1793 = vmatpush.msra.mxu0 %v1674
    %1794 = vmatpush.msra.mxu0 %v1673
    %1795 = vmatpush.msra.mxu0 %v1672
    %1796 = vmatpush.msra.mxu0 %v1671
    %1797 = vmatpush.msra.mxu0 %v1670
    %1798 = vmatpush.msra.mxu0 %v1669
    %1799 = vmatpush.msra.mxu0 %v1668
    %1800 = vmatpush.msra.mxu0 %v1667
    %1801 = vmatpush.msra.mxu0 %v1666
    %1802 = vmatmul.f32.gmra.mxu0 %v1602
    %v1803 = vpop.f32.mrf.mxu0
    %v1804 = vadd.f32 0.0, %v1803
    %1805 = vmatmul.f32.gmra.mxu0 %v1603
    %v1806 = vpop.f32.mrf.mxu0
    %v1807 = vadd.f32 0.0, %v1806
    %1808 = vmatmul.f32.gmra.mxu0 %v1604
    %v1809 = vpop.f32.mrf.mxu0
    %v1810 = vadd.f32 0.0, %v1809
    %1811 = vmatmul.f32.gmra.mxu0 %v1605
    %v1812 = vpop.f32.mrf.mxu0
    %v1813 = vadd.f32 0.0, %v1812
    %1814 = vmatmul.f32.gmra.mxu0 %v1606
    %v1815 = vpop.f32.mrf.mxu0
    %v1816 = vadd.f32 0.0, %v1815
    %1817 = vmatmul.f32.gmra.mxu0 %v1607
    %v1818 = vpop.f32.mrf.mxu0
    %v1819 = vadd.f32 0.0, %v1818
    %1820 = vmatmul.f32.gmra.mxu0 %v1608
    %v1821 = vpop.f32.mrf.mxu0
    %v1822 = vadd.f32 0.0, %v1821
    %1823 = vmatmul.f32.gmra.mxu0 %v1609
    %v1824 = vpop.f32.mrf.mxu0
    %v1825 = vadd.f32 0.0, %v1824
    %1826 = vmatmul.f32.gmra.mxu0 %v1610
    %v1827 = vpop.f32.mrf.mxu0
    %v1828 = vadd.f32 0.0, %v1827
    %1829 = vmatmul.f32.gmra.mxu0 %v1611
    %v1830 = vpop.f32.mrf.mxu0
    %v1831 = vadd.f32 0.0, %v1830
    %1832 = vmatmul.f32.gmra.mxu0 %v1612
    %v1833 = vpop.f32.mrf.mxu0
    %v1834 = vadd.f32 0.0, %v1833
    %1835 = vmatmul.f32.gmra.mxu0 %v1613
    %v1836 = vpop.f32.mrf.mxu0
    %v1837 = vadd.f32 0.0, %v1836
    %1838 = vmatmul.f32.gmra.mxu0 %v1614
    %v1839 = vpop.f32.mrf.mxu0
    %v1840 = vadd.f32 0.0, %v1839
    %1841 = vmatmul.f32.gmra.mxu0 %v1615
    %v1842 = vpop.f32.mrf.mxu0
    %v1843 = vadd.f32 0.0, %v1842
    %1844 = vmatmul.f32.gmra.mxu0 %v1616
    %v1845 = vpop.f32.mrf.mxu0
    %v1846 = vadd.f32 0.0, %v1845
    %1847 = vmatmul.f32.gmra.mxu0 %v1617
    %v1848 = vpop.f32.mrf.mxu0
    %v1849 = vadd.f32 0.0, %v1848
    %1850 = vdwg.mxu0
    %1851 = vmatpush.msra.mxu0 %v1697
    %1852 = vmatpush.msra.mxu0 %v1696
    %1853 = vmatpush.msra.mxu0 %v1695
    %1854 = vmatpush.msra.mxu0 %v1694
    %1855 = vmatpush.msra.mxu0 %v1693
    %1856 = vmatpush.msra.mxu0 %v1692
    %1857 = vmatpush.msra.mxu0 %v1691
    %1858 = vmatpush.msra.mxu0 %v1690
    %1859 = vmatpush.msra.mxu0 %v1689
    %1860 = vmatpush.msra.mxu0 %v1688
    %1861 = vmatpush.msra.mxu0 %v1687
    %1862 = vmatpush.msra.mxu0 %v1686
    %1863 = vmatpush.msra.mxu0 %v1685
    %1864 = vmatpush.msra.mxu0 %v1684
    %1865 = vmatpush.msra.mxu0 %v1683
    %1866 = vmatpush.msra.mxu0 %v1682
    %1867 = vmatmul.f32.gmra.mxu0 %v1618
    %v1868 = vpop.f32.mrf.mxu0
    %v1869 = vadd.f32 %v1804, %v1868
    %1870 = vmatmul.f32.gmra.mxu0 %v1619
    %v1871 = vpop.f32.mrf.mxu0
    %v1872 = vadd.f32 %v1807, %v1871
    %1873 = vmatmul.f32.gmra.mxu0 %v1620
    %v1874 = vpop.f32.mrf.mxu0
    %v1875 = vadd.f32 %v1810, %v1874
    %1876 = vmatmul.f32.gmra.mxu0 %v1621
    %v1877 = vpop.f32.mrf.mxu0
    %v1878 = vadd.f32 %v1813, %v1877
    %1879 = vmatmul.f32.gmra.mxu0 %v1622
    %v1880 = vpop.f32.mrf.mxu0
    %v1881 = vadd.f32 %v1816, %v1880
    %1882 = vmatmul.f32.gmra.mxu0 %v1623
    %v1883 = vpop.f32.mrf.mxu0
    %v1884 = vadd.f32 %v1819, %v1883
    %1885 = vmatmul.f32.gmra.mxu0 %v1624
    %v1886 = vpop.f32.mrf.mxu0
    %v1887 = vadd.f32 %v1822, %v1886
    %1888 = vmatmul.f32.gmra.mxu0 %v1625
    %v1889 = vpop.f32.mrf.mxu0
    %v1890 = vadd.f32 %v1825, %v1889
    %1891 = vmatmul.f32.gmra.mxu0 %v1626
    %v1892 = vpop.f32.mrf.mxu0
    %v1893 = vadd.f32 %v1828, %v1892
    %1894 = vmatmul.f32.gmra.mxu0 %v1627
    %v1895 = vpop.f32.mrf.mxu0
    %v1896 = vadd.f32 %v1831, %v1895
    %1897 = vmatmul.f32.gmra.mxu0 %v1628
    %v1898 = vpop.f32.mrf.mxu0
    %v1899 = vadd.f32 %v1834, %v1898
    %1900 = vmatmul.f32.gmra.mxu0 %v1629
    %v1901 = vpop.f32.mrf.mxu0
    %v1902 = vadd.f32 %v1837, %v1901
    %1903 = vmatmul.f32.gmra.mxu0 %v1630
    %v1904 = vpop.f32.mrf.mxu0
    %v1905 = vadd.f32 %v1840, %v1904
    %1906 = vmatmul.f32.gmra.mxu0 %v1631
    %v1907 = vpop.f32.mrf.mxu0
    %v1908 = vadd.f32 %v1843, %v1907
    %1909 = vmatmul.f32.gmra.mxu0 %v1632
    %v1910 = vpop.f32.mrf.mxu0
    %v1911 = vadd.f32 %v1846, %v1910
    %1912 = vmatmul.f32.gmra.mxu0 %v1633
    %v1913 = vpop.f32.mrf.mxu0
    %v1914 = vadd.f32 %v1849, %v1913
    %1915 = vdwg.mxu0
    %1916 = vmatpush.msra.mxu0 %v1713
    %1917 = vmatpush.msra.mxu0 %v1712
    %1918 = vmatpush.msra.mxu0 %v1711
    %1919 = vmatpush.msra.mxu0 %v1710
    %1920 = vmatpush.msra.mxu0 %v1709
    %1921 = vmatpush.msra.mxu0 %v1708
    %1922 = vmatpush.msra.mxu0 %v1707
    %1923 = vmatpush.msra.mxu0 %v1706
    %1924 = vmatpush.msra.mxu0 %v1705
    %1925 = vmatpush.msra.mxu0 %v1704
    %1926 = vmatpush.msra.mxu0 %v1703
    %1927 = vmatpush.msra.mxu0 %v1702
    %1928 = vmatpush.msra.mxu0 %v1701
    %1929 = vmatpush.msra.mxu0 %v1700
    %1930 = vmatpush.msra.mxu0 %v1699
    %1931 = vmatpush.msra.mxu0 %v1698
    %1932 = vmatmul.f32.gmra.mxu0 %v1634
    %v1933 = vpop.f32.mrf.mxu0
    %v1934 = vadd.f32 %v1869, %v1933
    %1935 = vmatmul.f32.gmra.mxu0 %v1635
    %v1936 = vpop.f32.mrf.mxu0
    %v1937 = vadd.f32 %v1872, %v1936
    %1938 = vmatmul.f32.gmra.mxu0 %v1636
    %v1939 = vpop.f32.mrf.mxu0
    %v1940 = vadd.f32 %v1875, %v1939
    %1941 = vmatmul.f32.gmra.mxu0 %v1637
    %v1942 = vpop.f32.mrf.mxu0
    %v1943 = vadd.f32 %v1878, %v1942
    %1944 = vmatmul.f32.gmra.mxu0 %v1638
    %v1945 = vpop.f32.mrf.mxu0
    %v1946 = vadd.f32 %v1881, %v1945
    %1947 = vmatmul.f32.gmra.mxu0 %v1639
    %v1948 = vpop.f32.mrf.mxu0
    %v1949 = vadd.f32 %v1884, %v1948
    %1950 = vmatmul.f32.gmra.mxu0 %v1640
    %v1951 = vpop.f32.mrf.mxu0
    %v1952 = vadd.f32 %v1887, %v1951
    %1953 = vmatmul.f32.gmra.mxu0 %v1641
    %v1954 = vpop.f32.mrf.mxu0
    %v1955 = vadd.f32 %v1890, %v1954
    %1956 = vmatmul.f32.gmra.mxu0 %v1642
    %v1957 = vpop.f32.mrf.mxu0
    %v1958 = vadd.f32 %v1893, %v1957
    %1959 = vmatmul.f32.gmra.mxu0 %v1643
    %v1960 = vpop.f32.mrf.mxu0
    %v1961 = vadd.f32 %v1896, %v1960
    %1962 = vmatmul.f32.gmra.mxu0 %v1644
    %v1963 = vpop.f32.mrf.mxu0
    %v1964 = vadd.f32 %v1899, %v1963
    %1965 = vmatmul.f32.gmra.mxu0 %v1645
    %v1966 = vpop.f32.mrf.mxu0
    %v1967 = vadd.f32 %v1902, %v1966
    %1968 = vmatmul.f32.gmra.mxu0 %v1646
    %v1969 = vpop.f32.mrf.mxu0
    %v1970 = vadd.f32 %v1905, %v1969
    %1971 = vmatmul.f32.gmra.mxu0 %v1647
    %v1972 = vpop.f32.mrf.mxu0
    %v1973 = vadd.f32 %v1908, %v1972
    %1974 = vmatmul.f32.gmra.mxu0 %v1648
    %v1975 = vpop.f32.mrf.mxu0
    %v1976 = vadd.f32 %v1911, %v1975
    %1977 = vmatmul.f32.gmra.mxu0 %v1649
    %v1978 = vpop.f32.mrf.mxu0
    %v1979 = vadd.f32 %v1914, %v1978
    %1980 = vdwg.mxu0
    %1981 = vmatpush.msra.mxu0 %v1729
    %1982 = vmatpush.msra.mxu0 %v1728
    %1983 = vmatpush.msra.mxu0 %v1727
    %1984 = vmatpush.msra.mxu0 %v1726
    %1985 = vmatpush.msra.mxu0 %v1725
    %1986 = vmatpush.msra.mxu0 %v1724
    %1987 = vmatpush.msra.mxu0 %v1723
    %1988 = vmatpush.msra.mxu0 %v1722
    %1989 = vmatpush.msra.mxu0 %v1721
    %1990 = vmatpush.msra.mxu0 %v1720
    %1991 = vmatpush.msra.mxu0 %v1719
    %1992 = vmatpush.msra.mxu0 %v1718
    %1993 = vmatpush.msra.mxu0 %v1717
    %1994 = vmatpush.msra.mxu0 %v1716
    %1995 = vmatpush.msra.mxu0 %v1715
    %1996 = vmatpush.msra.mxu0 %v1714
    %1997 = vmatmul.f32.gmra.mxu0 %v1650
    %v1998 = vpop.f32.mrf.mxu0
    %v1999 = vadd.f32 %v1934, %v1998
    %2000 = vmatmul.f32.gmra.mxu0 %v1651
    %v2001 = vpop.f32.mrf.mxu0
    %v2002 = vadd.f32 %v1937, %v2001
    %2003 = vmatmul.f32.gmra.mxu0 %v1652
    %v2004 = vpop.f32.mrf.mxu0
    %v2005 = vadd.f32 %v1940, %v2004
    %2006 = vmatmul.f32.gmra.mxu0 %v1653
    %v2007 = vpop.f32.mrf.mxu0
    %v2008 = vadd.f32 %v1943, %v2007
    %2009 = vmatmul.f32.gmra.mxu0 %v1654
    %v2010 = vpop.f32.mrf.mxu0
    %v2011 = vadd.f32 %v1946, %v2010
    %2012 = vmatmul.f32.gmra.mxu0 %v1655
    %v2013 = vpop.f32.mrf.mxu0
    %v2014 = vadd.f32 %v1949, %v2013
    %2015 = vmatmul.f32.gmra.mxu0 %v1656
    %v2016 = vpop.f32.mrf.mxu0
    %v2017 = vadd.f32 %v1952, %v2016
    %2018 = vmatmul.f32.gmra.mxu0 %v1657
    %v2019 = vpop.f32.mrf.mxu0
    %v2020 = vadd.f32 %v1955, %v2019
    %2021 = vmatmul.f32.gmra.mxu0 %v1658
    %v2022 = vpop.f32.mrf.mxu0
    %v2023 = vadd.f32 %v1958, %v2022
    %2024 = vmatmul.f32.gmra.mxu0 %v1659
    %v2025 = vpop.f32.mrf.mxu0
    %v2026 = vadd.f32 %v1961, %v2025
    %2027 = vmatmul.f32.gmra.mxu0 %v1660
    %v2028 = vpop.f32.mrf.mxu0
    %v2029 = vadd.f32 %v1964, %v2028
    %2030 = vmatmul.f32.gmra.mxu0 %v1661
    %v2031 = vpop.f32.mrf.mxu0
    %v2032 = vadd.f32 %v1967, %v2031
    %2033 = vmatmul.f32.gmra.mxu0 %v1662
    %v2034 = vpop.f32.mrf.mxu0
    %v2035 = vadd.f32 %v1970, %v2034
    %2036 = vmatmul.f32.gmra.mxu0 %v1663
    %v2037 = vpop.f32.mrf.mxu0
    %v2038 = vadd.f32 %v1973, %v2037
    %2039 = vmatmul.f32.gmra.mxu0 %v1664
    %v2040 = vpop.f32.mrf.mxu0
    %v2041 = vadd.f32 %v1976, %v2040
    %2042 = vmatmul.f32.gmra.mxu0 %v1665
    %v2043 = vpop.f32.mrf.mxu0
    %v2044 = vadd.f32 %v1979, %v2043
    %2045 = vdwg.mxu0
    %2046 = vmatpush.msra.mxu0 0.0
    %2047 = vmatpush.msra.mxu0 0.0
    %2048 = vmatpush.msra.mxu0 0.0
    %2049 = vmatpush.msra.mxu0 0.0
    %2050 = vmatpush.msra.mxu0 0.0
    %2051 = vmatpush.msra.mxu0 0.0
    %2052 = vmatpush.msra.mxu0 0.0
    %2053 = vmatpush.msra.mxu0 0.0
    %2054 = vmatpush.msra.mxu0 %v1737
    %2055 = vmatpush.msra.mxu0 %v1736
    %2056 = vmatpush.msra.mxu0 %v1735
    %2057 = vmatpush.msra.mxu0 %v1734
    %2058 = vmatpush.msra.mxu0 %v1733
    %2059 = vmatpush.msra.mxu0 %v1732
    %2060 = vmatpush.msra.mxu0 %v1731
    %2061 = vmatpush.msra.mxu0 %v1730
    %2062 = vmatmul.f32.gmra.mxu0 %v1739
    %v2063 = vpop.f32.mrf.mxu0
    %v2064 = vadd.f32 %v1999, %v2063
    %2065 = vmatmul.f32.gmra.mxu0 %v1742
    %v2066 = vpop.f32.mrf.mxu0
    %v2067 = vadd.f32 %v2002, %v2066
    %2068 = vmatmul.f32.gmra.mxu0 %v1745
    %v2069 = vpop.f32.mrf.mxu0
    %v2070 = vadd.f32 %v2005, %v2069
    %2071 = vmatmul.f32.gmra.mxu0 %v1748
    %v2072 = vpop.f32.mrf.mxu0
    %v2073 = vadd.f32 %v2008, %v2072
    %2074 = vmatmul.f32.gmra.mxu0 %v1751
    %v2075 = vpop.f32.mrf.mxu0
    %v2076 = vadd.f32 %v2011, %v2075
    %2077 = vmatmul.f32.gmra.mxu0 %v1754
    %v2078 = vpop.f32.mrf.mxu0
    %v2079 = vadd.f32 %v2014, %v2078
    %2080 = vmatmul.f32.gmra.mxu0 %v1757
    %v2081 = vpop.f32.mrf.mxu0
    %v2082 = vadd.f32 %v2017, %v2081
    %2083 = vmatmul.f32.gmra.mxu0 %v1760
    %v2084 = vpop.f32.mrf.mxu0
    %v2085 = vadd.f32 %v2020, %v2084
    %2086 = vmatmul.f32.gmra.mxu0 %v1763
    %v2087 = vpop.f32.mrf.mxu0
    %v2088 = vadd.f32 %v2023, %v2087
    %2089 = vmatmul.f32.gmra.mxu0 %v1766
    %v2090 = vpop.f32.mrf.mxu0
    %v2091 = vadd.f32 %v2026, %v2090
    %2092 = vmatmul.f32.gmra.mxu0 %v1769
    %v2093 = vpop.f32.mrf.mxu0
    %v2094 = vadd.f32 %v2029, %v2093
    %2095 = vmatmul.f32.gmra.mxu0 %v1772
    %v2096 = vpop.f32.mrf.mxu0
    %v2097 = vadd.f32 %v2032, %v2096
    %2098 = vmatmul.f32.gmra.mxu0 %v1775
    %v2099 = vpop.f32.mrf.mxu0
    %v2100 = vadd.f32 %v2035, %v2099
    %2101 = vmatmul.f32.gmra.mxu0 %v1778
    %v2102 = vpop.f32.mrf.mxu0
    %v2103 = vadd.f32 %v2038, %v2102
    %2104 = vmatmul.f32.gmra.mxu0 %v1781
    %v2105 = vpop.f32.mrf.mxu0
    %v2106 = vadd.f32 %v2041, %v2105
    %2107 = vmatmul.f32.gmra.mxu0 %v1784
    %v2108 = vpop.f32.mrf.mxu0
    %v2109 = vadd.f32 %v2044, %v2108
    %2110 = vdwg.mxu0
    %v2111 = vsel %vm105, %v2064, 0.0
    %v2112 = vsel %vm105, %v2067, 0.0
    %v2113 = vadd.f32 %v2111, %v2112
    %v2114 = vsel %vm105, %v2070, 0.0
    %v2115 = vadd.f32 %v2113, %v2114
    %v2116 = vsel %vm105, %v2073, 0.0
    %v2117 = vadd.f32 %v2115, %v2116
    %v2118 = vsel %vm105, %v2076, 0.0
    %v2119 = vadd.f32 %v2117, %v2118
    %v2120 = vsel %vm105, %v2079, 0.0
    %v2121 = vadd.f32 %v2119, %v2120
    %v2122 = vsel %vm105, %v2082, 0.0
    %v2123 = vadd.f32 %v2121, %v2122
    %v2124 = vsel %vm105, %v2085, 0.0
    %v2125 = vadd.f32 %v2123, %v2124
    %v2126 = vsel %vm105, %v2088, 0.0
    %v2127 = vadd.f32 %v2125, %v2126
    %v2128 = vsel %vm105, %v2091, 0.0
    %v2129 = vadd.f32 %v2127, %v2128
    %v2130 = vsel %vm105, %v2094, 0.0
    %v2131 = vadd.f32 %v2129, %v2130
    %v2132 = vsel %vm105, %v2097, 0.0
    %v2133 = vadd.f32 %v2131, %v2132
    %v2134 = vsel %vm105, %v2100, 0.0
    %v2135 = vadd.f32 %v2133, %v2134
    %v2136 = vsel %vm105, %v2103, 0.0
    %v2137 = vadd.f32 %v2135, %v2136
    %v2138 = vsel %vm105, %v2106, 0.0
    %v2139 = vadd.f32 %v2137, %v2138
    %v2140 = vsel %vm105, %v2109, 0.0
    %v2141 = vadd.f32 %v2139, %v2140
    %v2142 = vrot.slane %v2141, 4
    %v2143 = vadd.f32 %v2141, %v2142
    %v2144 = vrot.slane %v2143, 2
    %v2145 = vadd.f32 %v2143, %v2144
    %v2146 = vrot.slane %v2145, 1
    %v2147 = vadd.f32 %v2145, %v2146
    %v2148 = vmul.f32 %v2064, %v2064
    %v2149 = vmul.f32 %v2067, %v2067
    %v2150 = vmul.f32 %v2070, %v2070
    %v2151 = vmul.f32 %v2073, %v2073
    %v2152 = vmul.f32 %v2076, %v2076
    %v2153 = vmul.f32 %v2079, %v2079
    %v2154 = vmul.f32 %v2082, %v2082
    %v2155 = vmul.f32 %v2085, %v2085
    %v2156 = vmul.f32 %v2088, %v2088
    %v2157 = vmul.f32 %v2091, %v2091
    %v2158 = vmul.f32 %v2094, %v2094
    %v2159 = vmul.f32 %v2097, %v2097
    %v2160 = vmul.f32 %v2100, %v2100
    %v2161 = vmul.f32 %v2103, %v2103
    %v2162 = vmul.f32 %v2106, %v2106
    %v2163 = vmul.f32 %v2109, %v2109
    %v2164 = vsel %vm105, %v2148, 0.0
    %v2165 = vsel %vm105, %v2149, 0.0
    %v2166 = vadd.f32 %v2164, %v2165
    %v2167 = vsel %vm105, %v2150, 0.0
    %v2168 = vadd.f32 %v2166, %v2167
    %v2169 = vsel %vm105, %v2151, 0.0
    %v2170 = vadd.f32 %v2168, %v2169
    %v2171 = vsel %vm105, %v2152, 0.0
    %v2172 = vadd.f32 %v2170, %v2171
    %v2173 = vsel %vm105, %v2153, 0.0
    %v2174 = vadd.f32 %v2172, %v2173
    %v2175 = vsel %vm105, %v2154, 0.0
    %v2176 = vadd.f32 %v2174, %v2175
    %v2177 = vsel %vm105, %v2155, 0.0
    %v2178 = vadd.f32 %v2176, %v2177
    %v2179 = vsel %vm105, %v2156, 0.0
    %v2180 = vadd.f32 %v2178, %v2179
    %v2181 = vsel %vm105, %v2157, 0.0
    %v2182 = vadd.f32 %v2180, %v2181
    %v2183 = vsel %vm105, %v2158, 0.0
    %v2184 = vadd.f32 %v2182, %v2183
    %v2185 = vsel %vm105, %v2159, 0.0
    %v2186 = vadd.f32 %v2184, %v2185
    %v2187 = vsel %vm105, %v2160, 0.0
    %v2188 = vadd.f32 %v2186, %v2187
    %v2189 = vsel %vm105, %v2161, 0.0
    %v2190 = vadd.f32 %v2188, %v2189
    %v2191 = vsel %vm105, %v2162, 0.0
    %v2192 = vadd.f32 %v2190, %v2191
    %v2193 = vsel %vm105, %v2163, 0.0
    %v2194 = vadd.f32 %v2192, %v2193
    %v2195 = vrot.slane %v2194, 4
    %v2196 = vadd.f32 %v2194, %v2195
    %v2197 = vrot.slane %v2196, 2
    %v2198 = vadd.f32 %v2196, %v2197
    %v2199 = vrot.slane %v2198, 1
    %v2200 = vadd.f32 %v2198, %v2199
    %v2201 = vmul.f32 %v2147, 0.0078125
    %v2202 = vmul.f32 %v2200, 0.0078125
    %v2203 = vmul.f32 %v2201, %v2201
    %v2204 = vsub.f32 %v2202, %v2203
    %v2205 = vadd.f32 %v2204, 1e-05
    %v2206 = vrsqrt.pop %v2205
    %v2207 = vmul.f32 %v2206, %v2205
    %v2208 = vmul.f32 %v2207, %v2206
    %v2209 = vmul.f32 0.5, %v2208
    %v2210 = vsub.f32 1.5, %v2209
    %v2211 = vmul.f32 %v2206, %v2210
    %vm2212 = vweird.f32 %v2205
    %vm2213 = vweird.f32 %v2206
    %vm2214 = vmor %vm2212, %vm2213
    %v2215 = vsel %vm2214, %v2206, %v2211
    %v2216 = vld [vmem:[%s6] sm:$0x1]
    %v2217 = vmul.f32 %v2215, %v2216
    %v2218 = vld [vmem:[%s3] sm:$0xff]
    %v2219 = vld [vmem:[%s3 + $0x8] sm:$0xff]
    %v2220 = vld [vmem:[%s3 + $0x10] sm:$0xff]
    %v2221 = vld [vmem:[%s3 + $0x18] sm:$0xff]
    %v2222 = vld [vmem:[%s3 + $0x20] sm:$0xff]
    %v2223 = vld [vmem:[%s3 + $0x28] sm:$0xff]
    %v2224 = vld [vmem:[%s3 + $0x30] sm:$0xff]
    %v2225 = vld [vmem:[%s3 + $0x38] sm:$0xff]
    %v2226 = vld [vmem:[%s3 + $0x40] sm:$0xff]
    %v2227 = vld [vmem:[%s3 + $0x48] sm:$0xff]
    %v2228 = vld [vmem:[%s3 + $0x50] sm:$0xff]
    %v2229 = vld [vmem:[%s3 + $0x58] sm:$0xff]
    %v2230 = vld [vmem:[%s3 + $0x60] sm:$0xff]
    %v2231 = vld [vmem:[%s3 + $0x68] sm:$0xff]
    %v2232 = vld [vmem:[%s3 + $0x70] sm:$0xff]
    %v2233 = vld [vmem:[%s3 + $0x78] sm:$0xff]
    %v2234 = vld [vmem:[%s3 + $0x80] sm:$0xff]
    %v2235 = vld [vmem:[%s3 + $0x88] sm:$0xff]
    %v2236 = vld [vmem:[%s3 + $0x90] sm:$0xff]
    %v2237 = vld [vmem:[%s3 + $0x98] sm:$0xff]
    %v2238 = vld [vmem:[%s3 + $0xa0] sm:$0xff]
    %v2239 = vld [vmem:[%s3 + $0xa8] sm:$0xff]
    %v2240 = vld [vmem:[%s3 + $0xb0] sm:$0xff]
    %v2241 = vld [vmem:[%s3 + $0xb8] sm:$0xff]
    %v2242 = vld [vmem:[%s3 + $0xc0] sm:$0xff]
    %v2243 = vld [vmem:[%s3 + $0xc8] sm:$0xff]
    %v2244 = vld [vmem:[%s3 + $0xd0] sm:$0xff]
    %v2245 = vld [vmem:[%s3 + $0xd8] sm:$0xff]
    %v2246 = vld [vmem:[%s3 + $0xe0] sm:$0xff]
    %v2247 = vld [vmem:[%s3 + $0xe8] sm:$0xff]
    %v2248 = vld [vmem:[%s3 + $0xf0] sm:$0xff]
    %v2249 = vld [vmem:[%s3 + $0xf8] sm:$0xff]
    %v2250 = vperm.slane %v2217, 0
    %v2251 = vmul.f32 %v2218, %v2250
    %v2252 = vmul.f32 %v2219, %v2250
    %v2253 = vmul.f32 %v2220, %v2250
    %v2254 = vmul.f32 %v2221, %v2250
    %v2255 = vmul.f32 %v2222, %v2250
    %v2256 = vmul.f32 %v2223, %v2250
    %v2257 = vmul.f32 %v2224, %v2250
    %v2258 = vmul.f32 %v2225, %v2250
    %v2259 = vmul.f32 %v2226, %v2250
    %v2260 = vmul.f32 %v2227, %v2250
    %v2261 = vmul.f32 %v2228, %v2250
    %v2262 = vmul.f32 %v2229, %v2250
    %v2263 = vmul.f32 %v2230, %v2250
    %v2264 = vmul.f32 %v2231, %v2250
    %v2265 = vmul.f32 %v2232, %v2250
    %v2266 = vmul.f32 %v2233, %v2250
    %v2267 = vmul.f32 %v2234, %v2250
    %v2268 = vmul.f32 %v2235, %v2250
    %v2269 = vmul.f32 %v2236, %v2250
    %v2270 = vmul.f32 %v2237, %v2250
    %v2271 = vmul.f32 %v2238, %v2250
    %v2272 = vmul.f32 %v2239, %v2250
    %v2273 = vmul.f32 %v2240, %v2250
    %v2274 = vmul.f32 %v2241, %v2250
    %v2275 = vmul.f32 %v2242, %v2250
    %v2276 = vmul.f32 %v2243, %v2250
    %v2277 = vmul.f32 %v2244, %v2250
    %v2278 = vmul.f32 %v2245, %v2250
    %v2279 = vmul.f32 %v2246, %v2250
    %v2280 = vmul.f32 %v2247, %v2250
    %v2281 = vmul.f32 %v2248, %v2250
    %v2282 = vmul.f32 %v2249, %v2250
    %v2284 = vsel %vm105, %v2064, 0
    %v2287 = vsel %vm105, %v2067, 0
    %v2290 = vsel %vm105, %v2070, 0
    %v2293 = vsel %vm105, %v2073, 0
    %v2296 = vsel %vm105, %v2076, 0
    %v2299 = vsel %vm105, %v2079, 0
    %v2302 = vsel %vm105, %v2082, 0
    %v2305 = vsel %vm105, %v2085, 0
    %v2308 = vsel %vm105, %v2088, 0
    %v2311 = vsel %vm105, %v2091, 0
    %v2314 = vsel %vm105, %v2094, 0
    %v2317 = vsel %vm105, %v2097, 0
    %v2320 = vsel %vm105, %v2100, 0
    %v2323 = vsel %vm105, %v2103, 0
    %v2326 = vsel %vm105, %v2106, 0
    %v2329 = vsel %vm105, %v2109, 0
    %v2332 = vsel %vm105, %v2251, 0
    %v2335 = vsel %vm105, %v2252, 0
    %v2338 = vsel %vm105, %v2253, 0
    %v2341 = vsel %vm105, %v2254, 0
    %v2344 = vsel %vm105, %v2255, 0
    %v2347 = vsel %vm105, %v2256, 0
    %v2350 = vsel %vm105, %v2257, 0
    %v2353 = vsel %vm105, %v2258, 0
    %v2356 = vsel %vm105, %v2259, 0
    %v2359 = vsel %vm105, %v2260, 0
    %v2362 = vsel %vm105, %v2261, 0
    %v2365 = vsel %vm105, %v2262, 0
    %v2368 = vsel %vm105, %v2263, 0
    %v2371 = vsel %vm105, %v2264, 0
    %v2374 = vsel %vm105, %v2265, 0
    %v2377 = vsel %vm105, %v2266, 0
    %v2380 = vsel %vm105, %v2267, 0
    %v2383 = vsel %vm105, %v2268, 0
    %v2386 = vsel %vm105, %v2269, 0
    %v2389 = vsel %vm105, %v2270, 0
    %v2392 = vsel %vm105, %v2271, 0
    %v2395 = vsel %vm105, %v2272, 0
    %v2398 = vsel %vm105, %v2273, 0
    %v2401 = vsel %vm105, %v2274, 0
    %v2404 = vsel %vm105, %v2275, 0
    %v2407 = vsel %vm105, %v2276, 0
    %v2410 = vsel %vm105, %v2277, 0
    %v2413 = vsel %vm105, %v2278, 0
    %v2416 = vsel %vm105, %v2279, 0
    %v2419 = vsel %vm105, %v2280, 0
    %v2422 = vsel %vm105, %v2281, 0
    %v2425 = vsel %vm105, %v2282, 0
    %2427 = vmatpush.xpose.msra.mxu0 %v2377
    %2428 = vmatpush.xpose.msra.mxu0 %v2374
    %2429 = vmatpush.xpose.msra.mxu0 %v2371
    %2430 = vmatpush.xpose.msra.mxu0 %v2368
    %2431 = vmatpush.xpose.msra.mxu0 %v2365
    %2432 = vmatpush.xpose.msra.mxu0 %v2362
    %2433 = vmatpush.xpose.msra.mxu0 %v2359
    %2434 = vmatpush.xpose.msra.mxu0 %v2356
    %2435 = vmatpush.xpose.msra.mxu0 %v2353
    %2436 = vmatpush.xpose.msra.mxu0 %v2350
    %2437 = vmatpush.xpose.msra.mxu0 %v2347
    %2438 = vmatpush.xpose.msra.mxu0 %v2344
    %2439 = vmatpush.xpose.msra.mxu0 %v2341
    %2440 = vmatpush.xpose.msra.mxu0 %v2338
    %2441 = vmatpush.xpose.msra.mxu0 %v2335
    %2442 = vmatpush.xpose.msra.mxu0 %v2332
    %2443 = vmatmul.f32.gmra.mxu0 %v2284
    %v2444 = vpop.f32.mrf.mxu0
    %v2445 = vadd.f32 0.0, %v2444
    %2446 = vmatmul.f32.gmra.mxu0 %v2287
    %v2447 = vpop.f32.mrf.mxu0
    %v2448 = vadd.f32 0.0, %v2447
    %2449 = vmatmul.f32.gmra.mxu0 %v2290
    %v2450 = vpop.f32.mrf.mxu0
    %v2451 = vadd.f32 0.0, %v2450
    %2452 = vmatmul.f32.gmra.mxu0 %v2293
    %v2453 = vpop.f32.mrf.mxu0
    %v2454 = vadd.f32 0.0, %v2453
    %2455 = vmatmul.f32.gmra.mxu0 %v2296
    %v2456 = vpop.f32.mrf.mxu0
    %v2457 = vadd.f32 0.0, %v2456
    %2458 = vmatmul.f32.gmra.mxu0 %v2299
    %v2459 = vpop.f32.mrf.mxu0
    %v2460 = vadd.f32 0.0, %v2459
    %2461 = vmatmul.f32.gmra.mxu0 %v2302
    %v2462 = vpop.f32.mrf.mxu0
    %v2463 = vadd.f32 0.0, %v2462
    %2464 = vmatmul.f32.gmra.mxu0 %v2305
    %v2465 = vpop.f32.mrf.mxu0
    %v2466 = vadd.f32 0.0, %v2465
    %2467 = vmatmul.f32.gmra.mxu0 %v2308
    %v2468 = vpop.f32.mrf.mxu0
    %v2469 = vadd.f32 0.0, %v2468
    %2470 = vmatmul.f32.gmra.mxu0 %v2311
    %v2471 = vpop.f32.mrf.mxu0
    %v2472 = vadd.f32 0.0, %v2471
    %2473 = vmatmul.f32.gmra.mxu0 %v2314
    %v2474 = vpop.f32.mrf.mxu0
    %v2475 = vadd.f32 0.0, %v2474
    %2476 = vmatmul.f32.gmra.mxu0 %v2317
    %v2477 = vpop.f32.mrf.mxu0
    %v2478 = vadd.f32 0.0, %v2477
    %2479 = vmatmul.f32.gmra.mxu0 %v2320
    %v2480 = vpop.f32.mrf.mxu0
    %v2481 = vadd.f32 0.0, %v2480
    %2482 = vmatmul.f32.gmra.mxu0 %v2323
    %v2483 = vpop.f32.mrf.mxu0
    %v2484 = vadd.f32 0.0, %v2483
    %2485 = vmatmul.f32.gmra.mxu0 %v2326
    %v2486 = vpop.f32.mrf.mxu0
    %v2487 = vadd.f32 0.0, %v2486
    %2488 = vmatmul.f32.gmra.mxu0 %v2329
    %v2489 = vpop.f32.mrf.mxu0
    %v2490 = vadd.f32 0.0, %v2489
    %2491 = vdwg.mxu0
    %2492 = vmatpush.xpose.msra.mxu0 %v2425
    %2493 = vmatpush.xpose.msra.mxu0 %v2422
    %2494 = vmatpush.xpose.msra.mxu0 %v2419
    %2495 = vmatpush.xpose.msra.mxu0 %v2416
    %2496 = vmatpush.xpose.msra.mxu0 %v2413
    %2497 = vmatpush.xpose.msra.mxu0 %v2410
    %2498 = vmatpush.xpose.msra.mxu0 %v2407
    %2499 = vmatpush.xpose.msra.mxu0 %v2404
    %2500 = vmatpush.xpose.msra.mxu0 %v2401
    %2501 = vmatpush.xpose.msra.mxu0 %v2398
    %2502 = vmatpush.xpose.msra.mxu0 %v2395
    %2503 = vmatpush.xpose.msra.mxu0 %v2392
    %2504 = vmatpush.xpose.msra.mxu0 %v2389
    %2505 = vmatpush.xpose.msra.mxu0 %v2386
    %2506 = vmatpush.xpose.msra.mxu0 %v2383
    %2507 = vmatpush.xpose.msra.mxu0 %v2380
    %2508 = vmatmul.f32.gmra.mxu0 %v2284
    %v2509 = vpop.f32.mrf.mxu0
    %v2510 = vadd.f32 0.0, %v2509
    %2511 = vmatmul.f32.gmra.mxu0 %v2287
    %v2512 = vpop.f32.mrf.mxu0
    %v2513 = vadd.f32 0.0, %v2512
    %2514 = vmatmul.f32.gmra.mxu0 %v2290
    %v2515 = vpop.f32.mrf.mxu0
    %v2516 = vadd.f32 0.0, %v2515
    %2517 = vmatmul.f32.gmra.mxu0 %v2293
    %v2518 = vpop.f32.mrf.mxu0
    %v2519 = vadd.f32 0.0, %v2518
    %2520 = vmatmul.f32.gmra.mxu0 %v2296
    %v2521 = vpop.f32.mrf.mxu0
    %v2522 = vadd.f32 0.0, %v2521
    %2523 = vmatmul.f32.gmra.mxu0 %v2299
    %v2524 = vpop.f32.mrf.mxu0
    %v2525 = vadd.f32 0.0, %v2524
    %2526 = vmatmul.f32.gmra.mxu0 %v2302
    %v2527 = vpop.f32.mrf.mxu0
    %v2528 = vadd.f32 0.0, %v2527
    %2529 = vmatmul.f32.gmra.mxu0 %v2305
    %v2530 = vpop.f32.mrf.mxu0
    %v2531 = vadd.f32 0.0, %v2530
    %2532 = vmatmul.f32.gmra.mxu0 %v2308
    %v2533 = vpop.f32.mrf.mxu0
    %v2534 = vadd.f32 0.0, %v2533
    %2535 = vmatmul.f32.gmra.mxu0 %v2311
    %v2536 = vpop.f32.mrf.mxu0
    %v2537 = vadd.f32 0.0, %v2536
    %2538 = vmatmul.f32.gmra.mxu0 %v2314
    %v2539 = vpop.f32.mrf.mxu0
    %v2540 = vadd.f32 0.0, %v2539
    %2541 = vmatmul.f32.gmra.mxu0 %v2317
    %v2542 = vpop.f32.mrf.mxu0
    %v2543 = vadd.f32 0.0, %v2542
    %2544 = vmatmul.f32.gmra.mxu0 %v2320
    %v2545 = vpop.f32.mrf.mxu0
    %v2546 = vadd.f32 0.0, %v2545
    %2547 = vmatmul.f32.gmra.mxu0 %v2323
    %v2548 = vpop.f32.mrf.mxu0
    %v2549 = vadd.f32 0.0, %v2548
    %2550 = vmatmul.f32.gmra.mxu0 %v2326
    %v2551 = vpop.f32.mrf.mxu0
    %v2552 = vadd.f32 0.0, %v2551
    %2553 = vmatmul.f32.gmra.mxu0 %v2329
    %v2554 = vpop.f32.mrf.mxu0
    %v2555 = vadd.f32 0.0, %v2554
    %2556 = vdwg.mxu0
    %v2557 = vld [vmem:[%s7] ss:$2 sm:$0x3]
    %s2558 = scalar_lea.vmem %s7, 1
    %v2559 = vld [vmem:[%s2558] ss:$2 sm:$0x3]
    %v2560 = vadd.f32 %v2445, %v2448
    %v2561 = vadd.f32 %v2560, %v2451
    %v2562 = vadd.f32 %v2561, %v2454
    %v2563 = vadd.f32 %v2562, %v2457
    %v2564 = vadd.f32 %v2563, %v2460
    %v2565 = vadd.f32 %v2564, %v2463
    %v2566 = vadd.f32 %v2565, %v2466
    %v2567 = vadd.f32 %v2566, %v2469
    %v2568 = vadd.f32 %v2567, %v2472
    %v2569 = vadd.f32 %v2568, %v2475
    %v2570 = vadd.f32 %v2569, %v2478
    %v2571 = vadd.f32 %v2570, %v2481
    %v2572 = vadd.f32 %v2571, %v2484
    %v2573 = vadd.f32 %v2572, %v2487
    %v2574 = vadd.f32 %v2573, %v2490
    %v2575 = vrot.slane %v2574, 4
    %v2576 = vadd.f32 %v2574, %v2575
    %v2577 = vrot.slane %v2576, 2
    %v2578 = vadd.f32 %v2576, %v2577
    %v2579 = vrot.slane %v2578, 1
    %v2580 = vadd.f32 %v2578, %v2579
    %v2581 = vadd.f32 %v2510, %v2513
    %v2582 = vadd.f32 %v2581, %v2516
    %v2583 = vadd.f32 %v2582, %v2519
    %v2584 = vadd.f32 %v2583, %v2522
    %v2585 = vadd.f32 %v2584, %v2525
    %v2586 = vadd.f32 %v2585, %v2528
    %v2587 = vadd.f32 %v2586, %v2531
    %v2588 = vadd.f32 %v2587, %v2534
    %v2589 = vadd.f32 %v2588, %v2537
    %v2590 = vadd.f32 %v2589, %v2540
    %v2591 = vadd.f32 %v2590, %v2543
    %v2592 = vadd.f32 %v2591, %v2546
    %v2593 = vadd.f32 %v2592, %v2549
    %v2594 = vadd.f32 %v2593, %v2552
    %v2595 = vadd.f32 %v2594, %v2555
    %v2596 = vrot.slane %v2595, 4
    %v2597 = vadd.f32 %v2595, %v2596
    %v2598 = vrot.slane %v2597, 2
    %v2599 = vadd.f32 %v2597, %v2598
    %v2600 = vrot.slane %v2599, 1
    %v2601 = vadd.f32 %v2599, %v2600
    %v2602 = vmul.f32 %v2445, %v2445
    %v2603 = vmul.f32 %v2510, %v2510
    %v2604 = vmul.f32 %v2448, %v2448
    %v2605 = vmul.f32 %v2513, %v2513
    %v2606 = vmul.f32 %v2451, %v2451
    %v2607 = vmul.f32 %v2516, %v2516
    %v2608 = vmul.f32 %v2454, %v2454
    %v2609 = vmul.f32 %v2519, %v2519
    %v2610 = vmul.f32 %v2457, %v2457
    %v2611 = vmul.f32 %v2522, %v2522
    %v2612 = vmul.f32 %v2460, %v2460
    %v2613 = vmul.f32 %v2525, %v2525
    %v2614 = vmul.f32 %v2463, %v2463
    %v2615 = vmul.f32 %v2528, %v2528
    %v2616 = vmul.f32 %v2466, %v2466
    %v2617 = vmul.f32 %v2531, %v2531
    %v2618 = vmul.f32 %v2469, %v2469
    %v2619 = vmul.f32 %v2534, %v2534
    %v2620 = vmul.f32 %v2472, %v2472
    %v2621 = vmul.f32 %v2537, %v2537
    %v2622 = vmul.f32 %v2475, %v2475
    %v2623 = vmul.f32 %v2540, %v2540
    %v2624 = vmul.f32 %v2478, %v2478
    %v2625 = vmul.f32 %v2543, %v2543
    %v2626 = vmul.f32 %v2481, %v2481
    %v2627 = vmul.f32 %v2546, %v2546
    %v2628 = vmul.f32 %v2484, %v2484
    %v2629 = vmul.f32 %v2549, %v2549
    %v2630 = vmul.f32 %v2487, %v2487
    %v2631 = vmul.f32 %v2552, %v2552
    %v2632 = vmul.f32 %v2490, %v2490
    %v2633 = vmul.f32 %v2555, %v2555
    %v2634 = vadd.f32 %v2602, %v2604
    %v2635 = vadd.f32 %v2634, %v2606
    %v2636 = vadd.f32 %v2635, %v2608
    %v2637 = vadd.f32 %v2636, %v2610
    %v2638 = vadd.f32 %v2637, %v2612
    %v2639 = vadd.f32 %v2638, %v2614
    %v2640 = vadd.f32 %v2639, %v2616
    %v2641 = vadd.f32 %v2640, %v2618
    %v2642 = vadd.f32 %v2641, %v2620
    %v2643 = vadd.f32 %v2642, %v2622
    %v2644 = vadd.f32 %v2643, %v2624
    %v2645 = vadd.f32 %v2644, %v2626
    %v2646 = vadd.f32 %v2645, %v2628
    %v2647 = vadd.f32 %v2646, %v2630
    %v2648 = vadd.f32 %v2647, %v2632
    %v2649 = vrot.slane %v2648, 4
    %v2650 = vadd.f32 %v2648, %v2649
    %v2651 = vrot.slane %v2650, 2
    %v2652 = vadd.f32 %v2650, %v2651
    %v2653 = vrot.slane %v2652, 1
    %v2654 = vadd.f32 %v2652, %v2653
    %v2655 = vadd.f32 %v2603, %v2605
    %v2656 = vadd.f32 %v2655, %v2607
    %v2657 = vadd.f32 %v2656, %v2609
    %v2658 = vadd.f32 %v2657, %v2611
    %v2659 = vadd.f32 %v2658, %v2613
    %v2660 = vadd.f32 %v2659, %v2615
    %v2661 = vadd.f32 %v2660, %v2617
    %v2662 = vadd.f32 %v2661, %v2619
    %v2663 = vadd.f32 %v2662, %v2621
    %v2664 = vadd.f32 %v2663, %v2623
    %v2665 = vadd.f32 %v2664, %v2625
    %v2666 = vadd.f32 %v2665, %v2627
    %v2667 = vadd.f32 %v2666, %v2629
    %v2668 = vadd.f32 %v2667, %v2631
    %v2669 = vadd.f32 %v2668, %v2633
    %v2670 = vrot.slane %v2669, 4
    %v2671 = vadd.f32 %v2669, %v2670
    %v2672 = vrot.slane %v2671, 2
    %v2673 = vadd.f32 %v2671, %v2672
    %v2674 = vrot.slane %v2673, 1
    %v2675 = vadd.f32 %v2673, %v2674
    %v2676 = vmul.f32 %v2580, 0.0078125
    %v2677 = vmul.f32 %v2601, 0.0078125
    %v2678 = vmul.f32 %v2654, 0.0078125
    %v2679 = vmul.f32 %v2675, 0.0078125
    %v2680 = vmul.f32 %v2676, %v2676
    %v2681 = vmul.f32 %v2677, %v2677
    %v2682 = vsub.f32 %v2678, %v2680
    %v2683 = vsub.f32 %v2679, %v2681
    %v2684 = vadd.f32 %v2682, 1e-05
    %v2685 = vadd.f32 %v2683, 1e-05
    %v2686 = vrsqrt.pop %v2684
    %v2687 = vmul.f32 %v2686, %v2684
    %v2688 = vmul.f32 %v2687, %v2686
    %v2689 = vmul.f32 0.5, %v2688
    %v2690 = vsub.f32 1.5, %v2689
    %v2691 = vmul.f32 %v2686, %v2690
    %vm2692 = vweird.f32 %v2684
    %vm2693 = vweird.f32 %v2686
    %vm2694 = vmor %vm2692, %vm2693
    %v2695 = vsel %vm2694, %v2686, %v2691
    %v2696 = vrsqrt.pop %v2685
    %v2697 = vmul.f32 %v2696, %v2685
    %v2698 = vmul.f32 %v2697, %v2696
    %v2699 = vmul.f32 0.5, %v2698
    %v2700 = vsub.f32 1.5, %v2699
    %v2701 = vmul.f32 %v2696, %v2700
    %vm2702 = vweird.f32 %v2685
    %vm2703 = vweird.f32 %v2696
    %vm2704 = vmor %vm2702, %vm2703
    %v2705 = vsel %vm2704, %v2696, %v2701
    %v2707 = vperm.slane %v2557, 0
    %v2708 = vperm.slane %v2557, 1
    %v2711 = vmul.f32 %v2695, %v2707
    %v2712 = vmul.f32 %v2705, %v2708
    %v2713 = vmul.f32 %v2676, %v2711
    %v2714 = vmul.f32 %v2677, %v2712
    %v2717 = vrot.slane %v2714, 7
    %vm2718 = vcmask 1040384
    %v2719 = vsel %vm2718, %v2713, %v2717
    %v2721 = vsub.f32 %v2559, %v2719
    %v2722 = vperm.slane %v2711, 0
    %v2723 = vperm.slane %v2712, 0
    %v2724 = vmul.f32 %v2445, %v2722
    %v2725 = vmul.f32 %v2510, %v2723
    %v2726 = vmul.f32 %v2448, %v2722
    %v2727 = vmul.f32 %v2513, %v2723
    %v2728 = vmul.f32 %v2451, %v2722
    %v2729 = vmul.f32 %v2516, %v2723
    %v2730 = vmul.f32 %v2454, %v2722
    %v2731 = vmul.f32 %v2519, %v2723
    %v2732 = vmul.f32 %v2457, %v2722
    %v2733 = vmul.f32 %v2522, %v2723
    %v2734 = vmul.f32 %v2460, %v2722
    %v2735 = vmul.f32 %v2525, %v2723
    %v2736 = vmul.f32 %v2463, %v2722
    %v2737 = vmul.f32 %v2528, %v2723
    %v2738 = vmul.f32 %v2466, %v2722
    %v2739 = vmul.f32 %v2531, %v2723
    %v2740 = vmul.f32 %v2469, %v2722
    %v2741 = vmul.f32 %v2534, %v2723
    %v2742 = vmul.f32 %v2472, %v2722
    %v2743 = vmul.f32 %v2537, %v2723
    %v2744 = vmul.f32 %v2475, %v2722
    %v2745 = vmul.f32 %v2540, %v2723
    %v2746 = vmul.f32 %v2478, %v2722
    %v2747 = vmul.f32 %v2543, %v2723
    %v2748 = vmul.f32 %v2481, %v2722
    %v2749 = vmul.f32 %v2546, %v2723
    %v2750 = vmul.f32 %v2484, %v2722
    %v2751 = vmul.f32 %v2549, %v2723
    %v2752 = vmul.f32 %v2487, %v2722
    %v2753 = vmul.f32 %v2552, %v2723
    %v2754 = vmul.f32 %v2490, %v2722
    %v2755 = vmul.f32 %v2555, %v2723
    %v2757 = vperm.slane %v2721, 0
    %v2758 = vperm.slane %v2721, 1
    %v2761 = vadd.f32 %v2724, %v2757
    %v2762 = vadd.f32 %v2725, %v2758
    %v2763 = vadd.f32 %v2726, %v2757
    %v2764 = vadd.f32 %v2727, %v2758
    %v2765 = vadd.f32 %v2728, %v2757
    %v2766 = vadd.f32 %v2729, %v2758
    %v2767 = vadd.f32 %v2730, %v2757
    %v2768 = vadd.f32 %v2731, %v2758
    %v2769 = vadd.f32 %v2732, %v2757
    %v2770 = vadd.f32 %v2733, %v2758
    %v2771 = vadd.f32 %v2734, %v2757
    %v2772 = vadd.f32 %v2735, %v2758
    %v2773 = vadd.f32 %v2736, %v2757
    %v2774 = vadd.f32 %v2737, %v2758
    %v2775 = vadd.f32 %v2738, %v2757
    %v2776 = vadd.f32 %v2739, %v2758
    %v2777 = vadd.f32 %v2740, %v2757
    %v2778 = vadd.f32 %v2741, %v2758
    %v2779 = vadd.f32 %v2742, %v2757
    %v2780 = vadd.f32 %v2743, %v2758
    %v2781 = vadd.f32 %v2744, %v2757
    %v2782 = vadd.f32 %v2745, %v2758
    %v2783 = vadd.f32 %v2746, %v2757
    %v2784 = vadd.f32 %v2747, %v2758
    %v2785 = vadd.f32 %v2748, %v2757
    %v2786 = vadd.f32 %v2749, %v2758
    %v2787 = vadd.f32 %v2750, %v2757
    %v2788 = vadd.f32 %v2751, %v2758
    %v2789 = vadd.f32 %v2752, %v2757
    %v2790 = vadd.f32 %v2753, %v2758
    %v2791 = vadd.f32 %v2754, %v2757
    %v2792 = vadd.f32 %v2755, %v2758
    %v2793 = vmax.f32 %v2761, 0.0
    %v2794 = vmax.f32 %v2762, 0.0
    %v2795 = vmax.f32 %v2763, 0.0
    %v2796 = vmax.f32 %v2764, 0.0
    %v2797 = vmax.f32 %v2765, 0.0
    %v2798 = vmax.f32 %v2766, 0.0
    %v2799 = vmax.f32 %v2767, 0.0
    %v2800 = vmax.f32 %v2768, 0.0
    %v2801 = vmax.f32 %v2769, 0.0
    %v2802 = vmax.f32 %v2770, 0.0
    %v2803 = vmax.f32 %v2771, 0.0
    %v2804 = vmax.f32 %v2772, 0.0
    %v2805 = vmax.f32 %v2773, 0.0
    %v2806 = vmax.f32 %v2774, 0.0
    %v2807 = vmax.f32 %v2775, 0.0
    %v2808 = vmax.f32 %v2776, 0.0
    %v2809 = vmax.f32 %v2777, 0.0
    %v2810 = vmax.f32 %v2778, 0.0
    %v2811 = vmax.f32 %v2779, 0.0
    %v2812 = vmax.f32 %v2780, 0.0
    %v2813 = vmax.f32 %v2781, 0.0
    %v2814 = vmax.f32 %v2782, 0.0
    %v2815 = vmax.f32 %v2783, 0.0
    %v2816 = vmax.f32 %v2784, 0.0
    %v2817 = vmax.f32 %v2785, 0.0
    %v2818 = vmax.f32 %v2786, 0.0
    %v2819 = vmax.f32 %v2787, 0.0
    %v2820 = vmax.f32 %v2788, 0.0
    %v2821 = vmax.f32 %v2789, 0.0
    %v2822 = vmax.f32 %v2790, 0.0
    %v2823 = vmax.f32 %v2791, 0.0
    %v2824 = vmax.f32 %v2792, 0.0
    %v2825 = vld [vmem:[%s0] sm:$0xff]
    %v2826 = vld [vmem:[%s0 + $0x10] sm:$0xff]
    %v2827 = vld [vmem:[%s0 + $0x20] sm:$0xff]
    %v2828 = vld [vmem:[%s0 + $0x30] sm:$0xff]
    %v2829 = vld [vmem:[%s0 + $0x40] sm:$0xff]
    %v2830 = vld [vmem:[%s0 + $0x50] sm:$0xff]
    %v2831 = vld [vmem:[%s0 + $0x60] sm:$0xff]
    %v2832 = vld [vmem:[%s0 + $0x70] sm:$0xff]
    %v2833 = vld [vmem:[%s0 + $0x100] sm:$0xff]
    %v2834 = vld [vmem:[%s0 + $0x110] sm:$0xff]
    %v2835 = vld [vmem:[%s0 + $0x120] sm:$0xff]
    %v2836 = vld [vmem:[%s0 + $0x130] sm:$0xff]
    %v2837 = vld [vmem:[%s0 + $0x140] sm:$0xff]
    %v2838 = vld [vmem:[%s0 + $0x150] sm:$0xff]
    %v2839 = vld [vmem:[%s0 + $0x160] sm:$0xff]
    %v2840 = vld [vmem:[%s0 + $0x170] sm:$0xff]
    %v2841 = vld [vmem:[%s4] sm:$0xff]
    %v2842 = vld [vmem:[%s4 + $0x8] sm:$0xff]
    %v2843 = vld [vmem:[%s4 + $0x10] sm:$0xff]
    %v2844 = vld [vmem:[%s4 + $0x18] sm:$0xff]
    %v2845 = vld [vmem:[%s4 + $0x20] sm:$0xff]
    %v2846 = vld [vmem:[%s4 + $0x28] sm:$0xff]
    %v2847 = vld [vmem:[%s4 + $0x30] sm:$0xff]
    %v2848 = vld [vmem:[%s4 + $0x38] sm:$0xff]
    %v2849 = vld [vmem:[%s4 + $0x40] sm:$0xff]
    %v2850 = vld [vmem:[%s4 + $0x48] sm:$0xff]
    %v2851 = vld [vmem:[%s4 + $0x50] sm:$0xff]
    %v2852 = vld [vmem:[%s4 + $0x58] sm:$0xff]
    %v2853 = vld [vmem:[%s4 + $0x60] sm:$0xff]
    %v2854 = vld [vmem:[%s4 + $0x68] sm:$0xff]
    %v2855 = vld [vmem:[%s4 + $0x70] sm:$0xff]
    %v2856 = vld [vmem:[%s4 + $0x78] sm:$0xff]
    %v2858 = vsel %vm105, %v2825, 0
    %v2861 = vsel %vm105, %v2826, 0
    %v2864 = vsel %vm105, %v2827, 0
    %v2867 = vsel %vm105, %v2828, 0
    %v2870 = vsel %vm105, %v2829, 0
    %v2873 = vsel %vm105, %v2830, 0
    %v2876 = vsel %vm105, %v2831, 0
    %v2879 = vsel %vm105, %v2832, 0
    %v2882 = vsel %vm105, %v2833, 0
    %v2885 = vsel %vm105, %v2834, 0
    %v2888 = vsel %vm105, %v2835, 0
    %v2891 = vsel %vm105, %v2836, 0
    %v2894 = vsel %vm105, %v2837, 0
    %v2897 = vsel %vm105, %v2838, 0
    %v2900 = vsel %vm105, %v2839, 0
    %v2903 = vsel %vm105, %v2840, 0
    %2905 = vmatpush.msra.mxu0 0.0
    %2906 = vmatpush.msra.mxu0 0.0
    %2907 = vmatpush.msra.mxu0 0.0
    %2908 = vmatpush.msra.mxu0 0.0
    %2909 = vmatpush.msra.mxu0 0.0
    %2910 = vmatpush.msra.mxu0 0.0
    %2911 = vmatpush.msra.mxu0 0.0
    %2912 = vmatpush.msra.mxu0 0.0
    %2913 = vmatpush.msra.mxu0 %v2855
    %2914 = vmatpush.msra.mxu0 %v2853
    %2915 = vmatpush.msra.mxu0 %v2851
    %2916 = vmatpush.msra.mxu0 %v2849
    %2917 = vmatpush.msra.mxu0 %v2847
    %2918 = vmatpush.msra.mxu0 %v2845
    %2919 = vmatpush.msra.mxu0 %v2843
    %2920 = vmatpush.msra.mxu0 %v2841
    %2921 = vmatmul.f32.gmra.mxu0 %v2858
    %v2922 = vpop.f32.mrf.mxu0
    %v2923 = vadd.f32 0.0, %v2922
    %2924 = vmatmul.f32.gmra.mxu0 %v2861
    %v2925 = vpop.f32.mrf.mxu0
    %v2926 = vadd.f32 0.0, %v2925
    %2927 = vmatmul.f32.gmra.mxu0 %v2864
    %v2928 = vpop.f32.mrf.mxu0
    %v2929 = vadd.f32 0.0, %v2928
    %2930 = vmatmul.f32.gmra.mxu0 %v2867
    %v2931 = vpop.f32.mrf.mxu0
    %v2932 = vadd.f32 0.0, %v2931
    %2933 = vmatmul.f32.gmra.mxu0 %v2870
    %v2934 = vpop.f32.mrf.mxu0
    %v2935 = vadd.f32 0.0, %v2934
    %2936 = vmatmul.f32.gmra.mxu0 %v2873
    %v2937 = vpop.f32.mrf.mxu0
    %v2938 = vadd.f32 0.0, %v2937
    %2939 = vmatmul.f32.gmra.mxu0 %v2876
    %v2940 = vpop.f32.mrf.mxu0
    %v2941 = vadd.f32 0.0, %v2940
    %2942 = vmatmul.f32.gmra.mxu0 %v2879
    %v2943 = vpop.f32.mrf.mxu0
    %v2944 = vadd.f32 0.0, %v2943
    %2945 = vmatmul.f32.gmra.mxu0 %v2882
    %v2946 = vpop.f32.mrf.mxu0
    %v2947 = vadd.f32 0.0, %v2946
    %2948 = vmatmul.f32.gmra.mxu0 %v2885
    %v2949 = vpop.f32.mrf.mxu0
    %v2950 = vadd.f32 0.0, %v2949
    %2951 = vmatmul.f32.gmra.mxu0 %v2888
    %v2952 = vpop.f32.mrf.mxu0
    %v2953 = vadd.f32 0.0, %v2952
    %2954 = vmatmul.f32.gmra.mxu0 %v2891
    %v2955 = vpop.f32.mrf.mxu0
    %v2956 = vadd.f32 0.0, %v2955
    %2957 = vmatmul.f32.gmra.mxu0 %v2894
    %v2958 = vpop.f32.mrf.mxu0
    %v2959 = vadd.f32 0.0, %v2958
    %2960 = vmatmul.f32.gmra.mxu0 %v2897
    %v2961 = vpop.f32.mrf.mxu0
    %v2962 = vadd.f32 0.0, %v2961
    %2963 = vmatmul.f32.gmra.mxu0 %v2900
    %v2964 = vpop.f32.mrf.mxu0
    %v2965 = vadd.f32 0.0, %v2964
    %2966 = vmatmul.f32.gmra.mxu0 %v2903
    %v2967 = vpop.f32.mrf.mxu0
    %v2968 = vadd.f32 0.0, %v2967
    %2969 = vdwg.mxu0
    %2970 = vmatpush.msra.mxu0 0.0
    %2971 = vmatpush.msra.mxu0 0.0
    %2972 = vmatpush.msra.mxu0 0.0
    %2973 = vmatpush.msra.mxu0 0.0
    %2974 = vmatpush.msra.mxu0 0.0
    %2975 = vmatpush.msra.mxu0 0.0
    %2976 = vmatpush.msra.mxu0 0.0
    %2977 = vmatpush.msra.mxu0 0.0
    %2978 = vmatpush.msra.mxu0 %v2856
    %2979 = vmatpush.msra.mxu0 %v2854
    %2980 = vmatpush.msra.mxu0 %v2852
    %2981 = vmatpush.msra.mxu0 %v2850
    %2982 = vmatpush.msra.mxu0 %v2848
    %2983 = vmatpush.msra.mxu0 %v2846
    %2984 = vmatpush.msra.mxu0 %v2844
    %2985 = vmatpush.msra.mxu0 %v2842
    %2986 = vmatmul.f32.gmra.mxu0 %v2858
    %v2987 = vpop.f32.mrf.mxu0
    %v2988 = vadd.f32 0.0, %v2987
    %2989 = vmatmul.f32.gmra.mxu0 %v2861
    %v2990 = vpop.f32.mrf.mxu0
    %v2991 = vadd.f32 0.0, %v2990
    %2992 = vmatmul.f32.gmra.mxu0 %v2864
    %v2993 = vpop.f32.mrf.mxu0
    %v2994 = vadd.f32 0.0, %v2993
    %2995 = vmatmul.f32.gmra.mxu0 %v2867
    %v2996 = vpop.f32.mrf.mxu0
    %v2997 = vadd.f32 0.0, %v2996
    %2998 = vmatmul.f32.gmra.mxu0 %v2870
    %v2999 = vpop.f32.mrf.mxu0
    %v3000 = vadd.f32 0.0, %v2999
    %3001 = vmatmul.f32.gmra.mxu0 %v2873
    %v3002 = vpop.f32.mrf.mxu0
    %v3003 = vadd.f32 0.0, %v3002
    %3004 = vmatmul.f32.gmra.mxu0 %v2876
    %v3005 = vpop.f32.mrf.mxu0
    %v3006 = vadd.f32 0.0, %v3005
    %3007 = vmatmul.f32.gmra.mxu0 %v2879
    %v3008 = vpop.f32.mrf.mxu0
    %v3009 = vadd.f32 0.0, %v3008
    %3010 = vmatmul.f32.gmra.mxu0 %v2882
    %v3011 = vpop.f32.mrf.mxu0
    %v3012 = vadd.f32 0.0, %v3011
    %3013 = vmatmul.f32.gmra.mxu0 %v2885
    %v3014 = vpop.f32.mrf.mxu0
    %v3015 = vadd.f32 0.0, %v3014
    %3016 = vmatmul.f32.gmra.mxu0 %v2888
    %v3017 = vpop.f32.mrf.mxu0
    %v3018 = vadd.f32 0.0, %v3017
    %3019 = vmatmul.f32.gmra.mxu0 %v2891
    %v3020 = vpop.f32.mrf.mxu0
    %v3021 = vadd.f32 0.0, %v3020
    %3022 = vmatmul.f32.gmra.mxu0 %v2894
    %v3023 = vpop.f32.mrf.mxu0
    %v3024 = vadd.f32 0.0, %v3023
    %3025 = vmatmul.f32.gmra.mxu0 %v2897
    %v3026 = vpop.f32.mrf.mxu0
    %v3027 = vadd.f32 0.0, %v3026
    %3028 = vmatmul.f32.gmra.mxu0 %v2900
    %v3029 = vpop.f32.mrf.mxu0
    %v3030 = vadd.f32 0.0, %v3029
    %3031 = vmatmul.f32.gmra.mxu0 %v2903
    %v3032 = vpop.f32.mrf.mxu0
    %v3033 = vadd.f32 0.0, %v3032
    %3034 = vdwg.mxu0
    %v3035 = vld [vmem:[%s8] ss:$2 sm:$0x3]
    %s3036 = scalar_lea.vmem %s8, 1
    %v3037 = vld [vmem:[%s3036] ss:$2 sm:$0x3]
    %v3038 = vadd.f32 %v2923, %v2926
    %v3039 = vadd.f32 %v3038, %v2929
    %v3040 = vadd.f32 %v3039, %v2932
    %v3041 = vadd.f32 %v3040, %v2935
    %v3042 = vadd.f32 %v3041, %v2938
    %v3043 = vadd.f32 %v3042, %v2941
    %v3044 = vadd.f32 %v3043, %v2944
    %v3045 = vadd.f32 %v3044, %v2947
    %v3046 = vadd.f32 %v3045, %v2950
    %v3047 = vadd.f32 %v3046, %v2953
    %v3048 = vadd.f32 %v3047, %v2956
    %v3049 = vadd.f32 %v3048, %v2959
    %v3050 = vadd.f32 %v3049, %v2962
    %v3051 = vadd.f32 %v3050, %v2965
    %v3052 = vadd.f32 %v3051, %v2968
    %v3053 = vrot.slane %v3052, 4
    %v3054 = vadd.f32 %v3052, %v3053
    %v3055 = vrot.slane %v3054, 2
    %v3056 = vadd.f32 %v3054, %v3055
    %v3057 = vrot.slane %v3056, 1
    %v3058 = vadd.f32 %v3056, %v3057
    %v3059 = vadd.f32 %v2988, %v2991
    %v3060 = vadd.f32 %v3059, %v2994
    %v3061 = vadd.f32 %v3060, %v2997
    %v3062 = vadd.f32 %v3061, %v3000
    %v3063 = vadd.f32 %v3062, %v3003
    %v3064 = vadd.f32 %v3063, %v3006
    %v3065 = vadd.f32 %v3064, %v3009
    %v3066 = vadd.f32 %v3065, %v3012
    %v3067 = vadd.f32 %v3066, %v3015
    %v3068 = vadd.f32 %v3067, %v3018
    %v3069 = vadd.f32 %v3068, %v3021
    %v3070 = vadd.f32 %v3069, %v3024
    %v3071 = vadd.f32 %v3070, %v3027
    %v3072 = vadd.f32 %v3071, %v3030
    %v3073 = vadd.f32 %v3072, %v3033
    %v3074 = vrot.slane %v3073, 4
    %v3075 = vadd.f32 %v3073, %v3074
    %v3076 = vrot.slane %v3075, 2
    %v3077 = vadd.f32 %v3075, %v3076
    %v3078 = vrot.slane %v3077, 1
    %v3079 = vadd.f32 %v3077, %v3078
    %v3080 = vmul.f32 %v2923, %v2923
    %v3081 = vmul.f32 %v2988, %v2988
    %v3082 = vmul.f32 %v2926, %v2926
    %v3083 = vmul.f32 %v2991, %v2991
    %v3084 = vmul.f32 %v2929, %v2929
    %v3085 = vmul.f32 %v2994, %v2994
    %v3086 = vmul.f32 %v2932, %v2932
    %v3087 = vmul.f32 %v2997, %v2997
    %v3088 = vmul.f32 %v2935, %v2935
    %v3089 = vmul.f32 %v3000, %v3000
    %v3090 = vmul.f32 %v2938, %v2938
    %v3091 = vmul.f32 %v3003, %v3003
    %v3092 = vmul.f32 %v2941, %v2941
    %v3093 = vmul.f32 %v3006, %v3006
    %v3094 = vmul.f32 %v2944, %v2944
    %v3095 = vmul.f32 %v3009, %v3009
    %v3096 = vmul.f32 %v2947, %v2947
    %v3097 = vmul.f32 %v3012, %v3012
    %v3098 = vmul.f32 %v2950, %v2950
    %v3099 = vmul.f32 %v3015, %v3015
    %v3100 = vmul.f32 %v2953, %v2953
    %v3101 = vmul.f32 %v3018, %v3018
    %v3102 = vmul.f32 %v2956, %v2956
    %v3103 = vmul.f32 %v3021, %v3021
    %v3104 = vmul.f32 %v2959, %v2959
    %v3105 = vmul.f32 %v3024, %v3024
    %v3106 = vmul.f32 %v2962, %v2962
    %v3107 = vmul.f32 %v3027, %v3027
    %v3108 = vmul.f32 %v2965, %v2965
    %v3109 = vmul.f32 %v3030, %v3030
    %v3110 = vmul.f32 %v2968, %v2968
    %v3111 = vmul.f32 %v3033, %v3033
    %v3112 = vadd.f32 %v3080, %v3082
    %v3113 = vadd.f32 %v3112, %v3084
    %v3114 = vadd.f32 %v3113, %v3086
    %v3115 = vadd.f32 %v3114, %v3088
    %v3116 = vadd.f32 %v3115, %v3090
    %v3117 = vadd.f32 %v3116, %v3092
    %v3118 = vadd.f32 %v3117, %v3094
    %v3119 = vadd.f32 %v3118, %v3096
    %v3120 = vadd.f32 %v3119, %v3098
    %v3121 = vadd.f32 %v3120, %v3100
    %v3122 = vadd.f32 %v3121, %v3102
    %v3123 = vadd.f32 %v3122, %v3104
    %v3124 = vadd.f32 %v3123, %v3106
    %v3125 = vadd.f32 %v3124, %v3108
    %v3126 = vadd.f32 %v3125, %v3110
    %v3127 = vrot.slane %v3126, 4
    %v3128 = vadd.f32 %v3126, %v3127
    %v3129 = vrot.slane %v3128, 2
    %v3130 = vadd.f32 %v3128, %v3129
    %v3131 = vrot.slane %v3130, 1
    %v3132 = vadd.f32 %v3130, %v3131
    %v3133 = vadd.f32 %v3081, %v3083
    %v3134 = vadd.f32 %v3133, %v3085
    %v3135 = vadd.f32 %v3134, %v3087
    %v3136 = vadd.f32 %v3135, %v3089
    %v3137 = vadd.f32 %v3136, %v3091
    %v3138 = vadd.f32 %v3137, %v3093
    %v3139 = vadd.f32 %v3138, %v3095
    %v3140 = vadd.f32 %v3139, %v3097
    %v3141 = vadd.f32 %v3140, %v3099
    %v3142 = vadd.f32 %v3141, %v3101
    %v3143 = vadd.f32 %v3142, %v3103
    %v3144 = vadd.f32 %v3143, %v3105
    %v3145 = vadd.f32 %v3144, %v3107
    %v3146 = vadd.f32 %v3145, %v3109
    %v3147 = vadd.f32 %v3146, %v3111
    %v3148 = vrot.slane %v3147, 4
    %v3149 = vadd.f32 %v3147, %v3148
    %v3150 = vrot.slane %v3149, 2
    %v3151 = vadd.f32 %v3149, %v3150
    %v3152 = vrot.slane %v3151, 1
    %v3153 = vadd.f32 %v3151, %v3152
    %v3154 = vmul.f32 %v3058, 0.0078125
    %v3155 = vmul.f32 %v3079, 0.0078125
    %v3156 = vmul.f32 %v3132, 0.0078125
    %v3157 = vmul.f32 %v3153, 0.0078125
    %v3158 = vmul.f32 %v3154, %v3154
    %v3159 = vmul.f32 %v3155, %v3155
    %v3160 = vsub.f32 %v3156, %v3158
    %v3161 = vsub.f32 %v3157, %v3159
    %v3162 = vadd.f32 %v3160, 1e-05
    %v3163 = vadd.f32 %v3161, 1e-05
    %v3164 = vrsqrt.pop %v3162
    %v3165 = vmul.f32 %v3164, %v3162
    %v3166 = vmul.f32 %v3165, %v3164
    %v3167 = vmul.f32 0.5, %v3166
    %v3168 = vsub.f32 1.5, %v3167
    %v3169 = vmul.f32 %v3164, %v3168
    %vm3170 = vweird.f32 %v3162
    %vm3171 = vweird.f32 %v3164
    %vm3172 = vmor %vm3170, %vm3171
    %v3173 = vsel %vm3172, %v3164, %v3169
    %v3174 = vrsqrt.pop %v3163
    %v3175 = vmul.f32 %v3174, %v3163
    %v3176 = vmul.f32 %v3175, %v3174
    %v3177 = vmul.f32 0.5, %v3176
    %v3178 = vsub.f32 1.5, %v3177
    %v3179 = vmul.f32 %v3174, %v3178
    %vm3180 = vweird.f32 %v3163
    %vm3181 = vweird.f32 %v3174
    %vm3182 = vmor %vm3180, %vm3181
    %v3183 = vsel %vm3182, %v3174, %v3179
    %v3185 = vperm.slane %v3035, 0
    %v3186 = vperm.slane %v3035, 1
    %v3189 = vmul.f32 %v3173, %v3185
    %v3190 = vmul.f32 %v3183, %v3186
    %v3191 = vmul.f32 %v3154, %v3189
    %v3192 = vmul.f32 %v3155, %v3190
    %v3195 = vrot.slane %v3192, 7
    %v3196 = vsel %vm2718, %v3191, %v3195
    %v3198 = vsub.f32 %v3037, %v3196
    %v3199 = vperm.slane %v3189, 0
    %v3200 = vperm.slane %v3190, 0
    %v3201 = vmul.f32 %v2923, %v3199
    %v3202 = vmul.f32 %v2988, %v3200
    %v3203 = vmul.f32 %v2926, %v3199
    %v3204 = vmul.f32 %v2991, %v3200
    %v3205 = vmul.f32 %v2929, %v3199
    %v3206 = vmul.f32 %v2994, %v3200
    %v3207 = vmul.f32 %v2932, %v3199
    %v3208 = vmul.f32 %v2997, %v3200
    %v3209 = vmul.f32 %v2935, %v3199
    %v3210 = vmul.f32 %v3000, %v3200
    %v3211 = vmul.f32 %v2938, %v3199
    %v3212 = vmul.f32 %v3003, %v3200
    %v3213 = vmul.f32 %v2941, %v3199
    %v3214 = vmul.f32 %v3006, %v3200
    %v3215 = vmul.f32 %v2944, %v3199
    %v3216 = vmul.f32 %v3009, %v3200
    %v3217 = vmul.f32 %v2947, %v3199
    %v3218 = vmul.f32 %v3012, %v3200
    %v3219 = vmul.f32 %v2950, %v3199
    %v3220 = vmul.f32 %v3015, %v3200
    %v3221 = vmul.f32 %v2953, %v3199
    %v3222 = vmul.f32 %v3018, %v3200
    %v3223 = vmul.f32 %v2956, %v3199
    %v3224 = vmul.f32 %v3021, %v3200
    %v3225 = vmul.f32 %v2959, %v3199
    %v3226 = vmul.f32 %v3024, %v3200
    %v3227 = vmul.f32 %v2962, %v3199
    %v3228 = vmul.f32 %v3027, %v3200
    %v3229 = vmul.f32 %v2965, %v3199
    %v3230 = vmul.f32 %v3030, %v3200
    %v3231 = vmul.f32 %v2968, %v3199
    %v3232 = vmul.f32 %v3033, %v3200
    %v3234 = vperm.slane %v3198, 0
    %v3235 = vperm.slane %v3198, 1
    %v3238 = vadd.f32 %v3201, %v3234
    %v3239 = vadd.f32 %v3202, %v3235
    %v3240 = vadd.f32 %v3203, %v3234
    %v3241 = vadd.f32 %v3204, %v3235
    %v3242 = vadd.f32 %v3205, %v3234
    %v3243 = vadd.f32 %v3206, %v3235
    %v3244 = vadd.f32 %v3207, %v3234
    %v3245 = vadd.f32 %v3208, %v3235
    %v3246 = vadd.f32 %v3209, %v3234
    %v3247 = vadd.f32 %v3210, %v3235
    %v3248 = vadd.f32 %v3211, %v3234
    %v3249 = vadd.f32 %v3212, %v3235
    %v3250 = vadd.f32 %v3213, %v3234
    %v3251 = vadd.f32 %v3214, %v3235
    %v3252 = vadd.f32 %v3215, %v3234
    %v3253 = vadd.f32 %v3216, %v3235
    %v3254 = vadd.f32 %v3217, %v3234
    %v3255 = vadd.f32 %v3218, %v3235
    %v3256 = vadd.f32 %v3219, %v3234
    %v3257 = vadd.f32 %v3220, %v3235
    %v3258 = vadd.f32 %v3221, %v3234
    %v3259 = vadd.f32 %v3222, %v3235
    %v3260 = vadd.f32 %v3223, %v3234
    %v3261 = vadd.f32 %v3224, %v3235
    %v3262 = vadd.f32 %v3225, %v3234
    %v3263 = vadd.f32 %v3226, %v3235
    %v3264 = vadd.f32 %v3227, %v3234
    %v3265 = vadd.f32 %v3228, %v3235
    %v3266 = vadd.f32 %v3229, %v3234
    %v3267 = vadd.f32 %v3230, %v3235
    %v3268 = vadd.f32 %v3231, %v3234
    %v3269 = vadd.f32 %v3232, %v3235
    %v3270 = vadd.f32 %v2793, %v3238
    %v3271 = vadd.f32 %v2794, %v3239
    %v3272 = vadd.f32 %v2795, %v3240
    %v3273 = vadd.f32 %v2796, %v3241
    %v3274 = vadd.f32 %v2797, %v3242
    %v3275 = vadd.f32 %v2798, %v3243
    %v3276 = vadd.f32 %v2799, %v3244
    %v3277 = vadd.f32 %v2800, %v3245
    %v3278 = vadd.f32 %v2801, %v3246
    %v3279 = vadd.f32 %v2802, %v3247
    %v3280 = vadd.f32 %v2803, %v3248
    %v3281 = vadd.f32 %v2804, %v3249
    %v3282 = vadd.f32 %v2805, %v3250
    %v3283 = vadd.f32 %v2806, %v3251
    %v3284 = vadd.f32 %v2807, %v3252
    %v3285 = vadd.f32 %v2808, %v3253
    %v3286 = vadd.f32 %v2809, %v3254
    %v3287 = vadd.f32 %v2810, %v3255
    %v3288 = vadd.f32 %v2811, %v3256
    %v3289 = vadd.f32 %v2812, %v3257
    %v3290 = vadd.f32 %v2813, %v3258
    %v3291 = vadd.f32 %v2814, %v3259
    %v3292 = vadd.f32 %v2815, %v3260
    %v3293 = vadd.f32 %v2816, %v3261
    %v3294 = vadd.f32 %v2817, %v3262
    %v3295 = vadd.f32 %v2818, %v3263
    %v3296 = vadd.f32 %v2819, %v3264
    %v3297 = vadd.f32 %v2820, %v3265
    %v3298 = vadd.f32 %v2821, %v3266
    %v3299 = vadd.f32 %v2822, %v3267
    %v3300 = vadd.f32 %v2823, %v3268
    %v3301 = vadd.f32 %v2824, %v3269
    %3302 = vst [vmem:[#allocation3] sm:$0xff] %v3270
    %3303 = vst [vmem:[#allocation3 + $0x8] sm:$0xff] %v3271
    %3304 = vst [vmem:[#allocation3 + $0x10] sm:$0xff] %v3272
    %3305 = vst [vmem:[#allocation3 + $0x18] sm:$0xff] %v3273
    %3306 = vst [vmem:[#allocation3 + $0x20] sm:$0xff] %v3274
    %3307 = vst [vmem:[#allocation3 + $0x28] sm:$0xff] %v3275
    %3308 = vst [vmem:[#allocation3 + $0x30] sm:$0xff] %v3276
    %3309 = vst [vmem:[#allocation3 + $0x38] sm:$0xff] %v3277
    %3310 = vst [vmem:[#allocation3 + $0x40] sm:$0xff] %v3278
    %3311 = vst [vmem:[#allocation3 + $0x48] sm:$0xff] %v3279
    %3312 = vst [vmem:[#allocation3 + $0x50] sm:$0xff] %v3280
    %3313 = vst [vmem:[#allocation3 + $0x58] sm:$0xff] %v3281
    %3314 = vst [vmem:[#allocation3 + $0x60] sm:$0xff] %v3282
    %3315 = vst [vmem:[#allocation3 + $0x68] sm:$0xff] %v3283
    %3316 = vst [vmem:[#allocation3 + $0x70] sm:$0xff] %v3284
    %3317 = vst [vmem:[#allocation3 + $0x78] sm:$0xff] %v3285
    %3318 = vst [vmem:[#allocation3 + $0x80] sm:$0xff] %v3286
    %3319 = vst [vmem:[#allocation3 + $0x88] sm:$0xff] %v3287
    %3320 = vst [vmem:[#allocation3 + $0x90] sm:$0xff] %v3288
    %3321 = vst [vmem:[#allocation3 + $0x98] sm:$0xff] %v3289
    %3322 = vst [vmem:[#allocation3 + $0xa0] sm:$0xff] %v3290
    %3323 = vst [vmem:[#allocation3 + $0xa8] sm:$0xff] %v3291
    %3324 = vst [vmem:[#allocation3 + $0xb0] sm:$0xff] %v3292
    %3325 = vst [vmem:[#allocation3 + $0xb8] sm:$0xff] %v3293
    %3326 = vst [vmem:[#allocation3 + $0xc0] sm:$0xff] %v3294
    %3327 = vst [vmem:[#allocation3 + $0xc8] sm:$0xff] %v3295
    %3328 = vst [vmem:[#allocation3 + $0xd0] sm:$0xff] %v3296
    %3329 = vst [vmem:[#allocation3 + $0xd8] sm:$0xff] %v3297
    %3330 = vst [vmem:[#allocation3 + $0xe0] sm:$0xff] %v3298
    %3331 = vst [vmem:[#allocation3 + $0xe8] sm:$0xff] %v3299
    %3332 = vst [vmem:[#allocation3 + $0xf0] sm:$0xff] %v3300
    %3333 = vst [vmem:[#allocation3 + $0xf8] sm:$0xff] %v3301
    // Predicated region
    $region38: #{bottleneck_forward.1} parent=1 // pred_check
      _
    $region39: #{bottleneck_forward.1} parent=1 // pred_check_branch
      %3335 = sbr.rel (0) target = $region41
    $region40: #{bottleneck_forward.1} parent=1 // pred_region
      %3337 = vsyncadd [#allocation4], 0
      %s3338 = sshll.u32 [#allocation3], 4
      %s3339 = int_to_ptr.vmem [resolvable:$true] %s3338
      %s3340 = sshll.u32 %s9, 4
      %s3341 = int_to_ptr.hbm [resolvable:$true] %s3340
      %3346 = dma.vmem_to_hbm [thread:$0]  %s3339, 4096, %s3341, [#allocation4], 256, 256, 16
    $region41: #{bottleneck_forward.1} parent=1 // pred_fallthru
      _
    // Predicated region
    $region42: #{bottleneck_forward.1} parent=1 // pred_check
      _
    $region43: #{bottleneck_forward.1} parent=1 // pred_check_branch
      %3348 = sbr.rel (0) target = $region45
    $region44: #{bottleneck_forward.1} parent=1 // pred_region
      %3350 = dma.done [#allocation4], 4096
    $region45: #{bottleneck_forward.1} parent=1 // pred_fallthru
      _
    %3351 = vsyncpa [#allocation4], 1

</llo_original>
